<compile_context>
chip_gen: v6e
topology: v6e:2x2x1
jax: 0.10.0
libtpu: 0.0.40
codegen_flags: <defaults>
</compile_context>

<pallas_src>
import jax
import jax.numpy as jnp
from jax.experimental import pallas as pl
from jax.experimental.pallas import tpu as pltpu


# ----------------------------------------------------------------------------
# Fused kernel: one grid step == one sample's full LeNet forward.
# ----------------------------------------------------------------------------
def _lenet_fused_kernel(x_ref, w1_ref, b1_ref, pw1_ref, ph1_ref,
                        w2_ref, b2_ref, pw2_ref, ph2_ref,
                        w3_ref, b3_ref, w4_ref, b4_ref, w5_ref, b5_ref,
                        out_ref, s1_ref, s2_ref):
    f32 = jnp.float32

    def dot32(a, b):
        return jnp.dot(a, b, preferred_element_type=f32)

    k = w1_ref.shape[0]                       # conv kernel height (= width)

    # ---- conv1 + ReLU: k row-shifted matmuls against banded weight matrices.
    oh1 = x_ref.shape[0] - k + 1
    acc = jnp.zeros((oh1, w1_ref.shape[2]), f32)
    for i in range(k):
        acc = acc + dot32(x_ref[i:i + oh1, :], w1_ref[i])
    a1 = jnp.maximum(acc + b1_ref[...], 0.0)                    # (28, 28*6)

    # ---- avgpool1: exact 2x2/stride-2 average == two constant-matrix matmuls.
    s1_ref[...] = dot32(ph1_ref[...], dot32(a1, pw1_ref[...]))  # (14, 14*6)

    # ---- conv2 + ReLU.
    oh2 = s1_ref.shape[0] - k + 1
    acc = jnp.zeros((oh2, w2_ref.shape[2]), f32)
    for i in range(k):
        acc = acc + dot32(s1_ref[i:i + oh2, :], w2_ref[i])
    a2 = jnp.maximum(acc + b2_ref[...], 0.0)                    # (10, 10*16)

    # ---- avgpool2.
    s2_ref[...] = dot32(ph2_ref[...], dot32(a2, pw2_ref[...]))  # (5, 5*16)

    # ---- conv3: 5x5 kernel on a 5x5 map == dense 400->120, done row by row.
    p2h, wc = s2_ref.shape                                      # 5, 80
    f = jnp.zeros((1, w3_ref.shape[1]), f32)
    for y in range(p2h):
        f = f + dot32(s2_ref[y:y + 1, :], w3_ref[y * wc:(y + 1) * wc, :])
    h = jnp.maximum(f + b3_ref[...], 0.0)                       # (1, 120)

    # ---- fully-connected head.
    h = jnp.maximum(dot32(h, w4_ref[...]) + b4_ref[...], 0.0)   # (1, 84)
    logits = dot32(h, w5_ref[...]) + b5_ref[...]                # (1, nc)

    # ---- lane-dense padded output row; host slices off the padding.
    out_ref[...] = jnp.zeros(out_ref.shape, out_ref.dtype)
    out_ref[0:1, 0:logits.shape[1]] = logits.astype(out_ref.dtype)


# ----------------------------------------------------------------------------
# Host-side constant folding of structured weight / pooling matrices.
# ----------------------------------------------------------------------------
def _banded_conv_mats(w, in_w):
    """w: (Cout, Cin, KH, KW) -> (KH, in_w*Cin, out_w*Cout) banded matrices.

    For kernel row i:  M_i[x'*Cin + c, x*Cout + o] = w[o, c, i, x'-x],
    0 <= x'-x < KW.  With activation A[y, x*Cin + c] (channels innermost),
    sum_i A[i:i+OH, :] @ M_i  reproduces PyTorch's valid cross-correlation.
    """
    cout, cin, kh, kw = w.shape
    out_w = in_w - kw + 1
    w = w.astype(jnp.float32)
    mats = []
    for i in range(kh):
        m = sum(jnp.kron(jnp.eye(in_w, out_w, k=-j, dtype=jnp.float32),
                         w[:, :, i, j].T)
                for j in range(kw))
        mats.append(m)
    return jnp.stack(mats, axis=0)


def _pool_w_mat(width, c):
    """(width*c, (width//2)*c): exact 2x average along W, channels preserved."""
    base = 0.5 * jnp.repeat(jnp.eye(width // 2, dtype=jnp.float32), 2, axis=0)
    return jnp.kron(base, jnp.eye(c, dtype=jnp.float32))


def _pool_h_mat(height):
    """((height//2), height): exact 2x average along H (left-multiply)."""
    return 0.5 * jnp.repeat(jnp.eye(height // 2, dtype=jnp.float32), 2, axis=1)


# ----------------------------------------------------------------------------
# LeNet forward
# ----------------------------------------------------------------------------
def lenet_forward(params, x):
    """x: (N, 1, 32, 32) float32 NCHW -> logits (N, num_classes)."""
    n, c0, h0, w0 = x.shape
    cout1, cin1, k, _ = params["conv1_w"].shape
    cout2 = params["conv2_w"].shape[0]
    cout3 = params["conv3_w"].shape[0]
    nc = params["fc2_w"].shape[0]
    assert cin1 == c0

    oh1, ow1 = h0 - k + 1, w0 - k + 1
    p1h, p1w = oh1 // 2, ow1 // 2
    oh2, ow2 = p1h - k + 1, p1w - k + 1
    p2h, p2w = oh2 // 2, ow2 // 2
    # conv3's 5x5 kernel must exactly cover the pooled conv2 map (LeNet @ 32x32).
    assert (p2h, p2w) == (k, k) and oh1 % 2 == 0 and oh2 % 2 == 0

    f32 = jnp.float32
    # NCHW -> per-sample channels-innermost 2-D layout (H, W*C).
    x3 = x.astype(f32).transpose(0, 2, 3, 1).reshape(n, h0, w0 * c0)

    w1 = _banded_conv_mats(params["conv1_w"], w0)        # (5, 32*1, 28*6)
    w2 = _banded_conv_mats(params["conv2_w"], p1w)       # (5, 14*6, 10*16)
    b1 = jnp.tile(params["conv1_b"].astype(f32), ow1).reshape(1, ow1 * cout1)
    b2 = jnp.tile(params["conv2_b"].astype(f32), ow2).reshape(1, ow2 * cout2)
    pw1, ph1 = _pool_w_mat(ow1, cout1), _pool_h_mat(oh1)
    pw2, ph2 = _pool_w_mat(ow2, cout2), _pool_h_mat(oh2)
    # conv3 == dense layer over the (y, x, c)-flattened pooled map.
    w3 = params["conv3_w"].astype(f32).transpose(2, 3, 1, 0).reshape(
        k * k * cout2, cout3)
    b3 = params["conv3_b"].astype(f32).reshape(1, cout3)
    w4 = params["fc1_w"].astype(f32).T                   # (120, 84)
    b4 = params["fc1_b"].astype(f32).reshape(1, -1)
    w5 = params["fc2_w"].astype(f32).T                   # (84, nc)
    b5 = params["fc2_b"].astype(f32).reshape(1, -1)

    lane_pad = 128                                       # lane-dense output row

    def const_spec(a):
        nd = a.ndim
        return pl.BlockSpec(a.shape, lambda b, _nd=nd: (0,) * _nd)

    out_padded = pl.pallas_call(
        _lenet_fused_kernel,
        out_shape=jax.ShapeDtypeStruct((n, 1, lane_pad), f32),
        grid=(n,),
        in_specs=[
            pl.BlockSpec((None, h0, w0 * c0), lambda b: (b, 0, 0)),
            const_spec(w1), const_spec(b1), const_spec(pw1), const_spec(ph1),
            const_spec(w2), const_spec(b2), const_spec(pw2), const_spec(ph2),
            const_spec(w3), const_spec(b3), const_spec(w4), const_spec(b4),
            const_spec(w5), const_spec(b5),
        ],
        out_specs=pl.BlockSpec((None, 1, lane_pad), lambda b: (b, 0, 0)),
        scratch_shapes=[
            pltpu.VMEM((p1h, p1w * cout1), f32),          # pooled conv1 act
            pltpu.VMEM((p2h, p2w * cout2), f32),          # pooled conv2 act
        ],
        compiler_params=pltpu.CompilerParams(
            dimension_semantics=("parallel",)),
    )(x3, w1, b1, pw1, ph1, w2, b2, pw2, ph2, w3, b3, w4, b4, w5, b5)

    return out_padded[:, 0, :nc]


# ----------------------------------------------------------------------------
# Parameters + pure-XLA reference (self-check)
# ----------------------------------------------------------------------------
def init_params(key, num_classes=10):
    ks = jax.random.split(key, 10)
    p = {}
    p["conv1_w"] = 0.1 * jax.random.normal(ks[0], (6, 1, 5, 5), jnp.float32)
    p["conv1_b"] = 0.1 * jax.random.normal(ks[1], (6,), jnp.float32)
    p["conv2_w"] = 0.1 * jax.random.normal(ks[2], (16, 6, 5, 5), jnp.float32)
    p["conv2_b"] = 0.1 * jax.random.normal(ks[3], (16,), jnp.float32)
    p["conv3_w"] = 0.1 * jax.random.normal(ks[4], (120, 16, 5, 5), jnp.float32)
    p["conv3_b"] = 0.1 * jax.random.normal(ks[5], (120,), jnp.float32)
    p["fc1_w"] = 0.1 * jax.random.normal(ks[6], (84, 120), jnp.float32)   # torch (out, in)
    p["fc1_b"] = 0.1 * jax.random.normal(ks[7], (84,), jnp.float32)
    p["fc2_w"] = 0.1 * jax.random.normal(ks[8], (num_classes, 84), jnp.float32)
    p["fc2_b"] = 0.1 * jax.random.normal(ks[9], (num_classes,), jnp.float32)
    return p


def _reference_forward(params, x):
    hi = jax.lax.Precision.HIGHEST

    def conv(x, w, b):
        y = jax.lax.conv_general_dilated(
            x, w, window_strides=(1, 1), padding="VALID",
            dimension_numbers=("NCHW", "OIHW", "NCHW"), precision=hi)
        return y + b[None, :, None, None]

    def pool(x):
        n, c, h, w = x.shape
        return x.reshape(n, c, h // 2, 2, w // 2, 2).mean(axis=(3, 5))

    x = pool(jax.nn.relu(conv(x, params["conv1_w"], params["conv1_b"])))
    x = pool(jax.nn.relu(conv(x, params["conv2_w"], params["conv2_b"])))
    x = jax.nn.relu(conv(x, params["conv3_w"], params["conv3_b"]))
    x = x.reshape(x.shape[0], -1)
    x = jax.nn.relu(jnp.dot(x, params["fc1_w"].T, precision=hi) + params["fc1_b"])
    return jnp.dot(x, params["fc2_w"].T, precision=hi) + params["fc2_b"]


if __name__ == "__main__":
    key = jax.random.PRNGKey(0)
    k_param, k_x = jax.random.split(key)
    params = init_params(k_param, num_classes=10)
    # LeNet geometry requires 32x32 single-channel input; batch kept small.
    x = jax.random.normal(k_x, (2, 1, 32, 32), jnp.float32)

    logits = jax.jit(lenet_forward)(params, x)
    jax.block_until_ready(logits)
    assert logits.shape == (2, 10), logits.shape

    ref = jax.jit(_reference_forward)(params, x)
    err = float(jnp.max(jnp.abs(logits - ref)))
    assert err < 1e-3, f"mismatch vs XLA reference: {err}"

    print("KERNEL_OK")
</pallas_src>

<mosaic_0001>
module attributes {stable_mosaic.version = 11 : i64} {
  func.func @_lenet_fused_kernel(%arg0: i32, %arg1: memref<1x32x32xf32, #tpu.memory_space<vmem>>, %arg2: memref<5x32x168xf32, #tpu.memory_space<vmem>>, %arg3: memref<1x168xf32, #tpu.memory_space<vmem>>, %arg4: memref<168x84xf32, #tpu.memory_space<vmem>>, %arg5: memref<14x28xf32, #tpu.memory_space<vmem>>, %arg6: memref<5x84x160xf32, #tpu.memory_space<vmem>>, %arg7: memref<1x160xf32, #tpu.memory_space<vmem>>, %arg8: memref<160x80xf32, #tpu.memory_space<vmem>>, %arg9: memref<5x10xf32, #tpu.memory_space<vmem>>, %arg10: memref<400x120xf32, #tpu.memory_space<vmem>>, %arg11: memref<1x120xf32, #tpu.memory_space<vmem>>, %arg12: memref<120x84xf32, #tpu.memory_space<vmem>>, %arg13: memref<1x84xf32, #tpu.memory_space<vmem>>, %arg14: memref<84x10xf32, #tpu.memory_space<vmem>>, %arg15: memref<1x10xf32, #tpu.memory_space<vmem>>, %arg16: memref<1x1x128xf32, #tpu.memory_space<vmem>>, %arg17: memref<14x84xf32, #tpu.memory_space<vmem>>, %arg18: memref<5x80xf32, #tpu.memory_space<vmem>>) attributes {dimension_semantics = [#tpu.dimension_semantics<parallel>], iteration_bounds = array<i64: 2>, scalar_prefetch = 0 : i64, scratch_operands = 2 : i64, tpu.core_type = #tpu.core_type<tc>, window_params = [{transform_indices = @transform_0, window_bounds = array<i64: 1, 32, 32>}, {pipeline_mode = #tpu.pipeline_mode<synchronous>, transform_indices = @transform_1, window_bounds = array<i64: 5, 32, 168>}, {pipeline_mode = #tpu.pipeline_mode<synchronous>, transform_indices = @transform_2, window_bounds = array<i64: 1, 168>}, {pipeline_mode = #tpu.pipeline_mode<synchronous>, transform_indices = @transform_3, window_bounds = array<i64: 168, 84>}, {pipeline_mode = #tpu.pipeline_mode<synchronous>, transform_indices = @transform_4, window_bounds = array<i64: 14, 28>}, {pipeline_mode = #tpu.pipeline_mode<synchronous>, transform_indices = @transform_5, window_bounds = array<i64: 5, 84, 160>}, {pipeline_mode = #tpu.pipeline_mode<synchronous>, transform_indices = @transform_6, window_bounds = array<i64: 1, 160>}, {pipeline_mode = #tpu.pipeline_mode<synchronous>, transform_indices = @transform_7, window_bounds = array<i64: 160, 80>}, {pipeline_mode = #tpu.pipeline_mode<synchronous>, transform_indices = @transform_8, window_bounds = array<i64: 5, 10>}, {pipeline_mode = #tpu.pipeline_mode<synchronous>, transform_indices = @transform_9, window_bounds = array<i64: 400, 120>}, {pipeline_mode = #tpu.pipeline_mode<synchronous>, transform_indices = @transform_10, window_bounds = array<i64: 1, 120>}, {pipeline_mode = #tpu.pipeline_mode<synchronous>, transform_indices = @transform_11, window_bounds = array<i64: 120, 84>}, {pipeline_mode = #tpu.pipeline_mode<synchronous>, transform_indices = @transform_12, window_bounds = array<i64: 1, 84>}, {pipeline_mode = #tpu.pipeline_mode<synchronous>, transform_indices = @transform_13, window_bounds = array<i64: 84, 10>}, {pipeline_mode = #tpu.pipeline_mode<synchronous>, transform_indices = @transform_14, window_bounds = array<i64: 1, 10>}, {transform_indices = @transform_15, window_bounds = array<i64: 1, 1, 128>}]} {
    %cst = arith.constant 0.000000e+00 : f32
    %0 = vector.broadcast %cst : f32 to vector<28x168xf32>
    %c0 = arith.constant 0 : index
    %c0_0 = arith.constant 0 : index
    %c0_1 = arith.constant 0 : index
    %1 = vector.load %arg1[%c0, %c0_0, %c0_1] : memref<1x32x32xf32, #tpu.memory_space<vmem>>, vector<1x28x32xf32>
    %2 = vector.shape_cast %1 : vector<1x28x32xf32> to vector<28x32xf32>
    %c0_2 = arith.constant 0 : index
    %c0_3 = arith.constant 0 : index
    %c0_4 = arith.constant 0 : index
    %3 = vector.load %arg2[%c0_2, %c0_3, %c0_4] : memref<5x32x168xf32, #tpu.memory_space<vmem>>, vector<1x32x168xf32>
    %4 = vector.shape_cast %3 : vector<1x32x168xf32> to vector<32x168xf32>
    %cst_5 = arith.constant dense<0.000000e+00> : vector<28x168xf32>
    %5 = tpu.matmul %2, %4, %cst_5 {dimension_numbers = #tpu.dot_dimension_numbers<[1], [0], [0], [1], [0, 0, 1, 1], [], []>} : vector<28x32xf32>, vector<32x168xf32>, vector<28x168xf32> -> vector<28x168xf32>
    %6 = arith.addf %0, %5 : vector<28x168xf32>
    %c0_6 = arith.constant 0 : index
    %c1 = arith.constant 1 : index
    %c0_7 = arith.constant 0 : index
    %7 = vector.load %arg1[%c0_6, %c1, %c0_7] : memref<1x32x32xf32, #tpu.memory_space<vmem>>, vector<1x28x32xf32>
    %8 = vector.shape_cast %7 : vector<1x28x32xf32> to vector<28x32xf32>
    %c1_8 = arith.constant 1 : index
    %c0_9 = arith.constant 0 : index
    %c0_10 = arith.constant 0 : index
    %9 = vector.load %arg2[%c1_8, %c0_9, %c0_10] : memref<5x32x168xf32, #tpu.memory_space<vmem>>, vector<1x32x168xf32>
    %10 = vector.shape_cast %9 : vector<1x32x168xf32> to vector<32x168xf32>
    %cst_11 = arith.constant dense<0.000000e+00> : vector<28x168xf32>
    %11 = tpu.matmul %8, %10, %cst_11 {dimension_numbers = #tpu.dot_dimension_numbers<[1], [0], [0], [1], [0, 0, 1, 1], [], []>} : vector<28x32xf32>, vector<32x168xf32>, vector<28x168xf32> -> vector<28x168xf32>
    %12 = arith.addf %6, %11 : vector<28x168xf32>
    %c0_12 = arith.constant 0 : index
    %c2 = arith.constant 2 : index
    %c0_13 = arith.constant 0 : index
    %13 = vector.load %arg1[%c0_12, %c2, %c0_13] : memref<1x32x32xf32, #tpu.memory_space<vmem>>, vector<1x28x32xf32>
    %14 = vector.shape_cast %13 : vector<1x28x32xf32> to vector<28x32xf32>
    %c2_14 = arith.constant 2 : index
    %c0_15 = arith.constant 0 : index
    %c0_16 = arith.constant 0 : index
    %15 = vector.load %arg2[%c2_14, %c0_15, %c0_16] : memref<5x32x168xf32, #tpu.memory_space<vmem>>, vector<1x32x168xf32>
    %16 = vector.shape_cast %15 : vector<1x32x168xf32> to vector<32x168xf32>
    %cst_17 = arith.constant dense<0.000000e+00> : vector<28x168xf32>
    %17 = tpu.matmul %14, %16, %cst_17 {dimension_numbers = #tpu.dot_dimension_numbers<[1], [0], [0], [1], [0, 0, 1, 1], [], []>} : vector<28x32xf32>, vector<32x168xf32>, vector<28x168xf32> -> vector<28x168xf32>
    %18 = arith.addf %12, %17 : vector<28x168xf32>
    %c0_18 = arith.constant 0 : index
    %c3 = arith.constant 3 : index
    %c0_19 = arith.constant 0 : index
    %19 = vector.load %arg1[%c0_18, %c3, %c0_19] : memref<1x32x32xf32, #tpu.memory_space<vmem>>, vector<1x28x32xf32>
    %20 = vector.shape_cast %19 : vector<1x28x32xf32> to vector<28x32xf32>
    %c3_20 = arith.constant 3 : index
    %c0_21 = arith.constant 0 : index
    %c0_22 = arith.constant 0 : index
    %21 = vector.load %arg2[%c3_20, %c0_21, %c0_22] : memref<5x32x168xf32, #tpu.memory_space<vmem>>, vector<1x32x168xf32>
    %22 = vector.shape_cast %21 : vector<1x32x168xf32> to vector<32x168xf32>
    %cst_23 = arith.constant dense<0.000000e+00> : vector<28x168xf32>
    %23 = tpu.matmul %20, %22, %cst_23 {dimension_numbers = #tpu.dot_dimension_numbers<[1], [0], [0], [1], [0, 0, 1, 1], [], []>} : vector<28x32xf32>, vector<32x168xf32>, vector<28x168xf32> -> vector<28x168xf32>
    %24 = arith.addf %18, %23 : vector<28x168xf32>
    %c0_24 = arith.constant 0 : index
    %c4 = arith.constant 4 : index
    %c0_25 = arith.constant 0 : index
    %25 = vector.load %arg1[%c0_24, %c4, %c0_25] : memref<1x32x32xf32, #tpu.memory_space<vmem>>, vector<1x28x32xf32>
    %26 = vector.shape_cast %25 : vector<1x28x32xf32> to vector<28x32xf32>
    %c4_26 = arith.constant 4 : index
    %c0_27 = arith.constant 0 : index
    %c0_28 = arith.constant 0 : index
    %27 = vector.load %arg2[%c4_26, %c0_27, %c0_28] : memref<5x32x168xf32, #tpu.memory_space<vmem>>, vector<1x32x168xf32>
    %28 = vector.shape_cast %27 : vector<1x32x168xf32> to vector<32x168xf32>
    %cst_29 = arith.constant dense<0.000000e+00> : vector<28x168xf32>
    %29 = tpu.matmul %26, %28, %cst_29 {dimension_numbers = #tpu.dot_dimension_numbers<[1], [0], [0], [1], [0, 0, 1, 1], [], []>} : vector<28x32xf32>, vector<32x168xf32>, vector<28x168xf32> -> vector<28x168xf32>
    %30 = arith.addf %24, %29 : vector<28x168xf32>
    %c0_30 = arith.constant 0 : index
    %c0_31 = arith.constant 0 : index
    %31 = vector.load %arg3[%c0_30, %c0_31] : memref<1x168xf32, #tpu.memory_space<vmem>>, vector<1x168xf32>
    %32 = vector.broadcast %31 : vector<1x168xf32> to vector<28x168xf32>
    %33 = arith.addf %30, %32 : vector<28x168xf32>
    %cst_32 = arith.constant 0.000000e+00 : f32
    %34 = vector.broadcast %cst_32 : f32 to vector<28x168xf32>
    %35 = arith.maximumf %33, %34 : vector<28x168xf32>
    %c0_33 = arith.constant 0 : index
    %c0_34 = arith.constant 0 : index
    %36 = vector.load %arg5[%c0_33, %c0_34] : memref<14x28xf32, #tpu.memory_space<vmem>>, vector<14x28xf32>
    %c0_35 = arith.constant 0 : index
    %c0_36 = arith.constant 0 : index
    %37 = vector.load %arg4[%c0_35, %c0_36] : memref<168x84xf32, #tpu.memory_space<vmem>>, vector<168x84xf32>
    %cst_37 = arith.constant dense<0.000000e+00> : vector<28x84xf32>
    %38 = tpu.matmul %35, %37, %cst_37 {dimension_numbers = #tpu.dot_dimension_numbers<[1], [0], [0], [1], [0, 0, 1, 1], [], []>} : vector<28x168xf32>, vector<168x84xf32>, vector<28x84xf32> -> vector<28x84xf32>
    %cst_38 = arith.constant dense<0.000000e+00> : vector<14x84xf32>
    %39 = tpu.matmul %36, %38, %cst_38 {dimension_numbers = #tpu.dot_dimension_numbers<[1], [0], [0], [1], [0, 0, 1, 1], [], []>} : vector<14x28xf32>, vector<28x84xf32>, vector<14x84xf32> -> vector<14x84xf32>
    %c0_39 = arith.constant 0 : index
    %c0_40 = arith.constant 0 : index
    %40 = vector.load %arg17[%c0_39, %c0_40] : memref<14x84xf32, #tpu.memory_space<vmem>>, vector<14x84xf32>
    tpu.vector_store %arg17[%c0_39, %c0_40], %39 {strides = array<i32>} : memref<14x84xf32, #tpu.memory_space<vmem>>, vector<14x84xf32>,
    %cst_41 = arith.constant 0.000000e+00 : f32
    %41 = vector.broadcast %cst_41 : f32 to vector<10x160xf32>
    %c0_42 = arith.constant 0 : index
    %c0_43 = arith.constant 0 : index
    %42 = vector.load %arg17[%c0_42, %c0_43] : memref<14x84xf32, #tpu.memory_space<vmem>>, vector<10x84xf32>
    %c0_44 = arith.constant 0 : index
    %c0_45 = arith.constant 0 : index
    %c0_46 = arith.constant 0 : index
    %43 = vector.load %arg6[%c0_44, %c0_45, %c0_46] : memref<5x84x160xf32, #tpu.memory_space<vmem>>, vector<1x84x160xf32>
    %44 = vector.shape_cast %43 : vector<1x84x160xf32> to vector<84x160xf32>
    %cst_47 = arith.constant dense<0.000000e+00> : vector<10x160xf32>
    %45 = tpu.matmul %42, %44, %cst_47 {dimension_numbers = #tpu.dot_dimension_numbers<[1], [0], [0], [1], [0, 0, 1, 1], [], []>} : vector<10x84xf32>, vector<84x160xf32>, vector<10x160xf32> -> vector<10x160xf32>
    %46 = arith.addf %41, %45 : vector<10x160xf32>
    %c1_48 = arith.constant 1 : index
    %c0_49 = arith.constant 0 : index
    %47 = vector.load %arg17[%c1_48, %c0_49] : memref<14x84xf32, #tpu.memory_space<vmem>>, vector<10x84xf32>
    %c1_50 = arith.constant 1 : index
    %c0_51 = arith.constant 0 : index
    %c0_52 = arith.constant 0 : index
    %48 = vector.load %arg6[%c1_50, %c0_51, %c0_52] : memref<5x84x160xf32, #tpu.memory_space<vmem>>, vector<1x84x160xf32>
    %49 = vector.shape_cast %48 : vector<1x84x160xf32> to vector<84x160xf32>
    %cst_53 = arith.constant dense<0.000000e+00> : vector<10x160xf32>
    %50 = tpu.matmul %47, %49, %cst_53 {dimension_numbers = #tpu.dot_dimension_numbers<[1], [0], [0], [1], [0, 0, 1, 1], [], []>} : vector<10x84xf32>, vector<84x160xf32>, vector<10x160xf32> -> vector<10x160xf32>
    %51 = arith.addf %46, %50 : vector<10x160xf32>
    %c2_54 = arith.constant 2 : index
    %c0_55 = arith.constant 0 : index
    %52 = vector.load %arg17[%c2_54, %c0_55] : memref<14x84xf32, #tpu.memory_space<vmem>>, vector<10x84xf32>
    %c2_56 = arith.constant 2 : index
    %c0_57 = arith.constant 0 : index
    %c0_58 = arith.constant 0 : index
    %53 = vector.load %arg6[%c2_56, %c0_57, %c0_58] : memref<5x84x160xf32, #tpu.memory_space<vmem>>, vector<1x84x160xf32>
    %54 = vector.shape_cast %53 : vector<1x84x160xf32> to vector<84x160xf32>
    %cst_59 = arith.constant dense<0.000000e+00> : vector<10x160xf32>
    %55 = tpu.matmul %52, %54, %cst_59 {dimension_numbers = #tpu.dot_dimension_numbers<[1], [0], [0], [1], [0, 0, 1, 1], [], []>} : vector<10x84xf32>, vector<84x160xf32>, vector<10x160xf32> -> vector<10x160xf32>
    %56 = arith.addf %51, %55 : vector<10x160xf32>
    %c3_60 = arith.constant 3 : index
    %c0_61 = arith.constant 0 : index
    %57 = vector.load %arg17[%c3_60, %c0_61] : memref<14x84xf32, #tpu.memory_space<vmem>>, vector<10x84xf32>
    %c3_62 = arith.constant 3 : index
    %c0_63 = arith.constant 0 : index
    %c0_64 = arith.constant 0 : index
    %58 = vector.load %arg6[%c3_62, %c0_63, %c0_64] : memref<5x84x160xf32, #tpu.memory_space<vmem>>, vector<1x84x160xf32>
    %59 = vector.shape_cast %58 : vector<1x84x160xf32> to vector<84x160xf32>
    %cst_65 = arith.constant dense<0.000000e+00> : vector<10x160xf32>
    %60 = tpu.matmul %57, %59, %cst_65 {dimension_numbers = #tpu.dot_dimension_numbers<[1], [0], [0], [1], [0, 0, 1, 1], [], []>} : vector<10x84xf32>, vector<84x160xf32>, vector<10x160xf32> -> vector<10x160xf32>
    %61 = arith.addf %56, %60 : vector<10x160xf32>
    %c4_66 = arith.constant 4 : index
    %c0_67 = arith.constant 0 : index
    %62 = vector.load %arg17[%c4_66, %c0_67] : memref<14x84xf32, #tpu.memory_space<vmem>>, vector<10x84xf32>
    %c4_68 = arith.constant 4 : index
    %c0_69 = arith.constant 0 : index
    %c0_70 = arith.constant 0 : index
    %63 = vector.load %arg6[%c4_68, %c0_69, %c0_70] : memref<5x84x160xf32, #tpu.memory_space<vmem>>, vector<1x84x160xf32>
    %64 = vector.shape_cast %63 : vector<1x84x160xf32> to vector<84x160xf32>
    %cst_71 = arith.constant dense<0.000000e+00> : vector<10x160xf32>
    %65 = tpu.matmul %62, %64, %cst_71 {dimension_numbers = #tpu.dot_dimension_numbers<[1], [0], [0], [1], [0, 0, 1, 1], [], []>} : vector<10x84xf32>, vector<84x160xf32>, vector<10x160xf32> -> vector<10x160xf32>
    %66 = arith.addf %61, %65 : vector<10x160xf32>
    %c0_72 = arith.constant 0 : index
    %c0_73 = arith.constant 0 : index
    %67 = vector.load %arg7[%c0_72, %c0_73] : memref<1x160xf32, #tpu.memory_space<vmem>>, vector<1x160xf32>
    %68 = vector.broadcast %67 : vector<1x160xf32> to vector<10x160xf32>
    %69 = arith.addf %66, %68 : vector<10x160xf32>
    %cst_74 = arith.constant 0.000000e+00 : f32
    %70 = vector.broadcast %cst_74 : f32 to vector<10x160xf32>
    %71 = arith.maximumf %69, %70 : vector<10x160xf32>
    %c0_75 = arith.constant 0 : index
    %c0_76 = arith.constant 0 : index
    %72 = vector.load %arg9[%c0_75, %c0_76] : memref<5x10xf32, #tpu.memory_space<vmem>>, vector<5x10xf32>
    %c0_77 = arith.constant 0 : index
    %c0_78 = arith.constant 0 : index
    %73 = vector.load %arg8[%c0_77, %c0_78] : memref<160x80xf32, #tpu.memory_space<vmem>>, vector<160x80xf32>
    %cst_79 = arith.constant dense<0.000000e+00> : vector<10x80xf32>
    %74 = tpu.matmul %71, %73, %cst_79 {dimension_numbers = #tpu.dot_dimension_numbers<[1], [0], [0], [1], [0, 0, 1, 1], [], []>} : vector<10x160xf32>, vector<160x80xf32>, vector<10x80xf32> -> vector<10x80xf32>
    %cst_80 = arith.constant dense<0.000000e+00> : vector<5x80xf32>
    %75 = tpu.matmul %72, %74, %cst_80 {dimension_numbers = #tpu.dot_dimension_numbers<[1], [0], [0], [1], [0, 0, 1, 1], [], []>} : vector<5x10xf32>, vector<10x80xf32>, vector<5x80xf32> -> vector<5x80xf32>
    %c0_81 = arith.constant 0 : index
    %c0_82 = arith.constant 0 : index
    %76 = vector.load %arg18[%c0_81, %c0_82] : memref<5x80xf32, #tpu.memory_space<vmem>>, vector<5x80xf32>
    tpu.vector_store %arg18[%c0_81, %c0_82], %75 {strides = array<i32>} : memref<5x80xf32, #tpu.memory_space<vmem>>, vector<5x80xf32>,
    %cst_83 = arith.constant 0.000000e+00 : f32
    %77 = vector.broadcast %cst_83 : f32 to vector<1x120xf32>
    %c0_84 = arith.constant 0 : index
    %c0_85 = arith.constant 0 : index
    %78 = vector.load %arg18[%c0_84, %c0_85] : memref<5x80xf32, #tpu.memory_space<vmem>>, vector<1x80xf32>
    %c0_86 = arith.constant 0 : index
    %c0_87 = arith.constant 0 : index
    %79 = vector.load %arg10[%c0_86, %c0_87] : memref<400x120xf32, #tpu.memory_space<vmem>>, vector<80x120xf32>
    %cst_88 = arith.constant dense<0.000000e+00> : vector<1x120xf32>
    %80 = tpu.matmul %78, %79, %cst_88 {dimension_numbers = #tpu.dot_dimension_numbers<[1], [0], [0], [1], [0, 0, 1, 1], [], []>} : vector<1x80xf32>, vector<80x120xf32>, vector<1x120xf32> -> vector<1x120xf32>
    %81 = arith.addf %77, %80 : vector<1x120xf32>
    %c1_89 = arith.constant 1 : index
    %c0_90 = arith.constant 0 : index
    %82 = vector.load %arg18[%c1_89, %c0_90] : memref<5x80xf32, #tpu.memory_space<vmem>>, vector<1x80xf32>
    %c80 = arith.constant 80 : index
    %c0_91 = arith.constant 0 : index
    %83 = vector.load %arg10[%c80, %c0_91] : memref<400x120xf32, #tpu.memory_space<vmem>>, vector<80x120xf32>
    %cst_92 = arith.constant dense<0.000000e+00> : vector<1x120xf32>
    %84 = tpu.matmul %82, %83, %cst_92 {dimension_numbers = #tpu.dot_dimension_numbers<[1], [0], [0], [1], [0, 0, 1, 1], [], []>} : vector<1x80xf32>, vector<80x120xf32>, vector<1x120xf32> -> vector<1x120xf32>
    %85 = arith.addf %81, %84 : vector<1x120xf32>
    %c2_93 = arith.constant 2 : index
    %c0_94 = arith.constant 0 : index
    %86 = vector.load %arg18[%c2_93, %c0_94] : memref<5x80xf32, #tpu.memory_space<vmem>>, vector<1x80xf32>
    %c160 = arith.constant 160 : index
    %c0_95 = arith.constant 0 : index
    %87 = vector.load %arg10[%c160, %c0_95] : memref<400x120xf32, #tpu.memory_space<vmem>>, vector<80x120xf32>
    %cst_96 = arith.constant dense<0.000000e+00> : vector<1x120xf32>
    %88 = tpu.matmul %86, %87, %cst_96 {dimension_numbers = #tpu.dot_dimension_numbers<[1], [0], [0], [1], [0, 0, 1, 1], [], []>} : vector<1x80xf32>, vector<80x120xf32>, vector<1x120xf32> -> vector<1x120xf32>
    %89 = arith.addf %85, %88 : vector<1x120xf32>
    %c3_97 = arith.constant 3 : index
    %c0_98 = arith.constant 0 : index
    %90 = vector.load %arg18[%c3_97, %c0_98] : memref<5x80xf32, #tpu.memory_space<vmem>>, vector<1x80xf32>
    %c240 = arith.constant 240 : index
    %c0_99 = arith.constant 0 : index
    %91 = vector.load %arg10[%c240, %c0_99] : memref<400x120xf32, #tpu.memory_space<vmem>>, vector<80x120xf32>
    %cst_100 = arith.constant dense<0.000000e+00> : vector<1x120xf32>
    %92 = tpu.matmul %90, %91, %cst_100 {dimension_numbers = #tpu.dot_dimension_numbers<[1], [0], [0], [1], [0, 0, 1, 1], [], []>} : vector<1x80xf32>, vector<80x120xf32>, vector<1x120xf32> -> vector<1x120xf32>
    %93 = arith.addf %89, %92 : vector<1x120xf32>
    %c4_101 = arith.constant 4 : index
    %c0_102 = arith.constant 0 : index
    %94 = vector.load %arg18[%c4_101, %c0_102] : memref<5x80xf32, #tpu.memory_space<vmem>>, vector<1x80xf32>
    %c320 = arith.constant 320 : index
    %c0_103 = arith.constant 0 : index
    %95 = vector.load %arg10[%c320, %c0_103] : memref<400x120xf32, #tpu.memory_space<vmem>>, vector<80x120xf32>
    %cst_104 = arith.constant dense<0.000000e+00> : vector<1x120xf32>
    %96 = tpu.matmul %94, %95, %cst_104 {dimension_numbers = #tpu.dot_dimension_numbers<[1], [0], [0], [1], [0, 0, 1, 1], [], []>} : vector<1x80xf32>, vector<80x120xf32>, vector<1x120xf32> -> vector<1x120xf32>
    %97 = arith.addf %93, %96 : vector<1x120xf32>
    %c0_105 = arith.constant 0 : index
    %c0_106 = arith.constant 0 : index
    %98 = vector.load %arg11[%c0_105, %c0_106] : memref<1x120xf32, #tpu.memory_space<vmem>>, vector<1x120xf32>
    %99 = arith.addf %97, %98 : vector<1x120xf32>
    %cst_107 = arith.constant 0.000000e+00 : f32
    %100 = vector.broadcast %cst_107 : f32 to vector<1x120xf32>
    %101 = arith.maximumf %99, %100 : vector<1x120xf32>
    %c0_108 = arith.constant 0 : index
    %c0_109 = arith.constant 0 : index
    %102 = vector.load %arg12[%c0_108, %c0_109] : memref<120x84xf32, #tpu.memory_space<vmem>>, vector<120x84xf32>
    %cst_110 = arith.constant dense<0.000000e+00> : vector<1x84xf32>
    %103 = tpu.matmul %101, %102, %cst_110 {dimension_numbers = #tpu.dot_dimension_numbers<[1], [0], [0], [1], [0, 0, 1, 1], [], []>} : vector<1x120xf32>, vector<120x84xf32>, vector<1x84xf32> -> vector<1x84xf32>
    %c0_111 = arith.constant 0 : index
    %c0_112 = arith.constant 0 : index
    %104 = vector.load %arg13[%c0_111, %c0_112] : memref<1x84xf32, #tpu.memory_space<vmem>>, vector<1x84xf32>
    %105 = arith.addf %103, %104 : vector<1x84xf32>
    %cst_113 = arith.constant 0.000000e+00 : f32
    %106 = vector.broadcast %cst_113 : f32 to vector<1x84xf32>
    %107 = arith.maximumf %105, %106 : vector<1x84xf32>
    %c0_114 = arith.constant 0 : index
    %c0_115 = arith.constant 0 : index
    %108 = vector.load %arg14[%c0_114, %c0_115] : memref<84x10xf32, #tpu.memory_space<vmem>>, vector<84x10xf32>
    %cst_116 = arith.constant dense<0.000000e+00> : vector<1x10xf32>
    %109 = tpu.matmul %107, %108, %cst_116 {dimension_numbers = #tpu.dot_dimension_numbers<[1], [0], [0], [1], [0, 0, 1, 1], [], []>} : vector<1x84xf32>, vector<84x10xf32>, vector<1x10xf32> -> vector<1x10xf32>
    %c0_117 = arith.constant 0 : index
    %c0_118 = arith.constant 0 : index
    %110 = vector.load %arg15[%c0_117, %c0_118] : memref<1x10xf32, #tpu.memory_space<vmem>>, vector<1x10xf32>
    %111 = arith.addf %109, %110 : vector<1x10xf32>
    %cst_119 = arith.constant 0.000000e+00 : f32
    %112 = vector.broadcast %cst_119 : f32 to vector<1x128xf32>
    %c0_120 = arith.constant 0 : index
    %c0_121 = arith.constant 0 : index
    %c0_122 = arith.constant 0 : index
    %113 = vector.load %arg16[%c0_120, %c0_121, %c0_122] : memref<1x1x128xf32, #tpu.memory_space<vmem>>, vector<1x1x128xf32>
    %114 = vector.shape_cast %113 : vector<1x1x128xf32> to vector<1x128xf32>
    %115 = vector.shape_cast %112 : vector<1x128xf32> to vector<1x1x128xf32>
    tpu.vector_store %arg16[%c0_120, %c0_121, %c0_122], %115 {strides = array<i32>} : memref<1x1x128xf32, #tpu.memory_space<vmem>>, vector<1x1x128xf32>,
    %c0_123 = arith.constant 0 : index
    %c0_124 = arith.constant 0 : index
    %c0_125 = arith.constant 0 : index
    %116 = vector.load %arg16[%c0_123, %c0_124, %c0_125] : memref<1x1x128xf32, #tpu.memory_space<vmem>>, vector<1x1x10xf32>
    %117 = vector.shape_cast %116 : vector<1x1x10xf32> to vector<1x10xf32>
    %118 = vector.shape_cast %111 : vector<1x10xf32> to vector<1x1x10xf32>
    tpu.vector_store %arg16[%c0_123, %c0_124, %c0_125], %118 {strides = array<i32>} : memref<1x1x128xf32, #tpu.memory_space<vmem>>, vector<1x1x10xf32>,
    return
  }
  func.func @transform_0(%arg0: i32) -> (i32, i32, i32) {
    %c0_i32 = arith.constant 0 : i32
    %c0_i32_0 = arith.constant 0 : i32
    %c0_i32_1 = arith.constant 0 : i32
    return %arg0, %c0_i32, %c0_i32_0 : i32, i32, i32
  }
  func.func @transform_1(%arg0: i32) -> (i32, i32, i32) {
    %c0_i32 = arith.constant 0 : i32
    %c0_i32_0 = arith.constant 0 : i32
    %c0_i32_1 = arith.constant 0 : i32
    %c0_i32_2 = arith.constant 0 : i32
    return %c0_i32, %c0_i32_0, %c0_i32_1 : i32, i32, i32
  }
  func.func @transform_2(%arg0: i32) -> (i32, i32) {
    %c0_i32 = arith.constant 0 : i32
    %c0_i32_0 = arith.constant 0 : i32
    %c0_i32_1 = arith.constant 0 : i32
    return %c0_i32, %c0_i32_0 : i32, i32
  }
  func.func @transform_3(%arg0: i32) -> (i32, i32) {
    %c0_i32 = arith.constant 0 : i32
    %c0_i32_0 = arith.constant 0 : i32
    %c0_i32_1 = arith.constant 0 : i32
    return %c0_i32, %c0_i32_0 : i32, i32
  }
  func.func @transform_4(%arg0: i32) -> (i32, i32) {
    %c0_i32 = arith.constant 0 : i32
    %c0_i32_0 = arith.constant 0 : i32
    %c0_i32_1 = arith.constant 0 : i32
    return %c0_i32, %c0_i32_0 : i32, i32
  }
  func.func @transform_5(%arg0: i32) -> (i32, i32, i32) {
    %c0_i32 = arith.constant 0 : i32
    %c0_i32_0 = arith.constant 0 : i32
    %c0_i32_1 = arith.constant 0 : i32
    %c0_i32_2 = arith.constant 0 : i32
    return %c0_i32, %c0_i32_0, %c0_i32_1 : i32, i32, i32
  }
  func.func @transform_6(%arg0: i32) -> (i32, i32) {
    %c0_i32 = arith.constant 0 : i32
    %c0_i32_0 = arith.constant 0 : i32
    %c0_i32_1 = arith.constant 0 : i32
    return %c0_i32, %c0_i32_0 : i32, i32
  }
  func.func @transform_7(%arg0: i32) -> (i32, i32) {
    %c0_i32 = arith.constant 0 : i32
    %c0_i32_0 = arith.constant 0 : i32
    %c0_i32_1 = arith.constant 0 : i32
    return %c0_i32, %c0_i32_0 : i32, i32
  }
  func.func @transform_8(%arg0: i32) -> (i32, i32) {
    %c0_i32 = arith.constant 0 : i32
    %c0_i32_0 = arith.constant 0 : i32
    %c0_i32_1 = arith.constant 0 : i32
    return %c0_i32, %c0_i32_0 : i32, i32
  }
  func.func @transform_9(%arg0: i32) -> (i32, i32) {
    %c0_i32 = arith.constant 0 : i32
    %c0_i32_0 = arith.constant 0 : i32
    %c0_i32_1 = arith.constant 0 : i32
    return %c0_i32, %c0_i32_0 : i32, i32
  }
  func.func @transform_10(%arg0: i32) -> (i32, i32) {
    %c0_i32 = arith.constant 0 : i32
    %c0_i32_0 = arith.constant 0 : i32
    %c0_i32_1 = arith.constant 0 : i32
    return %c0_i32, %c0_i32_0 : i32, i32
  }
  func.func @transform_11(%arg0: i32) -> (i32, i32) {
    %c0_i32 = arith.constant 0 : i32
    %c0_i32_0 = arith.constant 0 : i32
    %c0_i32_1 = arith.constant 0 : i32
    return %c0_i32, %c0_i32_0 : i32, i32
  }
  func.func @transform_12(%arg0: i32) -> (i32, i32) {
    %c0_i32 = arith.constant 0 : i32
    %c0_i32_0 = arith.constant 0 : i32
    %c0_i32_1 = arith.constant 0 : i32
    return %c0_i32, %c0_i32_0 : i32, i32
  }
  func.func @transform_13(%arg0: i32) -> (i32, i32) {
    %c0_i32 = arith.constant 0 : i32
    %c0_i32_0 = arith.constant 0 : i32
    %c0_i32_1 = arith.constant 0 : i32
    return %c0_i32, %c0_i32_0 : i32, i32
  }
  func.func @transform_14(%arg0: i32) -> (i32, i32) {
    %c0_i32 = arith.constant 0 : i32
    %c0_i32_0 = arith.constant 0 : i32
    %c0_i32_1 = arith.constant 0 : i32
    return %c0_i32, %c0_i32_0 : i32, i32
  }
  func.func @transform_15(%arg0: i32) -> (i32, i32, i32) {
    %c0_i32 = arith.constant 0 : i32
    %c0_i32_0 = arith.constant 0 : i32
    %c0_i32_1 = arith.constant 0 : i32
    return %arg0, %c0_i32, %c0_i32_0 : i32, i32, i32
  }
}

</mosaic_0001>

<llo_original>
// kernel: tile.19
$region0: #{tile.19}
  %s0 = inlined_call_operand.vmem [shape: f32[10,16], index: 0, kind: input, shape index: {}]
  %s1 = inlined_call_operand.vmem [shape: f32[1,160], index: 1, kind: output, shape index: {}]
  $region1: #{tile.19} parent=0
    #allocation0 [shape = 'u8[8192]{0}', space=vmem, size = 0x2000, scoped, tag = 'scoped mem for output reshape']
    %s2 = smov 3
    %v3 = vld [vmem:[%s0] ss:$8 sm:%s2]
    %vm4 = vcmask 130048
    %5 = vst.msk [vmem:[#allocation0] ss:$8 sm:$0x3] %vm4, %v3
    %s6 = scalar_lea.vmem %s0, 7
    %v7 = vld [vmem:[%s6] sm:$0x1]
    %8 = vrot.lane.b32.xlu0 %v7, 112
    %v9 = vpop.permute.xlu0 %8
    %vm10 = vcmask 1048448
    %11 = vst.msk [vmem:[#allocation0] sm:$0x1] %vm10, %v9
    %s12 = scalar_lea.vmem %s0, 6
    %v13 = vld [vmem:[%s12] sm:$0x1]
    %14 = vrot.lane.b32.xlu0 %v13, 96
    %v15 = vpop.permute.xlu0 %14
    %vm16 = vcmask 917248
    %17 = vst.msk [vmem:[#allocation0] sm:$0x1] %vm16, %v15
    %s18 = scalar_lea.vmem %s0, 5
    %v19 = vld [vmem:[%s18] sm:$0x1]
    %20 = vrot.lane.b32.xlu0 %v19, 80
    %v21 = vpop.permute.xlu0 %20
    %vm22 = vcmask 786048
    %23 = vst.msk [vmem:[#allocation0] sm:$0x1] %vm22, %v21
    %s24 = scalar_lea.vmem %s0, 4
    %v25 = vld [vmem:[%s24] sm:$0x1]
    %26 = vrot.lane.b32.xlu0 %v25, 64
    %v27 = vpop.permute.xlu0 %26
    %vm28 = vcmask 654848
    %29 = vst.msk [vmem:[#allocation0] sm:$0x1] %vm28, %v27
    %s30 = scalar_lea.vmem %s0, 3
    %v31 = vld [vmem:[%s30] sm:$0x1]
    %32 = vrot.lane.b32.xlu0 %v31, 48
    %v33 = vpop.permute.xlu0 %32
    %vm34 = vcmask 523648
    %35 = vst.msk [vmem:[#allocation0] sm:$0x1] %vm34, %v33
    %s36 = scalar_lea.vmem %s0, 2
    %v37 = vld [vmem:[%s36] sm:$0x1]
    %38 = vrot.lane.b32.xlu0 %v37, 32
    %v39 = vpop.permute.xlu0 %38
    %vm40 = vcmask 392448
    %41 = vst.msk [vmem:[#allocation0] sm:$0x1] %vm40, %v39
    %s42 = scalar_lea.vmem %s0, 1
    %s43 = smov 3
    %v44 = vld [vmem:[%s42] ss:$8 sm:%s43]
    %45 = vrot.lane.b32.xlu0 %v44, 16
    %v46 = vpop.permute.xlu0 %45
    %vm47 = vcmask 261248
    %48 = vst.msk [vmem:[#allocation0] ss:$8 sm:$0x3] %vm47, %v46
    %s50 = sshll.u32 1, 1
    %s51 = ssub.s32 %s50, 1
    %v53 = vld [vmem:[#allocation0] sm:%s51]
    %s54 = sshll.u32 1, 1
    %s55 = ssub.s32 %s54, 1
    %56 = vst [vmem:[%s1] sm:%s55] %v53
    %s57 = scalar_lea.vmem [#allocation0], 8
    %v58 = vld [vmem:[%s57] sm:%s51]
    %s59 = sshll.u32 1, 1
    %s60 = ssub.s32 %s59, 1
    %s61 = scalar_lea.vmem %s1, 1
    %62 = vst [vmem:[%s61] sm:%s60] %v58

// kernel: tile.18
$region0: #{tile.18}
  #allocation2 [shape = 's32[1]{0}', space=sflag, size = 0x4, scoped, tag = 'scoped memory for tile.18']
  %s0 = inlined_call_operand.hbm [shape: f32[16], index: 0, kind: input, shape index: {}]
  %s1 = inlined_call_operand.vmem [shape: f32[10,16], index: 1, kind: output, shape index: {}]
  $region1: #{tile.18} parent=0
    #allocation0 [shape = 'u8[512]{0}', space=vmem, size = 0x400, scoped, tag = 'operand span for operand 0']
    #allocation1 [shape = 's32[1]{0}', space=sflag, size = 0x4, scoped, tag = 'scoped memory for tile.18']
    %2 = vsyncpa [#allocation1], 0
    // Predicated region
    $region2: #{tile.18} parent=1 // pred_check
      _
    $region3: #{tile.18} parent=1 // pred_check_branch
      %4 = sbr.rel (0) target = $region5
    $region4: #{tile.18} parent=1 // pred_region
      %s6 = ssub.s32 16, 16
      %7 = vsyncadd [#allocation1], %s6
      %s9 = sshll.u32 [#allocation0], 4
      %s10 = int_to_ptr.vmem [resolvable:$true] %s9
      %12 = dma.hbm_to_vmem [thread:$0]  %s0, 16, %s10, [#allocation1]
    $region5: #{tile.18} parent=1 // pred_fallthru
      _
    // Predicated region
    $region6: #{tile.18} parent=1 // pred_check
      _
    $region7: #{tile.18} parent=1 // pred_check_branch
      %14 = sbr.rel (0) target = $region9
    $region8: #{tile.18} parent=1 // pred_region
      %15 = dma.done [#allocation1], 16
    $region9: #{tile.18} parent=1 // pred_fallthru
      _
    %v16 = vld [vmem:[#allocation0] ss:$0 sm:$0xff]
    %17 = vst [vmem:[%s1] sm:$0xff] %v16
    %s18 = scalar_lea.vmem %s1, 8
    %19 = vst [vmem:[%s18] sm:$0xff] %v16
    %20 = vsyncpa [#allocation1], 1

// kernel: tile.13
$region0: #{tile.13}
  #allocation2 [shape = 's32[1]{0}', space=sflag, size = 0x4, scoped, tag = 'scoped memory for tile.13']
  %s0 = inlined_call_operand.hbm [shape: f32[6], index: 0, kind: input, shape index: {}]
  %s1 = inlined_call_operand.vmem [shape: f32[28,6], index: 1, kind: output, shape index: {}]
  $region1: #{tile.13} parent=0
    #allocation0 [shape = 'u8[512]{0}', space=vmem, size = 0x400, scoped, tag = 'operand span for operand 0']
    #allocation1 [shape = 's32[1]{0}', space=sflag, size = 0x4, scoped, tag = 'scoped memory for tile.13']
    %2 = vsyncpa [#allocation1], 0
    // Predicated region
    $region2: #{tile.13} parent=1 // pred_check
      _
    $region3: #{tile.13} parent=1 // pred_check_branch
      %4 = sbr.rel (0) target = $region5
    $region4: #{tile.13} parent=1 // pred_region
      %s6 = ssub.s32 16, 16
      %7 = vsyncadd [#allocation1], %s6
      %s9 = sshll.u32 [#allocation0], 4
      %s10 = int_to_ptr.vmem [resolvable:$true] %s9
      %12 = dma.hbm_to_vmem [thread:$0]  %s0, 16, %s10, [#allocation1]
    $region5: #{tile.13} parent=1 // pred_fallthru
      _
    // Predicated region
    $region6: #{tile.13} parent=1 // pred_check
      _
    $region7: #{tile.13} parent=1 // pred_check_branch
      %14 = sbr.rel (0) target = $region9
    $region8: #{tile.13} parent=1 // pred_region
      %15 = dma.done [#allocation1], 16
    $region9: #{tile.13} parent=1 // pred_fallthru
      _
    %v16 = vld [vmem:[#allocation0] ss:$0 sm:$0xff]
    %17 = vst [vmem:[%s1] sm:$0xff] %v16
    %s18 = scalar_lea.vmem %s1, 8
    %19 = vst [vmem:[%s18] sm:$0xff] %v16
    %s20 = scalar_lea.vmem %s1, 16
    %21 = vst [vmem:[%s20] sm:$0xff] %v16
    %s22 = scalar_lea.vmem %s1, 24
    %23 = vst [vmem:[%s22] sm:$0xff] %v16
    %24 = vsyncpa [#allocation1], 1

// kernel: tile.14
$region0: #{tile.14}
  %s0 = inlined_call_operand.vmem [shape: f32[28,6], index: 0, kind: input, shape index: {}]
  %s1 = inlined_call_operand.vmem [shape: f32[1,168], index: 1, kind: output, shape index: {}]
  $region1: #{tile.14} parent=0
    #allocation0 [shape = 'u8[8192]{0}', space=vmem, size = 0x2000, scoped, tag = 'scoped mem for output reshape']
    %v2 = vld [vmem:[%s0] sm:$0x1]
    %vm3 = vcmask 48128
    %4 = vst.msk [vmem:[#allocation0] sm:$0x1] %vm3, %v2
    %s5 = scalar_lea.vmem %s0, 21
    %v6 = vld [vmem:[%s5] sm:$0x1]
    %s7 = scalar_lea.vmem %s0, 21
    %v8 = vld [vmem:[%s7] sm:$0x1]
    %vm9 = vcmask 15360
    %v10 = vsel %vm9, %v8, %v6
    %11 = vrot.lane.b32.xlu0 %v10, 126
    %v12 = vpop.permute.xlu0 %11
    %vm13 = vcmask 31744
    %s14 = scalar_lea.vmem [#allocation0], 8
    %15 = vst.msk [vmem:[%s14] sm:$0x1] %vm13, %v12
    %vm16 = vcmask 1048560
    %17 = vst.msk [vmem:[#allocation0] sm:$0x1] %vm16, %v12
    %s18 = scalar_lea.vmem %s0, 20
    %v19 = vld [vmem:[%s18] sm:$0x1]
    %20 = vrot.lane.b32.xlu0 %v19, 120
    %v21 = vpop.permute.xlu0 %20
    %vm22 = vcmask 1032128
    %23 = vst.msk [vmem:[#allocation0] sm:$0x1] %vm22, %v21
    %s24 = scalar_lea.vmem %s0, 19
    %v25 = vld [vmem:[%s24] sm:$0x1]
    %26 = vrot.lane.b32.xlu0 %v25, 114
    %v27 = vpop.permute.xlu0 %26
    %vm28 = vcmask 982928
    %29 = vst.msk [vmem:[#allocation0] sm:$0x1] %vm28, %v27
    %s30 = scalar_lea.vmem %s0, 18
    %v31 = vld [vmem:[%s30] sm:$0x1]
    %32 = vrot.lane.b32.xlu0 %v31, 108
    %v33 = vpop.permute.xlu0 %32
    %vm34 = vcmask 933728
    %35 = vst.msk [vmem:[#allocation0] sm:$0x1] %vm34, %v33
    %s36 = scalar_lea.vmem %s0, 17
    %v37 = vld [vmem:[%s36] sm:$0x1]
    %38 = vrot.lane.b32.xlu0 %v37, 102
    %v39 = vpop.permute.xlu0 %38
    %vm40 = vcmask 884528
    %41 = vst.msk [vmem:[#allocation0] sm:$0x1] %vm40, %v39
    %s42 = scalar_lea.vmem %s0, 16
    %v43 = vld [vmem:[%s42] sm:$0x1]
    %44 = vrot.lane.b32.xlu0 %v43, 96
    %v45 = vpop.permute.xlu0 %44
    %vm46 = vcmask 835328
    %47 = vst.msk [vmem:[#allocation0] sm:$0x1] %vm46, %v45
    %s48 = scalar_lea.vmem %s0, 15
    %v49 = vld [vmem:[%s48] sm:$0x1]
    %50 = vrot.lane.b32.xlu0 %v49, 90
    %v51 = vpop.permute.xlu0 %50
    %vm52 = vcmask 786128
    %53 = vst.msk [vmem:[#allocation0] sm:$0x1] %vm52, %v51
    %s54 = scalar_lea.vmem %s0, 14
    %v55 = vld [vmem:[%s54] sm:$0x1]
    %56 = vrot.lane.b32.xlu0 %v55, 84
    %v57 = vpop.permute.xlu0 %56
    %vm58 = vcmask 736928
    %59 = vst.msk [vmem:[#allocation0] sm:$0x1] %vm58, %v57
    %s60 = scalar_lea.vmem %s0, 13
    %v61 = vld [vmem:[%s60] sm:$0x1]
    %62 = vrot.lane.b32.xlu0 %v61, 78
    %v63 = vpop.permute.xlu0 %62
    %vm64 = vcmask 687728
    %65 = vst.msk [vmem:[#allocation0] sm:$0x1] %vm64, %v63
    %s66 = scalar_lea.vmem %s0, 12
    %v67 = vld [vmem:[%s66] sm:$0x1]
    %68 = vrot.lane.b32.xlu0 %v67, 72
    %v69 = vpop.permute.xlu0 %68
    %vm70 = vcmask 638528
    %71 = vst.msk [vmem:[#allocation0] sm:$0x1] %vm70, %v69
    %s72 = scalar_lea.vmem %s0, 11
    %v73 = vld [vmem:[%s72] sm:$0x1]
    %74 = vrot.lane.b32.xlu0 %v73, 66
    %v75 = vpop.permute.xlu0 %74
    %vm76 = vcmask 589328
    %77 = vst.msk [vmem:[#allocation0] sm:$0x1] %vm76, %v75
    %s78 = scalar_lea.vmem %s0, 10
    %v79 = vld [vmem:[%s78] sm:$0x1]
    %80 = vrot.lane.b32.xlu0 %v79, 60
    %v81 = vpop.permute.xlu0 %80
    %vm82 = vcmask 540128
    %83 = vst.msk [vmem:[#allocation0] sm:$0x1] %vm82, %v81
    %s84 = scalar_lea.vmem %s0, 9
    %v85 = vld [vmem:[%s84] sm:$0x1]
    %86 = vrot.lane.b32.xlu0 %v85, 54
    %v87 = vpop.permute.xlu0 %86
    %vm88 = vcmask 490928
    %89 = vst.msk [vmem:[#allocation0] sm:$0x1] %vm88, %v87
    %s90 = scalar_lea.vmem %s0, 8
    %v91 = vld [vmem:[%s90] sm:$0x1]
    %92 = vrot.lane.b32.xlu0 %v91, 48
    %v93 = vpop.permute.xlu0 %92
    %vm94 = vcmask 441728
    %95 = vst.msk [vmem:[#allocation0] sm:$0x1] %vm94, %v93
    %s96 = scalar_lea.vmem %s0, 7
    %v97 = vld [vmem:[%s96] sm:$0x1]
    %98 = vrot.lane.b32.xlu0 %v97, 42
    %v99 = vpop.permute.xlu0 %98
    %vm100 = vcmask 392528
    %101 = vst.msk [vmem:[#allocation0] sm:$0x1] %vm100, %v99
    %s102 = scalar_lea.vmem %s0, 6
    %v103 = vld [vmem:[%s102] sm:$0x1]
    %104 = vrot.lane.b32.xlu0 %v103, 36
    %v105 = vpop.permute.xlu0 %104
    %vm106 = vcmask 343328
    %107 = vst.msk [vmem:[#allocation0] sm:$0x1] %vm106, %v105
    %s108 = scalar_lea.vmem %s0, 27
    %v109 = vld [vmem:[%s108] sm:$0x1]
    %110 = vrot.lane.b32.xlu0 %v109, 34
    %v111 = vpop.permute.xlu0 %110
    %vm112 = vcmask 326928
    %s113 = scalar_lea.vmem [#allocation0], 8
    %114 = vst.msk [vmem:[%s113] sm:$0x1] %vm112, %v111
    %s115 = scalar_lea.vmem %s0, 5
    %v116 = vld [vmem:[%s115] sm:$0x1]
    %117 = vrot.lane.b32.xlu0 %v116, 30
    %v118 = vpop.permute.xlu0 %117
    %vm119 = vcmask 294128
    %120 = vst.msk [vmem:[#allocation0] sm:$0x1] %vm119, %v118
    %s121 = scalar_lea.vmem %s0, 26
    %v122 = vld [vmem:[%s121] sm:$0x1]
    %123 = vrot.lane.b32.xlu0 %v122, 28
    %v124 = vpop.permute.xlu0 %123
    %vm125 = vcmask 277728
    %s126 = scalar_lea.vmem [#allocation0], 8
    %127 = vst.msk [vmem:[%s126] sm:$0x1] %vm125, %v124
    %s128 = scalar_lea.vmem %s0, 4
    %v129 = vld [vmem:[%s128] sm:$0x1]
    %130 = vrot.lane.b32.xlu0 %v129, 24
    %v131 = vpop.permute.xlu0 %130
    %vm132 = vcmask 244928
    %133 = vst.msk [vmem:[#allocation0] sm:$0x1] %vm132, %v131
    %s134 = scalar_lea.vmem %s0, 25
    %v135 = vld [vmem:[%s134] sm:$0x1]
    %136 = vrot.lane.b32.xlu0 %v135, 22
    %v137 = vpop.permute.xlu0 %136
    %vm138 = vcmask 228528
    %s139 = scalar_lea.vmem [#allocation0], 8
    %140 = vst.msk [vmem:[%s139] sm:$0x1] %vm138, %v137
    %s141 = scalar_lea.vmem %s0, 3
    %v142 = vld [vmem:[%s141] sm:$0x1]
    %143 = vrot.lane.b32.xlu0 %v142, 18
    %v144 = vpop.permute.xlu0 %143
    %vm145 = vcmask 195728
    %146 = vst.msk [vmem:[#allocation0] sm:$0x1] %vm145, %v144
    %s147 = scalar_lea.vmem %s0, 24
    %v148 = vld [vmem:[%s147] sm:$0x1]
    %149 = vrot.lane.b32.xlu0 %v148, 16
    %v150 = vpop.permute.xlu0 %149
    %vm151 = vcmask 179328
    %s152 = scalar_lea.vmem [#allocation0], 8
    %153 = vst.msk [vmem:[%s152] sm:$0x1] %vm151, %v150
    %s154 = scalar_lea.vmem %s0, 2
    %v155 = vld [vmem:[%s154] sm:$0x1]
    %156 = vrot.lane.b32.xlu0 %v155, 12
    %v157 = vpop.permute.xlu0 %156
    %vm158 = vcmask 146528
    %159 = vst.msk [vmem:[#allocation0] sm:$0x1] %vm158, %v157
    %s160 = scalar_lea.vmem %s0, 23
    %v161 = vld [vmem:[%s160] sm:$0x1]
    %162 = vrot.lane.b32.xlu0 %v161, 10
    %v163 = vpop.permute.xlu0 %162
    %vm164 = vcmask 130128
    %s165 = scalar_lea.vmem [#allocation0], 8
    %166 = vst.msk [vmem:[%s165] sm:$0x1] %vm164, %v163
    %s167 = scalar_lea.vmem %s0, 1
    %v168 = vld [vmem:[%s167] sm:$0x1]
    %169 = vrot.lane.b32.xlu0 %v168, 6
    %v170 = vpop.permute.xlu0 %169
    %vm171 = vcmask 97328
    %172 = vst.msk [vmem:[#allocation0] sm:$0x1] %vm171, %v170
    %s173 = scalar_lea.vmem %s0, 22
    %v174 = vld [vmem:[%s173] sm:$0x1]
    %175 = vrot.lane.b32.xlu0 %v174, 4
    %v176 = vpop.permute.xlu0 %175
    %vm177 = vcmask 80928
    %s178 = scalar_lea.vmem [#allocation0], 8
    %179 = vst.msk [vmem:[%s178] sm:$0x1] %vm177, %v176
    %s181 = sshll.u32 1, 1
    %s182 = ssub.s32 %s181, 1
    %v184 = vld [vmem:[#allocation0] sm:%s182]
    %s185 = sshll.u32 1, 1
    %s186 = ssub.s32 %s185, 1
    %187 = vst [vmem:[%s1] sm:%s186] %v184
    %s188 = scalar_lea.vmem [#allocation0], 8
    %v189 = vld [vmem:[%s188] sm:%s182]
    %s190 = sshll.u32 1, 1
    %s191 = ssub.s32 %s190, 1
    %s192 = scalar_lea.vmem %s1, 1
    %193 = vst [vmem:[%s192] sm:%s191] %v189

// kernel: lenet_forward.1
$region0: #{lenet_forward.1}
  #allocation0 [shape = 'u32[]', space=smem, size = 0x4, offset = 0x4, fixed_abs, tag = 'smem constant byte address 0x4 - core index']
  #allocation1 [shape = 'u32[144,128]{1,0:T(1,128)}', space=vmem, size = 0x12000, scoped, tag = 'internal scratch']
  #allocation2 [shape = 'f32[14,84]{1,0:T(8,128)}', space=vmem, size = 0x2000, scoped, tag = 'scratch operand']
  #allocation3 [shape = 'f32[5,80]{1,0:T(8,128)}', space=vmem, size = 0x1000, scoped, tag = 'scratch operand']
  %s0 = inlined_call_operand.vmem [shape: f32[2,32,32], index: 0, kind: input, shape index: {}]
  %s1 = inlined_call_operand.vmem [shape: f32[5,32,168], index: 1, kind: input, shape index: {}]
  %s2 = inlined_call_operand.vmem [shape: f32[1,168], index: 2, kind: input, shape index: {}]
  %s3 = inlined_call_operand.vmem [shape: f32[168,84], index: 3, kind: input, shape index: {}]
  %s4 = inlined_call_operand.vmem [shape: f32[14,28], index: 4, kind: input, shape index: {}]
  %s5 = inlined_call_operand.vmem [shape: f32[5,84,160], index: 5, kind: input, shape index: {}]
  %s6 = inlined_call_operand.vmem [shape: f32[1,160], index: 6, kind: input, shape index: {}]
  %s7 = inlined_call_operand.vmem [shape: f32[160,80], index: 7, kind: input, shape index: {}]
  %s8 = inlined_call_operand.vmem [shape: f32[5,10], index: 8, kind: input, shape index: {}]
  %s9 = inlined_call_operand.vmem [shape: f32[400,120], index: 9, kind: input, shape index: {}]
  %s10 = inlined_call_operand.vmem [shape: f32[1,120], index: 10, kind: input, shape index: {}]
  %s11 = inlined_call_operand.vmem [shape: f32[120,84], index: 11, kind: input, shape index: {}]
  %s12 = inlined_call_operand.vmem [shape: f32[1,84], index: 12, kind: input, shape index: {}]
  %s13 = inlined_call_operand.vmem [shape: f32[84,10], index: 13, kind: input, shape index: {}]
  %s14 = inlined_call_operand.vmem [shape: f32[1,10], index: 14, kind: input, shape index: {}]
  %s15 = inlined_call_operand.hbm [shape: f32[2,1,128], index: 15, kind: output, shape index: {}]
  %s16 = sld [smem:[#allocation0]]
  $region93: #{lenet_forward.1} parent=0
    _
  %s18 = ssub.s32 1, %s16
  %s19 = scalar_select 0, %s18, %s16
  $region1: #{lenet_forward.1} parent=0
    #allocation4 [shape = 'u8[1024]{0}', space=vmem, size = 0x400, scoped, tag = 'output window, operand 0']
    #allocation5 [shape = 's32[2]{0}', space=sflag, size = 0x8, scoped, tag = 'scoped memory for lenet_forward.1']
    %20 = vsyncpa [#allocation5], 0
    %s21 = scalar_lea.sflag [#allocation5], 1
    %22 = vsyncpa %s21, 0
    loop: start=0, step=1, limit=4
    $region2: #{lenet_forward.1} parent=1 // loop_pre_header
      _
    $region3: #{lenet_forward.1} parent=1 // loop_header
      %s24 = sphi 0, %s28
      %p25 = scmp.ge.s32.totalorder %s24, 4
      %s34 = sphi 0, %s36
      %s37 = sphi 0, %s34
      %s38 = sphi 0, %s37
      %s54 = sphi 0, %s38
      %s58 = sphi 0, %s58
      %s60 = sphi 0, %s58
      %s61 = sphi 0, %s60
      %s75 = sphi 0, %s61
      %s79 = sphi 0, %s79
      %s81 = sphi 0, %s79
      %s82 = sphi 0, %s81
      %s96 = sphi 0, %s82
      %s100 = sphi 0, %s100
      %s102 = sphi 0, %s100
      %s103 = sphi 0, %s102
      %s117 = sphi 0, %s103
      %s121 = sphi 0, %s121
      %s123 = sphi 0, %s121
      %s124 = sphi 0, %s123
      %s138 = sphi 0, %s124
      %s142 = sphi 0, %s142
      %s144 = sphi 0, %s142
      %s145 = sphi 0, %s144
      %s159 = sphi 0, %s145
      %s163 = sphi 0, %s163
      %s165 = sphi 0, %s163
      %s166 = sphi 0, %s165
      %s180 = sphi 0, %s166
      %s184 = sphi 0, %s184
      %s186 = sphi 0, %s184
      %s187 = sphi 0, %s186
      %s201 = sphi 0, %s187
      %s205 = sphi 0, %s205
      %s207 = sphi 0, %s205
      %s208 = sphi 0, %s207
      %s222 = sphi 0, %s208
      %s226 = sphi 0, %s226
      %s228 = sphi 0, %s226
      %s229 = sphi 0, %s228
      %s243 = sphi 0, %s229
      %s247 = sphi 0, %s247
      %s249 = sphi 0, %s247
      %s250 = sphi 0, %s249
      %s264 = sphi 0, %s250
      %s268 = sphi 0, %s268
      %s270 = sphi 0, %s268
      %s271 = sphi 0, %s270
      %s285 = sphi 0, %s271
      %s289 = sphi 0, %s289
      %s291 = sphi 0, %s289
      %s292 = sphi 0, %s291
      %s306 = sphi 0, %s292
      %s310 = sphi 0, %s310
      %s312 = sphi 0, %s310
      %s313 = sphi 0, %s312
      %s327 = sphi 0, %s313
      %s331 = sphi 0, %s331
      %s333 = sphi 0, %s331
      %s334 = sphi 0, %s333
      %s348 = sphi 0, %s334
      %s354 = sphi 0, %s356
      %s357 = sphi 0, %s354
      %s358 = sphi 0, %s357
      %s374 = sphi 0, %s358
    $region4: #{lenet_forward.1} parent=1 // loop_header_branch
      %27 = sbr.rel (%p25) target = $region8
    $region5: #{lenet_forward.1} parent=1 // loop_body
      %s29 = ssub.s32 %s24, 1
      %s30 = ssub.s32 %s24, 2
      %s31 = sadd.s32 %s24, 1
      %s32 = ssub.s32 %s24, %s31
      %p33 = scmp.eq.s32.totalorder %s32, 0
      %s35 = sadd.s32 %s34, 1
      %s36 = scalar_select %p33, %s34, %s35
      %p39 = pneg %p33
      %p40 = scmp.eq.s32.totalorder %s24, 1
      %p41 = por %p39, %p40
      %p42 = scmp.ne.s32.totalorder %s34, %s37
      %p43 = scmp.eq.s32.totalorder %s24, 0
      %p44 = por %p42, %p43
      %p45 = scmp.ne.s32.totalorder %s34, %s37
      %p46 = scmp.eq.s32.totalorder %s29, 1
      %p47 = por %p45, %p46
      %p48 = scmp.ne.s32.totalorder %s37, %s38
      %p49 = scmp.eq.s32.totalorder %s29, 0
      %p50 = por %p48, %p49
      %p51 = scmp.ne.s32.totalorder %s37, %s38
      %p52 = scmp.eq.s32.totalorder %s30, 1
      %p53 = por %p51, %p52
      %p55 = scmp.ne.s32.totalorder %s38, %s54
      %p56 = scmp.eq.s32.totalorder %s30, 0
      %p57 = por %p55, %p56
      %s59 = sadd.s32 %s58, 1
      %p62 = scmp.eq.s32.totalorder %s24, 1
      %p63 = scmp.ne.s32.totalorder %s58, %s60
      %p64 = scmp.eq.s32.totalorder %s24, 0
      %p65 = por %p63, %p64
      %p66 = scmp.ne.s32.totalorder %s58, %s60
      %p67 = scmp.eq.s32.totalorder %s29, 1
      %p68 = por %p66, %p67
      %p69 = scmp.ne.s32.totalorder %s60, %s61
      %p70 = scmp.eq.s32.totalorder %s29, 0
      %p71 = por %p69, %p70
      %p72 = scmp.ne.s32.totalorder %s60, %s61
      %p73 = scmp.eq.s32.totalorder %s30, 1
      %p74 = por %p72, %p73
      %p76 = scmp.ne.s32.totalorder %s61, %s75
      %p77 = scmp.eq.s32.totalorder %s30, 0
      %p78 = por %p76, %p77
      %s80 = sadd.s32 %s79, 1
      %p83 = scmp.eq.s32.totalorder %s24, 1
      %p84 = scmp.ne.s32.totalorder %s79, %s81
      %p85 = scmp.eq.s32.totalorder %s24, 0
      %p86 = por %p84, %p85
      %p87 = scmp.ne.s32.totalorder %s79, %s81
      %p88 = scmp.eq.s32.totalorder %s29, 1
      %p89 = por %p87, %p88
      %p90 = scmp.ne.s32.totalorder %s81, %s82
      %p91 = scmp.eq.s32.totalorder %s29, 0
      %p92 = por %p90, %p91
      %p93 = scmp.ne.s32.totalorder %s81, %s82
      %p94 = scmp.eq.s32.totalorder %s30, 1
      %p95 = por %p93, %p94
      %p97 = scmp.ne.s32.totalorder %s82, %s96
      %p98 = scmp.eq.s32.totalorder %s30, 0
      %p99 = por %p97, %p98
      %s101 = sadd.s32 %s100, 1
      %p104 = scmp.eq.s32.totalorder %s24, 1
      %p105 = scmp.ne.s32.totalorder %s100, %s102
      %p106 = scmp.eq.s32.totalorder %s24, 0
      %p107 = por %p105, %p106
      %p108 = scmp.ne.s32.totalorder %s100, %s102
      %p109 = scmp.eq.s32.totalorder %s29, 1
      %p110 = por %p108, %p109
      %p111 = scmp.ne.s32.totalorder %s102, %s103
      %p112 = scmp.eq.s32.totalorder %s29, 0
      %p113 = por %p111, %p112
      %p114 = scmp.ne.s32.totalorder %s102, %s103
      %p115 = scmp.eq.s32.totalorder %s30, 1
      %p116 = por %p114, %p115
      %p118 = scmp.ne.s32.totalorder %s103, %s117
      %p119 = scmp.eq.s32.totalorder %s30, 0
      %p120 = por %p118, %p119
      %s122 = sadd.s32 %s121, 1
      %p125 = scmp.eq.s32.totalorder %s24, 1
      %p126 = scmp.ne.s32.totalorder %s121, %s123
      %p127 = scmp.eq.s32.totalorder %s24, 0
      %p128 = por %p126, %p127
      %p129 = scmp.ne.s32.totalorder %s121, %s123
      %p130 = scmp.eq.s32.totalorder %s29, 1
      %p131 = por %p129, %p130
      %p132 = scmp.ne.s32.totalorder %s123, %s124
      %p133 = scmp.eq.s32.totalorder %s29, 0
      %p134 = por %p132, %p133
      %p135 = scmp.ne.s32.totalorder %s123, %s124
      %p136 = scmp.eq.s32.totalorder %s30, 1
      %p137 = por %p135, %p136
      %p139 = scmp.ne.s32.totalorder %s124, %s138
      %p140 = scmp.eq.s32.totalorder %s30, 0
      %p141 = por %p139, %p140
      %s143 = sadd.s32 %s142, 1
      %p146 = scmp.eq.s32.totalorder %s24, 1
      %p147 = scmp.ne.s32.totalorder %s142, %s144
      %p148 = scmp.eq.s32.totalorder %s24, 0
      %p149 = por %p147, %p148
      %p150 = scmp.ne.s32.totalorder %s142, %s144
      %p151 = scmp.eq.s32.totalorder %s29, 1
      %p152 = por %p150, %p151
      %p153 = scmp.ne.s32.totalorder %s144, %s145
      %p154 = scmp.eq.s32.totalorder %s29, 0
      %p155 = por %p153, %p154
      %p156 = scmp.ne.s32.totalorder %s144, %s145
      %p157 = scmp.eq.s32.totalorder %s30, 1
      %p158 = por %p156, %p157
      %p160 = scmp.ne.s32.totalorder %s145, %s159
      %p161 = scmp.eq.s32.totalorder %s30, 0
      %p162 = por %p160, %p161
      %s164 = sadd.s32 %s163, 1
      %p167 = scmp.eq.s32.totalorder %s24, 1
      %p168 = scmp.ne.s32.totalorder %s163, %s165
      %p169 = scmp.eq.s32.totalorder %s24, 0
      %p170 = por %p168, %p169
      %p171 = scmp.ne.s32.totalorder %s163, %s165
      %p172 = scmp.eq.s32.totalorder %s29, 1
      %p173 = por %p171, %p172
      %p174 = scmp.ne.s32.totalorder %s165, %s166
      %p175 = scmp.eq.s32.totalorder %s29, 0
      %p176 = por %p174, %p175
      %p177 = scmp.ne.s32.totalorder %s165, %s166
      %p178 = scmp.eq.s32.totalorder %s30, 1
      %p179 = por %p177, %p178
      %p181 = scmp.ne.s32.totalorder %s166, %s180
      %p182 = scmp.eq.s32.totalorder %s30, 0
      %p183 = por %p181, %p182
      %s185 = sadd.s32 %s184, 1
      %p188 = scmp.eq.s32.totalorder %s24, 1
      %p189 = scmp.ne.s32.totalorder %s184, %s186
      %p190 = scmp.eq.s32.totalorder %s24, 0
      %p191 = por %p189, %p190
      %p192 = scmp.ne.s32.totalorder %s184, %s186
      %p193 = scmp.eq.s32.totalorder %s29, 1
      %p194 = por %p192, %p193
      %p195 = scmp.ne.s32.totalorder %s186, %s187
      %p196 = scmp.eq.s32.totalorder %s29, 0
      %p197 = por %p195, %p196
      %p198 = scmp.ne.s32.totalorder %s186, %s187
      %p199 = scmp.eq.s32.totalorder %s30, 1
      %p200 = por %p198, %p199
      %p202 = scmp.ne.s32.totalorder %s187, %s201
      %p203 = scmp.eq.s32.totalorder %s30, 0
      %p204 = por %p202, %p203
      %s206 = sadd.s32 %s205, 1
      %p209 = scmp.eq.s32.totalorder %s24, 1
      %p210 = scmp.ne.s32.totalorder %s205, %s207
      %p211 = scmp.eq.s32.totalorder %s24, 0
      %p212 = por %p210, %p211
      %p213 = scmp.ne.s32.totalorder %s205, %s207
      %p214 = scmp.eq.s32.totalorder %s29, 1
      %p215 = por %p213, %p214
      %p216 = scmp.ne.s32.totalorder %s207, %s208
      %p217 = scmp.eq.s32.totalorder %s29, 0
      %p218 = por %p216, %p217
      %p219 = scmp.ne.s32.totalorder %s207, %s208
      %p220 = scmp.eq.s32.totalorder %s30, 1
      %p221 = por %p219, %p220
      %p223 = scmp.ne.s32.totalorder %s208, %s222
      %p224 = scmp.eq.s32.totalorder %s30, 0
      %p225 = por %p223, %p224
      %s227 = sadd.s32 %s226, 1
      %p230 = scmp.eq.s32.totalorder %s24, 1
      %p231 = scmp.ne.s32.totalorder %s226, %s228
      %p232 = scmp.eq.s32.totalorder %s24, 0
      %p233 = por %p231, %p232
      %p234 = scmp.ne.s32.totalorder %s226, %s228
      %p235 = scmp.eq.s32.totalorder %s29, 1
      %p236 = por %p234, %p235
      %p237 = scmp.ne.s32.totalorder %s228, %s229
      %p238 = scmp.eq.s32.totalorder %s29, 0
      %p239 = por %p237, %p238
      %p240 = scmp.ne.s32.totalorder %s228, %s229
      %p241 = scmp.eq.s32.totalorder %s30, 1
      %p242 = por %p240, %p241
      %p244 = scmp.ne.s32.totalorder %s229, %s243
      %p245 = scmp.eq.s32.totalorder %s30, 0
      %p246 = por %p244, %p245
      %s248 = sadd.s32 %s247, 1
      %p251 = scmp.eq.s32.totalorder %s24, 1
      %p252 = scmp.ne.s32.totalorder %s247, %s249
      %p253 = scmp.eq.s32.totalorder %s24, 0
      %p254 = por %p252, %p253
      %p255 = scmp.ne.s32.totalorder %s247, %s249
      %p256 = scmp.eq.s32.totalorder %s29, 1
      %p257 = por %p255, %p256
      %p258 = scmp.ne.s32.totalorder %s249, %s250
      %p259 = scmp.eq.s32.totalorder %s29, 0
      %p260 = por %p258, %p259
      %p261 = scmp.ne.s32.totalorder %s249, %s250
      %p262 = scmp.eq.s32.totalorder %s30, 1
      %p263 = por %p261, %p262
      %p265 = scmp.ne.s32.totalorder %s250, %s264
      %p266 = scmp.eq.s32.totalorder %s30, 0
      %p267 = por %p265, %p266
      %s269 = sadd.s32 %s268, 1
      %p272 = scmp.eq.s32.totalorder %s24, 1
      %p273 = scmp.ne.s32.totalorder %s268, %s270
      %p274 = scmp.eq.s32.totalorder %s24, 0
      %p275 = por %p273, %p274
      %p276 = scmp.ne.s32.totalorder %s268, %s270
      %p277 = scmp.eq.s32.totalorder %s29, 1
      %p278 = por %p276, %p277
      %p279 = scmp.ne.s32.totalorder %s270, %s271
      %p280 = scmp.eq.s32.totalorder %s29, 0
      %p281 = por %p279, %p280
      %p282 = scmp.ne.s32.totalorder %s270, %s271
      %p283 = scmp.eq.s32.totalorder %s30, 1
      %p284 = por %p282, %p283
      %p286 = scmp.ne.s32.totalorder %s271, %s285
      %p287 = scmp.eq.s32.totalorder %s30, 0
      %p288 = por %p286, %p287
      %s290 = sadd.s32 %s289, 1
      %p293 = scmp.eq.s32.totalorder %s24, 1
      %p294 = scmp.ne.s32.totalorder %s289, %s291
      %p295 = scmp.eq.s32.totalorder %s24, 0
      %p296 = por %p294, %p295
      %p297 = scmp.ne.s32.totalorder %s289, %s291
      %p298 = scmp.eq.s32.totalorder %s29, 1
      %p299 = por %p297, %p298
      %p300 = scmp.ne.s32.totalorder %s291, %s292
      %p301 = scmp.eq.s32.totalorder %s29, 0
      %p302 = por %p300, %p301
      %p303 = scmp.ne.s32.totalorder %s291, %s292
      %p304 = scmp.eq.s32.totalorder %s30, 1
      %p305 = por %p303, %p304
      %p307 = scmp.ne.s32.totalorder %s292, %s306
      %p308 = scmp.eq.s32.totalorder %s30, 0
      %p309 = por %p307, %p308
      %s311 = sadd.s32 %s310, 1
      %p314 = scmp.eq.s32.totalorder %s24, 1
      %p315 = scmp.ne.s32.totalorder %s310, %s312
      %p316 = scmp.eq.s32.totalorder %s24, 0
      %p317 = por %p315, %p316
      %p318 = scmp.ne.s32.totalorder %s310, %s312
      %p319 = scmp.eq.s32.totalorder %s29, 1
      %p320 = por %p318, %p319
      %p321 = scmp.ne.s32.totalorder %s312, %s313
      %p322 = scmp.eq.s32.totalorder %s29, 0
      %p323 = por %p321, %p322
      %p324 = scmp.ne.s32.totalorder %s312, %s313
      %p325 = scmp.eq.s32.totalorder %s30, 1
      %p326 = por %p324, %p325
      %p328 = scmp.ne.s32.totalorder %s313, %s327
      %p329 = scmp.eq.s32.totalorder %s30, 0
      %p330 = por %p328, %p329
      %s332 = sadd.s32 %s331, 1
      %p335 = scmp.eq.s32.totalorder %s24, 1
      %p336 = scmp.ne.s32.totalorder %s331, %s333
      %p337 = scmp.eq.s32.totalorder %s24, 0
      %p338 = por %p336, %p337
      %p339 = scmp.ne.s32.totalorder %s331, %s333
      %p340 = scmp.eq.s32.totalorder %s29, 1
      %p341 = por %p339, %p340
      %p342 = scmp.ne.s32.totalorder %s333, %s334
      %p343 = scmp.eq.s32.totalorder %s29, 0
      %p344 = por %p342, %p343
      %p345 = scmp.ne.s32.totalorder %s333, %s334
      %p346 = scmp.eq.s32.totalorder %s30, 1
      %p347 = por %p345, %p346
      %p349 = scmp.ne.s32.totalorder %s334, %s348
      %p350 = scmp.eq.s32.totalorder %s30, 0
      %p351 = por %p349, %p350
      %s352 = ssub.s32 %s24, %s31
      %p353 = scmp.eq.s32.totalorder %s352, 0
      %s355 = sadd.s32 %s354, 1
      %s356 = scalar_select %p353, %s354, %s355
      %p359 = pneg %p353
      %p360 = scmp.eq.s32.totalorder %s24, 1
      %p361 = por %p359, %p360
      %p362 = scmp.ne.s32.totalorder %s354, %s357
      %p363 = scmp.eq.s32.totalorder %s24, 0
      %p364 = por %p362, %p363
      %p365 = scmp.ne.s32.totalorder %s354, %s357
      %p366 = scmp.eq.s32.totalorder %s29, 1
      %p367 = por %p365, %p366
      %p368 = scmp.ne.s32.totalorder %s357, %s358
      %p369 = scmp.eq.s32.totalorder %s29, 0
      %p370 = por %p368, %p369
      %p371 = scmp.ne.s32.totalorder %s357, %s358
      %p372 = scmp.eq.s32.totalorder %s30, 1
      %p373 = por %p371, %p372
      %p375 = scmp.ne.s32.totalorder %s358, %s374
      %p376 = scmp.eq.s32.totalorder %s30, 0
      %p377 = por %p375, %p376
      %p378 = scmp.le.s32.totalorder 1, %s24
      %p379 = scmp.lt.s32.totalorder %s24, 3
      %p380 = pnand %p378, %p379
      %p381 = pneg %p380
      // Predicated region
      $region9: #{lenet_forward.1} parent=5 // pred_check
        _
      $region10: #{lenet_forward.1} parent=5 // pred_check_branch
        %383 = sbr.rel (%p380) target = $region12
      $region11: #{lenet_forward.1} parent=5 // pred_region
        %s384 = ssub.s32 %s24, 1
        // Predicated region
        $region13: #{lenet_forward.1} parent=11 // pred_check
          %p385 = pneg %p71
        $region14: #{lenet_forward.1} parent=11 // pred_check_branch
          %387 = sbr.rel (%p385) target = $region16
        $region15: #{lenet_forward.1} parent=11 // pred_region
          _
        $region16: #{lenet_forward.1} parent=11 // pred_fallthru
          _
        // Predicated region
        $region17: #{lenet_forward.1} parent=11 // pred_check
          %p388 = pneg %p92
        $region18: #{lenet_forward.1} parent=11 // pred_check_branch
          %390 = sbr.rel (%p388) target = $region20
        $region19: #{lenet_forward.1} parent=11 // pred_region
          _
        $region20: #{lenet_forward.1} parent=11 // pred_fallthru
          _
        // Predicated region
        $region21: #{lenet_forward.1} parent=11 // pred_check
          %p391 = pneg %p113
        $region22: #{lenet_forward.1} parent=11 // pred_check_branch
          %393 = sbr.rel (%p391) target = $region24
        $region23: #{lenet_forward.1} parent=11 // pred_region
          _
        $region24: #{lenet_forward.1} parent=11 // pred_fallthru
          _
        // Predicated region
        $region25: #{lenet_forward.1} parent=11 // pred_check
          %p394 = pneg %p134
        $region26: #{lenet_forward.1} parent=11 // pred_check_branch
          %396 = sbr.rel (%p394) target = $region28
        $region27: #{lenet_forward.1} parent=11 // pred_region
          _
        $region28: #{lenet_forward.1} parent=11 // pred_fallthru
          _
        // Predicated region
        $region29: #{lenet_forward.1} parent=11 // pred_check
          %p397 = pneg %p155
        $region30: #{lenet_forward.1} parent=11 // pred_check_branch
          %399 = sbr.rel (%p397) target = $region32
        $region31: #{lenet_forward.1} parent=11 // pred_region
          _
        $region32: #{lenet_forward.1} parent=11 // pred_fallthru
          _
        // Predicated region
        $region33: #{lenet_forward.1} parent=11 // pred_check
          %p400 = pneg %p176
        $region34: #{lenet_forward.1} parent=11 // pred_check_branch
          %402 = sbr.rel (%p400) target = $region36
        $region35: #{lenet_forward.1} parent=11 // pred_region
          _
        $region36: #{lenet_forward.1} parent=11 // pred_fallthru
          _
        // Predicated region
        $region37: #{lenet_forward.1} parent=11 // pred_check
          %p403 = pneg %p197
        $region38: #{lenet_forward.1} parent=11 // pred_check_branch
          %405 = sbr.rel (%p403) target = $region40
        $region39: #{lenet_forward.1} parent=11 // pred_region
          _
        $region40: #{lenet_forward.1} parent=11 // pred_fallthru
          _
        // Predicated region
        $region41: #{lenet_forward.1} parent=11 // pred_check
          %p406 = pneg %p218
        $region42: #{lenet_forward.1} parent=11 // pred_check_branch
          %408 = sbr.rel (%p406) target = $region44
        $region43: #{lenet_forward.1} parent=11 // pred_region
          _
        $region44: #{lenet_forward.1} parent=11 // pred_fallthru
          _
        // Predicated region
        $region45: #{lenet_forward.1} parent=11 // pred_check
          %p409 = pneg %p239
        $region46: #{lenet_forward.1} parent=11 // pred_check_branch
          %411 = sbr.rel (%p409) target = $region48
        $region47: #{lenet_forward.1} parent=11 // pred_region
          _
        $region48: #{lenet_forward.1} parent=11 // pred_fallthru
          _
        // Predicated region
        $region49: #{lenet_forward.1} parent=11 // pred_check
          %p412 = pneg %p260
        $region50: #{lenet_forward.1} parent=11 // pred_check_branch
          %414 = sbr.rel (%p412) target = $region52
        $region51: #{lenet_forward.1} parent=11 // pred_region
          _
        $region52: #{lenet_forward.1} parent=11 // pred_fallthru
          _
        // Predicated region
        $region53: #{lenet_forward.1} parent=11 // pred_check
          %p415 = pneg %p281
        $region54: #{lenet_forward.1} parent=11 // pred_check_branch
          %417 = sbr.rel (%p415) target = $region56
        $region55: #{lenet_forward.1} parent=11 // pred_region
          _
        $region56: #{lenet_forward.1} parent=11 // pred_fallthru
          _
        // Predicated region
        $region57: #{lenet_forward.1} parent=11 // pred_check
          %p418 = pneg %p302
        $region58: #{lenet_forward.1} parent=11 // pred_check_branch
          %420 = sbr.rel (%p418) target = $region60
        $region59: #{lenet_forward.1} parent=11 // pred_region
          _
        $region60: #{lenet_forward.1} parent=11 // pred_fallthru
          _
        // Predicated region
        $region61: #{lenet_forward.1} parent=11 // pred_check
          %p421 = pneg %p323
        $region62: #{lenet_forward.1} parent=11 // pred_check_branch
          %423 = sbr.rel (%p421) target = $region64
        $region63: #{lenet_forward.1} parent=11 // pred_region
          _
        $region64: #{lenet_forward.1} parent=11 // pred_fallthru
          _
        // Predicated region
        $region65: #{lenet_forward.1} parent=11 // pred_check
          %p424 = pneg %p344
        $region66: #{lenet_forward.1} parent=11 // pred_check_branch
          %426 = sbr.rel (%p424) target = $region68
        $region67: #{lenet_forward.1} parent=11 // pred_region
          _
        $region68: #{lenet_forward.1} parent=11 // pred_fallthru
          _
      $region12: #{lenet_forward.1} parent=5 // pred_fallthru
        _
      %p427 = scmp.lt.s32.totalorder %s24, 2
      // Predicated region
      $region69: #{lenet_forward.1} parent=5 // pred_check
        %p428 = pneg %p427
      $region70: #{lenet_forward.1} parent=5 // pred_check_branch
        %430 = sbr.rel (%p428) target = $region72
      $region71: #{lenet_forward.1} parent=5 // pred_region
        // Predicated region
        $region73: #{lenet_forward.1} parent=71 // pred_check
          %p431 = pneg %p44
        $region74: #{lenet_forward.1} parent=71 // pred_check_branch
          %433 = sbr.rel (%p431) target = $region76
        $region75: #{lenet_forward.1} parent=71 // pred_region
          %p434 = scmp.lt.s32.totalorder %s24, 1
          %s435 = scalar_select %p434, %s24, 1
          %s436 = smul.addr %s435, 4
          %s437 = smul.addr %s436, 8
          %s438 = scalar_lea.vmem %s0, %s437
        $region76: #{lenet_forward.1} parent=71 // pred_fallthru
          _
      $region72: #{lenet_forward.1} parent=5 // pred_fallthru
        _
      %p439 = scmp.le.s32.totalorder 1, %s24
      %p440 = scmp.lt.s32.totalorder %s24, 3
      %p441 = pnand %p439, %p440
      %p442 = pneg %p441
      // Predicated region
      $region77: #{lenet_forward.1} parent=5 // pred_check
        _
      $region78: #{lenet_forward.1} parent=5 // pred_check_branch
        %444 = sbr.rel (%p441) target = $region80
      $region79: #{lenet_forward.1} parent=5 // pred_region
        %s445 = ssub.s32 %s24, 1
        %p446 = scmp.lt.s32.totalorder %s29, 1
        %s447 = scalar_select %p446, %s29, 1
        %s448 = smul.addr %s447, 4
        %s449 = smul.addr %s448, 8
        %s450 = scalar_lea.vmem %s0, %s449
        %p451 = pneg %p50
        %p452 = pneg %p47
        %p453 = pneg %p71
        %p454 = pneg %p68
        %p455 = pneg %p92
        %p456 = pneg %p89
        %p457 = pneg %p113
        %p458 = pneg %p110
        %p459 = pneg %p134
        %p460 = pneg %p131
        %p461 = pneg %p155
        %p462 = pneg %p152
        %p463 = pneg %p176
        %p464 = pneg %p173
        %p465 = pneg %p197
        %p466 = pneg %p194
        %p467 = pneg %p218
        %p468 = pneg %p215
        %p469 = pneg %p239
        %p470 = pneg %p236
        %p471 = pneg %p260
        %p472 = pneg %p257
        %p473 = pneg %p281
        %p474 = pneg %p278
        %p475 = pneg %p302
        %p476 = pneg %p299
        %p477 = pneg %p323
        %p478 = pneg %p320
        %p479 = pneg %p344
        %p480 = pneg %p341
        %p481 = pneg %p370
        %p482 = pneg %p367
        %s483 = sand.u32 %s357, 1
        %s484 = scalar_lea.sflag [#allocation5], %s483
        %s485 = sand.u32 %s357, 1
        %s486 = scalar_lea.vmem [#allocation4], %s485
        %p487 = scmp.lt.s32.totalorder %s29, 1
        %s488 = scalar_select %p487, %s29, 1
        %s489 = smul.addr %s488, 4
        %s490 = smul.addr %s489, 8
        %s491 = scalar_lea.vmem %s0, %s490
        %v492 = vld [vmem:[%s491] sm:$0xff]
        %v493 = vld [vmem:[%s491 + $0x8] sm:$0xff]
        %v494 = vld [vmem:[%s491 + $0x10] sm:$0xff]
        %v495 = vld [vmem:[%s491 + $0x18] sm:$0xf]
        %v496 = vld [vmem:[%s1] sm:$0xff]
        %v497 = vld [vmem:[%s1 + $0x8] sm:$0xff]
        %v498 = vld [vmem:[%s1 + $0x10] sm:$0xff]
        %v499 = vld [vmem:[%s1 + $0x18] sm:$0xff]
        %v500 = vld [vmem:[%s1 + $0x20] sm:$0xff]
        %v501 = vld [vmem:[%s1 + $0x28] sm:$0xff]
        %v502 = vld [vmem:[%s1 + $0x30] sm:$0xff]
        %v503 = vld [vmem:[%s1 + $0x38] sm:$0xff]
        %v504 = vld [vmem:[%s491 + $0x1] sm:$0xff]
        %v505 = vld [vmem:[%s491 + $0x9] sm:$0xff]
        %v506 = vld [vmem:[%s491 + $0x11] sm:$0xff]
        %v507 = vld [vmem:[%s491 + $0x19] sm:$0xf]
        %s508 = scalar_lea.vmem %s1, 64
        %v509 = vld [vmem:[%s508] sm:$0xff]
        %v510 = vld [vmem:[%s508 + $0x8] sm:$0xff]
        %v511 = vld [vmem:[%s508 + $0x10] sm:$0xff]
        %v512 = vld [vmem:[%s508 + $0x18] sm:$0xff]
        %v513 = vld [vmem:[%s508 + $0x20] sm:$0xff]
        %v514 = vld [vmem:[%s508 + $0x28] sm:$0xff]
        %v515 = vld [vmem:[%s508 + $0x30] sm:$0xff]
        %v516 = vld [vmem:[%s508 + $0x38] sm:$0xff]
        %vm517 = vcmask 261120
        %v519 = vsel %vm517, %v504, 0
        %v522 = vsel %vm517, %v505, 0
        %v525 = vsel %vm517, %v506, 0
        %v528 = vsel %vm517, %v507, 0
        %530 = vmatprep.subr.mxu0 0.0
        %531 = vmatpush1.msra.mxu0 0.0
        %532 = vmatprep.subr.mxu0 0.0
        %533 = vmatpush1.msra.mxu0 0.0
        %534 = vmatprep.subr.mxu0 0.0
        %535 = vmatpush1.msra.mxu0 0.0
        %536 = vmatprep.subr.mxu0 0.0
        %537 = vmatpush1.msra.mxu0 0.0
        %538 = vmatprep.subr.mxu0 0.0
        %539 = vmatpush1.msra.mxu0 0.0
        %540 = vmatprep.subr.mxu0 0.0
        %541 = vmatpush1.msra.mxu0 0.0
        %542 = vmatprep.subr.mxu0 0.0
        %543 = vmatpush1.msra.mxu0 0.0
        %544 = vmatprep.subr.mxu0 0.0
        %545 = vmatpush1.msra.mxu0 0.0
        %546 = vmatprep.subr.mxu0 0.0
        %547 = vmatpush1.msra.mxu0 0.0
        %548 = vmatprep.subr.mxu0 0.0
        %549 = vmatpush1.msra.mxu0 0.0
        %550 = vmatprep.subr.mxu0 0.0
        %551 = vmatpush1.msra.mxu0 0.0
        %552 = vmatprep.subr.mxu0 0.0
        %553 = vmatpush1.msra.mxu0 0.0
        %554 = vmatprep.subr.mxu0 %v516
        %555 = vmatpush1.msra.mxu0 %v515
        %556 = vmatprep.subr.mxu0 %v514
        %557 = vmatpush1.msra.mxu0 %v513
        %558 = vmatprep.subr.mxu0 %v512
        %559 = vmatpush1.msra.mxu0 %v511
        %560 = vmatprep.subr.mxu0 %v510
        %561 = vmatpush1.msra.mxu0 %v509
        %562 = vmatprep.subr.mxu0 0.0
        %563 = vmatpush2.msra.mxu0 0.0
        %564 = vmatprep.subr.mxu0 0.0
        %565 = vmatpush2.msra.mxu0 0.0
        %566 = vmatprep.subr.mxu0 0.0
        %567 = vmatpush2.msra.mxu0 0.0
        %568 = vmatprep.subr.mxu0 0.0
        %569 = vmatpush2.msra.mxu0 0.0
        %570 = vmatprep.subr.mxu0 0.0
        %571 = vmatpush2.msra.mxu0 0.0
        %572 = vmatprep.subr.mxu0 0.0
        %573 = vmatpush2.msra.mxu0 0.0
        %574 = vmatprep.subr.mxu0 0.0
        %575 = vmatpush2.msra.mxu0 0.0
        %576 = vmatprep.subr.mxu0 0.0
        %577 = vmatpush2.msra.mxu0 0.0
        %578 = vmatprep.subr.mxu0 0.0
        %579 = vmatpush2.msra.mxu0 0.0
        %580 = vmatprep.subr.mxu0 0.0
        %581 = vmatpush2.msra.mxu0 0.0
        %582 = vmatprep.subr.mxu0 0.0
        %583 = vmatpush2.msra.mxu0 0.0
        %584 = vmatprep.subr.mxu0 0.0
        %585 = vmatpush2.msra.mxu0 0.0
        %586 = vmatprep.subr.mxu0 0.0
        %587 = vmatpush2.msra.mxu0 0.0
        %588 = vmatprep.subr.mxu0 0.0
        %589 = vmatpush2.msra.mxu0 0.0
        %590 = vmatprep.subr.mxu0 0.0
        %591 = vmatpush2.msra.mxu0 0.0
        %592 = vmatprep.subr.mxu0 0.0
        %593 = vmatpush2.msra.mxu0 0.0
        %594 = vmatprep.mubr.f32.mxu0 0.0
        %595 = vmatmul.mubr.f32.gmra.mxu0 %v519
        %v596 = vpop.f32.mrf.mxu0
        %v597 = vadd.f32 0.0, %v596
        %v598 = vpop.f32.mrf.mxu0
        %v599 = vadd.f32 0.0, %v598
        %600 = vmatprep.mubr.f32.mxu0 0.0
        %601 = vmatmul.mubr.f32.gmra.mxu0 %v522
        %v602 = vpop.f32.mrf.mxu0
        %v603 = vadd.f32 0.0, %v602
        %v604 = vpop.f32.mrf.mxu0
        %v605 = vadd.f32 0.0, %v604
        %606 = vmatprep.mubr.f32.mxu0 0.0
        %607 = vmatmul.mubr.f32.gmra.mxu0 %v525
        %v608 = vpop.f32.mrf.mxu0
        %v609 = vadd.f32 0.0, %v608
        %v610 = vpop.f32.mrf.mxu0
        %v611 = vadd.f32 0.0, %v610
        %612 = vmatprep.mubr.f32.mxu0 0.0
        %613 = vmatmul.mubr.f32.gmra.mxu0 %v528
        %v614 = vpop.f32.mrf.mxu0
        %v615 = vadd.f32 0.0, %v614
        %v616 = vpop.f32.mrf.mxu0
        %v617 = vadd.f32 0.0, %v616
        %618 = vdwg.mxu0
        %v620 = vsel %vm517, %v492, 0
        %v623 = vsel %vm517, %v493, 0
        %v626 = vsel %vm517, %v494, 0
        %v629 = vsel %vm517, %v495, 0
        %631 = vmatprep.subr.mxu0 0.0
        %632 = vmatpush1.msra.mxu0 0.0
        %633 = vmatprep.subr.mxu0 0.0
        %634 = vmatpush1.msra.mxu0 0.0
        %635 = vmatprep.subr.mxu0 0.0
        %636 = vmatpush1.msra.mxu0 0.0
        %637 = vmatprep.subr.mxu0 0.0
        %638 = vmatpush1.msra.mxu0 0.0
        %639 = vmatprep.subr.mxu0 0.0
        %640 = vmatpush1.msra.mxu0 0.0
        %641 = vmatprep.subr.mxu0 0.0
        %642 = vmatpush1.msra.mxu0 0.0
        %643 = vmatprep.subr.mxu0 0.0
        %644 = vmatpush1.msra.mxu0 0.0
        %645 = vmatprep.subr.mxu0 0.0
        %646 = vmatpush1.msra.mxu0 0.0
        %647 = vmatprep.subr.mxu0 0.0
        %648 = vmatpush1.msra.mxu0 0.0
        %649 = vmatprep.subr.mxu0 0.0
        %650 = vmatpush1.msra.mxu0 0.0
        %651 = vmatprep.subr.mxu0 0.0
        %652 = vmatpush1.msra.mxu0 0.0
        %653 = vmatprep.subr.mxu0 0.0
        %654 = vmatpush1.msra.mxu0 0.0
        %655 = vmatprep.subr.mxu0 %v503
        %656 = vmatpush1.msra.mxu0 %v502
        %657 = vmatprep.subr.mxu0 %v501
        %658 = vmatpush1.msra.mxu0 %v500
        %659 = vmatprep.subr.mxu0 %v499
        %660 = vmatpush1.msra.mxu0 %v498
        %661 = vmatprep.subr.mxu0 %v497
        %662 = vmatpush1.msra.mxu0 %v496
        %663 = vmatprep.subr.mxu0 0.0
        %664 = vmatpush2.msra.mxu0 0.0
        %665 = vmatprep.subr.mxu0 0.0
        %666 = vmatpush2.msra.mxu0 0.0
        %667 = vmatprep.subr.mxu0 0.0
        %668 = vmatpush2.msra.mxu0 0.0
        %669 = vmatprep.subr.mxu0 0.0
        %670 = vmatpush2.msra.mxu0 0.0
        %671 = vmatprep.subr.mxu0 0.0
        %672 = vmatpush2.msra.mxu0 0.0
        %673 = vmatprep.subr.mxu0 0.0
        %674 = vmatpush2.msra.mxu0 0.0
        %675 = vmatprep.subr.mxu0 0.0
        %676 = vmatpush2.msra.mxu0 0.0
        %677 = vmatprep.subr.mxu0 0.0
        %678 = vmatpush2.msra.mxu0 0.0
        %679 = vmatprep.subr.mxu0 0.0
        %680 = vmatpush2.msra.mxu0 0.0
        %681 = vmatprep.subr.mxu0 0.0
        %682 = vmatpush2.msra.mxu0 0.0
        %683 = vmatprep.subr.mxu0 0.0
        %684 = vmatpush2.msra.mxu0 0.0
        %685 = vmatprep.subr.mxu0 0.0
        %686 = vmatpush2.msra.mxu0 0.0
        %687 = vmatprep.subr.mxu0 0.0
        %688 = vmatpush2.msra.mxu0 0.0
        %689 = vmatprep.subr.mxu0 0.0
        %690 = vmatpush2.msra.mxu0 0.0
        %691 = vmatprep.subr.mxu0 0.0
        %692 = vmatpush2.msra.mxu0 0.0
        %693 = vmatprep.subr.mxu0 0.0
        %694 = vmatpush2.msra.mxu0 0.0
        %695 = vmatprep.mubr.f32.mxu0 0.0
        %696 = vmatmul.mubr.f32.gmra.mxu0 %v620
        %v697 = vpop.f32.mrf.mxu0
        %v698 = vadd.f32 %v597, %v697
        %v699 = vpop.f32.mrf.mxu0
        %v700 = vadd.f32 %v599, %v699
        %701 = vmatprep.mubr.f32.mxu0 0.0
        %702 = vmatmul.mubr.f32.gmra.mxu0 %v623
        %v703 = vpop.f32.mrf.mxu0
        %v704 = vadd.f32 %v603, %v703
        %v705 = vpop.f32.mrf.mxu0
        %v706 = vadd.f32 %v605, %v705
        %707 = vmatprep.mubr.f32.mxu0 0.0
        %708 = vmatmul.mubr.f32.gmra.mxu0 %v626
        %v709 = vpop.f32.mrf.mxu0
        %v710 = vadd.f32 %v609, %v709
        %v711 = vpop.f32.mrf.mxu0
        %v712 = vadd.f32 %v611, %v711
        %713 = vmatprep.mubr.f32.mxu0 0.0
        %714 = vmatmul.mubr.f32.gmra.mxu0 %v629
        %v715 = vpop.f32.mrf.mxu0
        %v716 = vadd.f32 %v615, %v715
        %v717 = vpop.f32.mrf.mxu0
        %v718 = vadd.f32 %v617, %v717
        %719 = vdwg.mxu0
        %v720 = vld [vmem:[%s491 + $0x2] sm:$0xff]
        %v721 = vld [vmem:[%s491 + $0xa] sm:$0xff]
        %v722 = vld [vmem:[%s491 + $0x12] sm:$0xff]
        %v723 = vld [vmem:[%s491 + $0x1a] sm:$0xf]
        %s724 = scalar_lea.vmem %s1, 128
        %v725 = vld [vmem:[%s724] sm:$0xff]
        %v726 = vld [vmem:[%s724 + $0x8] sm:$0xff]
        %v727 = vld [vmem:[%s724 + $0x10] sm:$0xff]
        %v728 = vld [vmem:[%s724 + $0x18] sm:$0xff]
        %v729 = vld [vmem:[%s724 + $0x20] sm:$0xff]
        %v730 = vld [vmem:[%s724 + $0x28] sm:$0xff]
        %v731 = vld [vmem:[%s724 + $0x30] sm:$0xff]
        %v732 = vld [vmem:[%s724 + $0x38] sm:$0xff]
        %v734 = vsel %vm517, %v720, 0
        %v737 = vsel %vm517, %v721, 0
        %v740 = vsel %vm517, %v722, 0
        %v743 = vsel %vm517, %v723, 0
        %745 = vmatprep.subr.mxu0 0.0
        %746 = vmatpush1.msra.mxu0 0.0
        %747 = vmatprep.subr.mxu0 0.0
        %748 = vmatpush1.msra.mxu0 0.0
        %749 = vmatprep.subr.mxu0 0.0
        %750 = vmatpush1.msra.mxu0 0.0
        %751 = vmatprep.subr.mxu0 0.0
        %752 = vmatpush1.msra.mxu0 0.0
        %753 = vmatprep.subr.mxu0 0.0
        %754 = vmatpush1.msra.mxu0 0.0
        %755 = vmatprep.subr.mxu0 0.0
        %756 = vmatpush1.msra.mxu0 0.0
        %757 = vmatprep.subr.mxu0 0.0
        %758 = vmatpush1.msra.mxu0 0.0
        %759 = vmatprep.subr.mxu0 0.0
        %760 = vmatpush1.msra.mxu0 0.0
        %761 = vmatprep.subr.mxu0 0.0
        %762 = vmatpush1.msra.mxu0 0.0
        %763 = vmatprep.subr.mxu0 0.0
        %764 = vmatpush1.msra.mxu0 0.0
        %765 = vmatprep.subr.mxu0 0.0
        %766 = vmatpush1.msra.mxu0 0.0
        %767 = vmatprep.subr.mxu0 0.0
        %768 = vmatpush1.msra.mxu0 0.0
        %769 = vmatprep.subr.mxu0 %v732
        %770 = vmatpush1.msra.mxu0 %v731
        %771 = vmatprep.subr.mxu0 %v730
        %772 = vmatpush1.msra.mxu0 %v729
        %773 = vmatprep.subr.mxu0 %v728
        %774 = vmatpush1.msra.mxu0 %v727
        %775 = vmatprep.subr.mxu0 %v726
        %776 = vmatpush1.msra.mxu0 %v725
        %777 = vmatprep.subr.mxu0 0.0
        %778 = vmatpush2.msra.mxu0 0.0
        %779 = vmatprep.subr.mxu0 0.0
        %780 = vmatpush2.msra.mxu0 0.0
        %781 = vmatprep.subr.mxu0 0.0
        %782 = vmatpush2.msra.mxu0 0.0
        %783 = vmatprep.subr.mxu0 0.0
        %784 = vmatpush2.msra.mxu0 0.0
        %785 = vmatprep.subr.mxu0 0.0
        %786 = vmatpush2.msra.mxu0 0.0
        %787 = vmatprep.subr.mxu0 0.0
        %788 = vmatpush2.msra.mxu0 0.0
        %789 = vmatprep.subr.mxu0 0.0
        %790 = vmatpush2.msra.mxu0 0.0
        %791 = vmatprep.subr.mxu0 0.0
        %792 = vmatpush2.msra.mxu0 0.0
        %793 = vmatprep.subr.mxu0 0.0
        %794 = vmatpush2.msra.mxu0 0.0
        %795 = vmatprep.subr.mxu0 0.0
        %796 = vmatpush2.msra.mxu0 0.0
        %797 = vmatprep.subr.mxu0 0.0
        %798 = vmatpush2.msra.mxu0 0.0
        %799 = vmatprep.subr.mxu0 0.0
        %800 = vmatpush2.msra.mxu0 0.0
        %801 = vmatprep.subr.mxu0 0.0
        %802 = vmatpush2.msra.mxu0 0.0
        %803 = vmatprep.subr.mxu0 0.0
        %804 = vmatpush2.msra.mxu0 0.0
        %805 = vmatprep.subr.mxu0 0.0
        %806 = vmatpush2.msra.mxu0 0.0
        %807 = vmatprep.subr.mxu0 0.0
        %808 = vmatpush2.msra.mxu0 0.0
        %809 = vmatprep.mubr.f32.mxu0 0.0
        %810 = vmatmul.mubr.f32.gmra.mxu0 %v734
        %v811 = vpop.f32.mrf.mxu0
        %v812 = vadd.f32 0.0, %v811
        %v813 = vpop.f32.mrf.mxu0
        %v814 = vadd.f32 0.0, %v813
        %815 = vmatprep.mubr.f32.mxu0 0.0
        %816 = vmatmul.mubr.f32.gmra.mxu0 %v737
        %v817 = vpop.f32.mrf.mxu0
        %v818 = vadd.f32 0.0, %v817
        %v819 = vpop.f32.mrf.mxu0
        %v820 = vadd.f32 0.0, %v819
        %821 = vmatprep.mubr.f32.mxu0 0.0
        %822 = vmatmul.mubr.f32.gmra.mxu0 %v740
        %v823 = vpop.f32.mrf.mxu0
        %v824 = vadd.f32 0.0, %v823
        %v825 = vpop.f32.mrf.mxu0
        %v826 = vadd.f32 0.0, %v825
        %827 = vmatprep.mubr.f32.mxu0 0.0
        %828 = vmatmul.mubr.f32.gmra.mxu0 %v743
        %v829 = vpop.f32.mrf.mxu0
        %v830 = vadd.f32 0.0, %v829
        %v831 = vpop.f32.mrf.mxu0
        %v832 = vadd.f32 0.0, %v831
        %833 = vdwg.mxu0
        %v834 = vadd.f32 %v698, %v812
        %v835 = vadd.f32 %v700, %v814
        %v836 = vadd.f32 %v704, %v818
        %v837 = vadd.f32 %v706, %v820
        %v838 = vadd.f32 %v710, %v824
        %v839 = vadd.f32 %v712, %v826
        %v840 = vadd.f32 %v716, %v830
        %v841 = vadd.f32 %v718, %v832
        %v842 = vld [vmem:[%s491 + $0x3] sm:$0xff]
        %v843 = vld [vmem:[%s491 + $0xb] sm:$0xff]
        %v844 = vld [vmem:[%s491 + $0x13] sm:$0xff]
        %v845 = vld [vmem:[%s491 + $0x1b] sm:$0xf]
        %s846 = scalar_lea.vmem %s1, 192
        %v847 = vld [vmem:[%s846] sm:$0xff]
        %v848 = vld [vmem:[%s846 + $0x8] sm:$0xff]
        %v849 = vld [vmem:[%s846 + $0x10] sm:$0xff]
        %v850 = vld [vmem:[%s846 + $0x18] sm:$0xff]
        %v851 = vld [vmem:[%s846 + $0x20] sm:$0xff]
        %v852 = vld [vmem:[%s846 + $0x28] sm:$0xff]
        %v853 = vld [vmem:[%s846 + $0x30] sm:$0xff]
        %v854 = vld [vmem:[%s846 + $0x38] sm:$0xff]
        %v856 = vsel %vm517, %v842, 0
        %v859 = vsel %vm517, %v843, 0
        %v862 = vsel %vm517, %v844, 0
        %v865 = vsel %vm517, %v845, 0
        %867 = vmatprep.subr.mxu0 0.0
        %868 = vmatpush1.msra.mxu0 0.0
        %869 = vmatprep.subr.mxu0 0.0
        %870 = vmatpush1.msra.mxu0 0.0
        %871 = vmatprep.subr.mxu0 0.0
        %872 = vmatpush1.msra.mxu0 0.0
        %873 = vmatprep.subr.mxu0 0.0
        %874 = vmatpush1.msra.mxu0 0.0
        %875 = vmatprep.subr.mxu0 0.0
        %876 = vmatpush1.msra.mxu0 0.0
        %877 = vmatprep.subr.mxu0 0.0
        %878 = vmatpush1.msra.mxu0 0.0
        %879 = vmatprep.subr.mxu0 0.0
        %880 = vmatpush1.msra.mxu0 0.0
        %881 = vmatprep.subr.mxu0 0.0
        %882 = vmatpush1.msra.mxu0 0.0
        %883 = vmatprep.subr.mxu0 0.0
        %884 = vmatpush1.msra.mxu0 0.0
        %885 = vmatprep.subr.mxu0 0.0
        %886 = vmatpush1.msra.mxu0 0.0
        %887 = vmatprep.subr.mxu0 0.0
        %888 = vmatpush1.msra.mxu0 0.0
        %889 = vmatprep.subr.mxu0 0.0
        %890 = vmatpush1.msra.mxu0 0.0
        %891 = vmatprep.subr.mxu0 %v854
        %892 = vmatpush1.msra.mxu0 %v853
        %893 = vmatprep.subr.mxu0 %v852
        %894 = vmatpush1.msra.mxu0 %v851
        %895 = vmatprep.subr.mxu0 %v850
        %896 = vmatpush1.msra.mxu0 %v849
        %897 = vmatprep.subr.mxu0 %v848
        %898 = vmatpush1.msra.mxu0 %v847
        %899 = vmatprep.subr.mxu0 0.0
        %900 = vmatpush2.msra.mxu0 0.0
        %901 = vmatprep.subr.mxu0 0.0
        %902 = vmatpush2.msra.mxu0 0.0
        %903 = vmatprep.subr.mxu0 0.0
        %904 = vmatpush2.msra.mxu0 0.0
        %905 = vmatprep.subr.mxu0 0.0
        %906 = vmatpush2.msra.mxu0 0.0
        %907 = vmatprep.subr.mxu0 0.0
        %908 = vmatpush2.msra.mxu0 0.0
        %909 = vmatprep.subr.mxu0 0.0
        %910 = vmatpush2.msra.mxu0 0.0
        %911 = vmatprep.subr.mxu0 0.0
        %912 = vmatpush2.msra.mxu0 0.0
        %913 = vmatprep.subr.mxu0 0.0
        %914 = vmatpush2.msra.mxu0 0.0
        %915 = vmatprep.subr.mxu0 0.0
        %916 = vmatpush2.msra.mxu0 0.0
        %917 = vmatprep.subr.mxu0 0.0
        %918 = vmatpush2.msra.mxu0 0.0
        %919 = vmatprep.subr.mxu0 0.0
        %920 = vmatpush2.msra.mxu0 0.0
        %921 = vmatprep.subr.mxu0 0.0
        %922 = vmatpush2.msra.mxu0 0.0
        %923 = vmatprep.subr.mxu0 0.0
        %924 = vmatpush2.msra.mxu0 0.0
        %925 = vmatprep.subr.mxu0 0.0
        %926 = vmatpush2.msra.mxu0 0.0
        %927 = vmatprep.subr.mxu0 0.0
        %928 = vmatpush2.msra.mxu0 0.0
        %929 = vmatprep.subr.mxu0 0.0
        %930 = vmatpush2.msra.mxu0 0.0
        %931 = vmatprep.mubr.f32.mxu0 0.0
        %932 = vmatmul.mubr.f32.gmra.mxu0 %v856
        %v933 = vpop.f32.mrf.mxu0
        %v934 = vadd.f32 0.0, %v933
        %v935 = vpop.f32.mrf.mxu0
        %v936 = vadd.f32 0.0, %v935
        %937 = vmatprep.mubr.f32.mxu0 0.0
        %938 = vmatmul.mubr.f32.gmra.mxu0 %v859
        %v939 = vpop.f32.mrf.mxu0
        %v940 = vadd.f32 0.0, %v939
        %v941 = vpop.f32.mrf.mxu0
        %v942 = vadd.f32 0.0, %v941
        %943 = vmatprep.mubr.f32.mxu0 0.0
        %944 = vmatmul.mubr.f32.gmra.mxu0 %v862
        %v945 = vpop.f32.mrf.mxu0
        %v946 = vadd.f32 0.0, %v945
        %v947 = vpop.f32.mrf.mxu0
        %v948 = vadd.f32 0.0, %v947
        %949 = vmatprep.mubr.f32.mxu0 0.0
        %950 = vmatmul.mubr.f32.gmra.mxu0 %v865
        %v951 = vpop.f32.mrf.mxu0
        %v952 = vadd.f32 0.0, %v951
        %v953 = vpop.f32.mrf.mxu0
        %v954 = vadd.f32 0.0, %v953
        %955 = vdwg.mxu0
        %v956 = vadd.f32 %v834, %v934
        %v957 = vadd.f32 %v835, %v936
        %v958 = vadd.f32 %v836, %v940
        %v959 = vadd.f32 %v837, %v942
        %v960 = vadd.f32 %v838, %v946
        %v961 = vadd.f32 %v839, %v948
        %v962 = vadd.f32 %v840, %v952
        %v963 = vadd.f32 %v841, %v954
        %v964 = vld [vmem:[%s491 + $0x4] sm:$0xff]
        %v965 = vld [vmem:[%s491 + $0xc] sm:$0xff]
        %v966 = vld [vmem:[%s491 + $0x14] sm:$0xff]
        %v967 = vld [vmem:[%s491 + $0x1c] sm:$0xf]
        %s968 = scalar_lea.vmem %s1, 256
        %v969 = vld [vmem:[%s968] sm:$0xff]
        %v970 = vld [vmem:[%s968 + $0x8] sm:$0xff]
        %v971 = vld [vmem:[%s968 + $0x10] sm:$0xff]
        %v972 = vld [vmem:[%s968 + $0x18] sm:$0xff]
        %v973 = vld [vmem:[%s968 + $0x20] sm:$0xff]
        %v974 = vld [vmem:[%s968 + $0x28] sm:$0xff]
        %v975 = vld [vmem:[%s968 + $0x30] sm:$0xff]
        %v976 = vld [vmem:[%s968 + $0x38] sm:$0xff]
        %v978 = vsel %vm517, %v964, 0
        %v981 = vsel %vm517, %v965, 0
        %v984 = vsel %vm517, %v966, 0
        %v987 = vsel %vm517, %v967, 0
        %989 = vmatprep.subr.mxu0 0.0
        %990 = vmatpush1.msra.mxu0 0.0
        %991 = vmatprep.subr.mxu0 0.0
        %992 = vmatpush1.msra.mxu0 0.0
        %993 = vmatprep.subr.mxu0 0.0
        %994 = vmatpush1.msra.mxu0 0.0
        %995 = vmatprep.subr.mxu0 0.0
        %996 = vmatpush1.msra.mxu0 0.0
        %997 = vmatprep.subr.mxu0 0.0
        %998 = vmatpush1.msra.mxu0 0.0
        %999 = vmatprep.subr.mxu0 0.0
        %1000 = vmatpush1.msra.mxu0 0.0
        %1001 = vmatprep.subr.mxu0 0.0
        %1002 = vmatpush1.msra.mxu0 0.0
        %1003 = vmatprep.subr.mxu0 0.0
        %1004 = vmatpush1.msra.mxu0 0.0
        %1005 = vmatprep.subr.mxu0 0.0
        %1006 = vmatpush1.msra.mxu0 0.0
        %1007 = vmatprep.subr.mxu0 0.0
        %1008 = vmatpush1.msra.mxu0 0.0
        %1009 = vmatprep.subr.mxu0 0.0
        %1010 = vmatpush1.msra.mxu0 0.0
        %1011 = vmatprep.subr.mxu0 0.0
        %1012 = vmatpush1.msra.mxu0 0.0
        %1013 = vmatprep.subr.mxu0 %v976
        %1014 = vmatpush1.msra.mxu0 %v975
        %1015 = vmatprep.subr.mxu0 %v974
        %1016 = vmatpush1.msra.mxu0 %v973
        %1017 = vmatprep.subr.mxu0 %v972
        %1018 = vmatpush1.msra.mxu0 %v971
        %1019 = vmatprep.subr.mxu0 %v970
        %1020 = vmatpush1.msra.mxu0 %v969
        %1021 = vmatprep.subr.mxu0 0.0
        %1022 = vmatpush2.msra.mxu0 0.0
        %1023 = vmatprep.subr.mxu0 0.0
        %1024 = vmatpush2.msra.mxu0 0.0
        %1025 = vmatprep.subr.mxu0 0.0
        %1026 = vmatpush2.msra.mxu0 0.0
        %1027 = vmatprep.subr.mxu0 0.0
        %1028 = vmatpush2.msra.mxu0 0.0
        %1029 = vmatprep.subr.mxu0 0.0
        %1030 = vmatpush2.msra.mxu0 0.0
        %1031 = vmatprep.subr.mxu0 0.0
        %1032 = vmatpush2.msra.mxu0 0.0
        %1033 = vmatprep.subr.mxu0 0.0
        %1034 = vmatpush2.msra.mxu0 0.0
        %1035 = vmatprep.subr.mxu0 0.0
        %1036 = vmatpush2.msra.mxu0 0.0
        %1037 = vmatprep.subr.mxu0 0.0
        %1038 = vmatpush2.msra.mxu0 0.0
        %1039 = vmatprep.subr.mxu0 0.0
        %1040 = vmatpush2.msra.mxu0 0.0
        %1041 = vmatprep.subr.mxu0 0.0
        %1042 = vmatpush2.msra.mxu0 0.0
        %1043 = vmatprep.subr.mxu0 0.0
        %1044 = vmatpush2.msra.mxu0 0.0
        %1045 = vmatprep.subr.mxu0 0.0
        %1046 = vmatpush2.msra.mxu0 0.0
        %1047 = vmatprep.subr.mxu0 0.0
        %1048 = vmatpush2.msra.mxu0 0.0
        %1049 = vmatprep.subr.mxu0 0.0
        %1050 = vmatpush2.msra.mxu0 0.0
        %1051 = vmatprep.subr.mxu0 0.0
        %1052 = vmatpush2.msra.mxu0 0.0
        %1053 = vmatprep.mubr.f32.mxu0 0.0
        %1054 = vmatmul.mubr.f32.gmra.mxu0 %v978
        %v1055 = vpop.f32.mrf.mxu0
        %v1056 = vadd.f32 0.0, %v1055
        %v1057 = vpop.f32.mrf.mxu0
        %v1058 = vadd.f32 0.0, %v1057
        %1059 = vmatprep.mubr.f32.mxu0 0.0
        %1060 = vmatmul.mubr.f32.gmra.mxu0 %v981
        %v1061 = vpop.f32.mrf.mxu0
        %v1062 = vadd.f32 0.0, %v1061
        %v1063 = vpop.f32.mrf.mxu0
        %v1064 = vadd.f32 0.0, %v1063
        %1065 = vmatprep.mubr.f32.mxu0 0.0
        %1066 = vmatmul.mubr.f32.gmra.mxu0 %v984
        %v1067 = vpop.f32.mrf.mxu0
        %v1068 = vadd.f32 0.0, %v1067
        %v1069 = vpop.f32.mrf.mxu0
        %v1070 = vadd.f32 0.0, %v1069
        %1071 = vmatprep.mubr.f32.mxu0 0.0
        %1072 = vmatmul.mubr.f32.gmra.mxu0 %v987
        %v1073 = vpop.f32.mrf.mxu0
        %v1074 = vadd.f32 0.0, %v1073
        %v1075 = vpop.f32.mrf.mxu0
        %v1076 = vadd.f32 0.0, %v1075
        %1077 = vdwg.mxu0
        %v1078 = vadd.f32 %v956, %v1056
        %v1079 = vadd.f32 %v957, %v1058
        %v1080 = vadd.f32 %v958, %v1062
        %v1081 = vadd.f32 %v959, %v1064
        %v1082 = vadd.f32 %v960, %v1068
        %v1083 = vadd.f32 %v961, %v1070
        %v1084 = vadd.f32 %v962, %v1074
        %v1085 = vadd.f32 %v963, %v1076
        %v1086 = vld [vmem:[%s2] sm:$0x3]
        %v1088 = vlaneseq
        %v1089 = vshrl.u32 %v1088, 7
        %v1090 = vsub.s32 0, %v1089
        %v1091 = vrot.slane %v1086, %v1090
        %v1092 = vlaneseq
        %v1093 = vshrl.u32 %v1092, 7
        %v1094 = vsub.s32 1, %v1093
        %v1095 = vrot.slane %v1086, %v1094
        %v1098 = vadd.f32 %v1078, %v1091
        %v1099 = vadd.f32 %v1079, %v1095
        %v1100 = vadd.f32 %v1080, %v1091
        %v1101 = vadd.f32 %v1081, %v1095
        %v1102 = vadd.f32 %v1082, %v1091
        %v1103 = vadd.f32 %v1083, %v1095
        %v1104 = vadd.f32 %v1084, %v1091
        %v1105 = vadd.f32 %v1085, %v1095
        %v1106 = vmax.f32 %v1098, 0.0
        %v1107 = vmax.f32 %v1099, 0.0
        %v1108 = vmax.f32 %v1100, 0.0
        %v1109 = vmax.f32 %v1101, 0.0
        %v1110 = vmax.f32 %v1102, 0.0
        %v1111 = vmax.f32 %v1103, 0.0
        %v1112 = vmax.f32 %v1104, 0.0
        %v1113 = vmax.f32 %v1105, 0.0
        %v1114 = vld [vmem:[%s4] sm:$0xff]
        %v1115 = vld [vmem:[%s4 + $0x8] sm:$0x3f]
        %v1116 = vld [vmem:[%s3] sm:$0xff]
        %v1117 = vld [vmem:[%s3 + $0x8] sm:$0xff]
        %v1118 = vld [vmem:[%s3 + $0x10] sm:$0xff]
        %v1119 = vld [vmem:[%s3 + $0x18] sm:$0xff]
        %v1120 = vld [vmem:[%s3 + $0x20] sm:$0xff]
        %v1121 = vld [vmem:[%s3 + $0x28] sm:$0xff]
        %v1122 = vld [vmem:[%s3 + $0x30] sm:$0xff]
        %v1123 = vld [vmem:[%s3 + $0x38] sm:$0xff]
        %v1124 = vld [vmem:[%s3 + $0x40] sm:$0xff]
        %v1125 = vld [vmem:[%s3 + $0x48] sm:$0xff]
        %v1126 = vld [vmem:[%s3 + $0x50] sm:$0xff]
        %v1127 = vld [vmem:[%s3 + $0x58] sm:$0xff]
        %v1128 = vld [vmem:[%s3 + $0x60] sm:$0xff]
        %v1129 = vld [vmem:[%s3 + $0x68] sm:$0xff]
        %v1130 = vld [vmem:[%s3 + $0x70] sm:$0xff]
        %v1131 = vld [vmem:[%s3 + $0x78] sm:$0xff]
        %v1132 = vld [vmem:[%s3 + $0x80] sm:$0xff]
        %v1133 = vld [vmem:[%s3 + $0x88] sm:$0xff]
        %v1134 = vld [vmem:[%s3 + $0x90] sm:$0xff]
        %v1135 = vld [vmem:[%s3 + $0x98] sm:$0xff]
        %v1136 = vld [vmem:[%s3 + $0xa0] sm:$0xff]
        %vm1137 = vcmask 326656
        %v1139 = vsel %vm1137, %v1107, 0
        %v1142 = vsel %vm1137, %v1109, 0
        %v1145 = vsel %vm1137, %v1111, 0
        %v1148 = vsel %vm1137, %v1113, 0
        %1150 = vmatprep.subr.mxu0 0.0
        %1151 = vmatpush1.msra.mxu0 %v1131
        %1152 = vmatprep.subr.mxu0 0.0
        %1153 = vmatpush1.msra.mxu0 %v1130
        %1154 = vmatprep.subr.mxu0 0.0
        %1155 = vmatpush1.msra.mxu0 %v1129
        %1156 = vmatprep.subr.mxu0 0.0
        %1157 = vmatpush1.msra.mxu0 %v1128
        %1158 = vmatprep.subr.mxu0 0.0
        %1159 = vmatpush1.msra.mxu0 %v1127
        %1160 = vmatprep.subr.mxu0 0.0
        %1161 = vmatpush1.msra.mxu0 %v1126
        %1162 = vmatprep.subr.mxu0 0.0
        %1163 = vmatpush1.msra.mxu0 %v1125
        %1164 = vmatprep.subr.mxu0 0.0
        %1165 = vmatpush1.msra.mxu0 %v1124
        %1166 = vmatprep.subr.mxu0 0.0
        %1167 = vmatpush1.msra.mxu0 %v1123
        %1168 = vmatprep.subr.mxu0 0.0
        %1169 = vmatpush1.msra.mxu0 %v1122
        %1170 = vmatprep.subr.mxu0 0.0
        %1171 = vmatpush1.msra.mxu0 %v1121
        %1172 = vmatprep.subr.mxu0 0.0
        %1173 = vmatpush1.msra.mxu0 %v1120
        %1174 = vmatprep.subr.mxu0 0.0
        %1175 = vmatpush1.msra.mxu0 %v1119
        %1176 = vmatprep.subr.mxu0 0.0
        %1177 = vmatpush1.msra.mxu0 %v1118
        %1178 = vmatprep.subr.mxu0 0.0
        %1179 = vmatpush1.msra.mxu0 %v1117
        %1180 = vmatprep.subr.mxu0 0.0
        %1181 = vmatpush1.msra.mxu0 %v1116
        %1182 = vmatprep.subr.mxu0 0.0
        %1183 = vmatpush2.msra.mxu0 0.0
        %1184 = vmatprep.subr.mxu0 0.0
        %1185 = vmatpush2.msra.mxu0 0.0
        %1186 = vmatprep.subr.mxu0 0.0
        %1187 = vmatpush2.msra.mxu0 0.0
        %1188 = vmatprep.subr.mxu0 0.0
        %1189 = vmatpush2.msra.mxu0 0.0
        %1190 = vmatprep.subr.mxu0 0.0
        %1191 = vmatpush2.msra.mxu0 0.0
        %1192 = vmatprep.subr.mxu0 0.0
        %1193 = vmatpush2.msra.mxu0 0.0
        %1194 = vmatprep.subr.mxu0 0.0
        %1195 = vmatpush2.msra.mxu0 0.0
        %1196 = vmatprep.subr.mxu0 0.0
        %1197 = vmatpush2.msra.mxu0 0.0
        %1198 = vmatprep.subr.mxu0 0.0
        %1199 = vmatpush2.msra.mxu0 0.0
        %1200 = vmatprep.subr.mxu0 0.0
        %1201 = vmatpush2.msra.mxu0 0.0
        %1202 = vmatprep.subr.mxu0 0.0
        %1203 = vmatpush2.msra.mxu0 0.0
        %1204 = vmatprep.subr.mxu0 0.0
        %1205 = vmatpush2.msra.mxu0 %v1136
        %1206 = vmatprep.subr.mxu0 0.0
        %1207 = vmatpush2.msra.mxu0 %v1135
        %1208 = vmatprep.subr.mxu0 0.0
        %1209 = vmatpush2.msra.mxu0 %v1134
        %1210 = vmatprep.subr.mxu0 0.0
        %1211 = vmatpush2.msra.mxu0 %v1133
        %1212 = vmatprep.subr.mxu0 0.0
        %1213 = vmatpush2.msra.mxu0 %v1132
        %1214 = vmatprep.mubr.f32.mxu0 %v1139
        %1215 = vmatmul.mubr.f32.gmra.mxu0 %v1106
        %v1216 = vpop.f32.mrf.mxu0
        %v1217 = vadd.f32 0.0, %v1216
        %v1218 = vpop.f32.mrf.mxu0
        %1219 = vmatprep.mubr.f32.mxu0 %v1142
        %1220 = vmatmul.mubr.f32.gmra.mxu0 %v1108
        %v1221 = vpop.f32.mrf.mxu0
        %v1222 = vadd.f32 0.0, %v1221
        %v1223 = vpop.f32.mrf.mxu0
        %1224 = vmatprep.mubr.f32.mxu0 %v1145
        %1225 = vmatmul.mubr.f32.gmra.mxu0 %v1110
        %v1226 = vpop.f32.mrf.mxu0
        %v1227 = vadd.f32 0.0, %v1226
        %v1228 = vpop.f32.mrf.mxu0
        %1229 = vmatprep.mubr.f32.mxu0 %v1148
        %1230 = vmatmul.mubr.f32.gmra.mxu0 %v1112
        %v1231 = vpop.f32.mrf.mxu0
        %v1232 = vadd.f32 0.0, %v1231
        %v1233 = vpop.f32.mrf.mxu0
        %1234 = vdwg.mxu0
        %vm1235 = vcmask 228352
        %v1237 = vsel %vm1235, %v1114, 0
        %v1240 = vsel %vm1235, %v1115, 0
        %vm1242 = vcmask 1043456
        %v1244 = vsel %vm1242, %v1232, 0
        %1246 = vmatprep.subr.mxu0 0.0
        %1247 = vmatpush1.msra.mxu0 0.0
        %1248 = vmatprep.subr.mxu0 0.0
        %1249 = vmatpush1.msra.mxu0 0.0
        %1250 = vmatprep.subr.mxu0 0.0
        %1251 = vmatpush1.msra.mxu0 0.0
        %1252 = vmatprep.subr.mxu0 0.0
        %1253 = vmatpush1.msra.mxu0 0.0
        %1254 = vmatprep.subr.mxu0 0.0
        %1255 = vmatpush1.msra.mxu0 0.0
        %1256 = vmatprep.subr.mxu0 0.0
        %1257 = vmatpush1.msra.mxu0 0.0
        %1258 = vmatprep.subr.mxu0 0.0
        %1259 = vmatpush1.msra.mxu0 0.0
        %1260 = vmatprep.subr.mxu0 0.0
        %1261 = vmatpush1.msra.mxu0 0.0
        %1262 = vmatprep.subr.mxu0 0.0
        %1263 = vmatpush1.msra.mxu0 0.0
        %1264 = vmatprep.subr.mxu0 0.0
        %1265 = vmatpush1.msra.mxu0 0.0
        %1266 = vmatprep.subr.mxu0 0.0
        %1267 = vmatpush1.msra.mxu0 0.0
        %1268 = vmatprep.subr.mxu0 0.0
        %1269 = vmatpush1.msra.mxu0 0.0
        %1270 = vmatprep.subr.mxu0 0.0
        %1271 = vmatpush1.msra.mxu0 %v1244
        %1272 = vmatprep.subr.mxu0 0.0
        %1273 = vmatpush1.msra.mxu0 %v1227
        %1274 = vmatprep.subr.mxu0 0.0
        %1275 = vmatpush1.msra.mxu0 %v1222
        %1276 = vmatprep.subr.mxu0 0.0
        %1277 = vmatpush1.msra.mxu0 %v1217
        %1278 = vmatprep.subr.mxu0 0.0
        %1279 = vmatpush2.msra.mxu0 0.0
        %1280 = vmatprep.subr.mxu0 0.0
        %1281 = vmatpush2.msra.mxu0 0.0
        %1282 = vmatprep.subr.mxu0 0.0
        %1283 = vmatpush2.msra.mxu0 0.0
        %1284 = vmatprep.subr.mxu0 0.0
        %1285 = vmatpush2.msra.mxu0 0.0
        %1286 = vmatprep.subr.mxu0 0.0
        %1287 = vmatpush2.msra.mxu0 0.0
        %1288 = vmatprep.subr.mxu0 0.0
        %1289 = vmatpush2.msra.mxu0 0.0
        %1290 = vmatprep.subr.mxu0 0.0
        %1291 = vmatpush2.msra.mxu0 0.0
        %1292 = vmatprep.subr.mxu0 0.0
        %1293 = vmatpush2.msra.mxu0 0.0
        %1294 = vmatprep.subr.mxu0 0.0
        %1295 = vmatpush2.msra.mxu0 0.0
        %1296 = vmatprep.subr.mxu0 0.0
        %1297 = vmatpush2.msra.mxu0 0.0
        %1298 = vmatprep.subr.mxu0 0.0
        %1299 = vmatpush2.msra.mxu0 0.0
        %1300 = vmatprep.subr.mxu0 0.0
        %1301 = vmatpush2.msra.mxu0 0.0
        %1302 = vmatprep.subr.mxu0 0.0
        %1303 = vmatpush2.msra.mxu0 0.0
        %1304 = vmatprep.subr.mxu0 0.0
        %1305 = vmatpush2.msra.mxu0 0.0
        %1306 = vmatprep.subr.mxu0 0.0
        %1307 = vmatpush2.msra.mxu0 0.0
        %1308 = vmatprep.subr.mxu0 0.0
        %1309 = vmatpush2.msra.mxu0 0.0
        %1310 = vmatprep.mubr.f32.mxu0 0.0
        %1311 = vmatmul.mubr.f32.gmra.mxu0 %v1237
        %v1312 = vpop.f32.mrf.mxu0
        %v1313 = vadd.f32 0.0, %v1312
        %v1314 = vpop.f32.mrf.mxu0
        %1315 = vmatprep.mubr.f32.mxu0 0.0
        %1316 = vmatmul.mubr.f32.gmra.mxu0 %v1240
        %v1317 = vpop.f32.mrf.mxu0
        %v1318 = vadd.f32 0.0, %v1317
        %v1319 = vpop.f32.mrf.mxu0
        %1320 = vdwg.mxu0
        %vm1321 = vcmask 687104
        %1322 = vst.msk [vmem:[#allocation2] sm:$0xff] %vm1321, %v1313
        %vm1323 = vcmask 685056
        %1324 = vst.msk [vmem:[#allocation2 + $0x8] sm:$0x3f] %vm1323, %v1318
        %v1325 = vld [vmem:[#allocation2] sm:$0xff]
        %v1326 = vld [vmem:[#allocation2 + $0x8] sm:$0x3]
        %v1327 = vld [vmem:[%s5] sm:$0xff]
        %v1328 = vld [vmem:[%s5 + $0x8] sm:$0xff]
        %v1329 = vld [vmem:[%s5 + $0x10] sm:$0xff]
        %v1330 = vld [vmem:[%s5 + $0x18] sm:$0xff]
        %v1331 = vld [vmem:[%s5 + $0x20] sm:$0xff]
        %v1332 = vld [vmem:[%s5 + $0x28] sm:$0xff]
        %v1333 = vld [vmem:[%s5 + $0x30] sm:$0xff]
        %v1334 = vld [vmem:[%s5 + $0x38] sm:$0xff]
        %v1335 = vld [vmem:[%s5 + $0x40] sm:$0xff]
        %v1336 = vld [vmem:[%s5 + $0x48] sm:$0xff]
        %v1337 = vld [vmem:[%s5 + $0x50] sm:$0xff]
        %v1338 = vld [vmem:[%s5 + $0x58] sm:$0xff]
        %v1339 = vld [vmem:[%s5 + $0x60] sm:$0xff]
        %v1340 = vld [vmem:[%s5 + $0x68] sm:$0xff]
        %v1341 = vld [vmem:[%s5 + $0x70] sm:$0xff]
        %v1342 = vld [vmem:[%s5 + $0x78] sm:$0xff]
        %v1343 = vld [vmem:[%s5 + $0x80] sm:$0xff]
        %v1344 = vld [vmem:[%s5 + $0x88] sm:$0xff]
        %v1345 = vld [vmem:[%s5 + $0x90] sm:$0xff]
        %v1346 = vld [vmem:[%s5 + $0x98] sm:$0xff]
        %v1347 = vld [vmem:[%s5 + $0xa0] sm:$0xf]
        %v1348 = vld [vmem:[%s5 + $0xa8] sm:$0xf]
        %v1349 = vld [vmem:[#allocation2 + $0x1] sm:$0xff]
        %v1350 = vld [vmem:[#allocation2 + $0x9] sm:$0x3]
        %s1351 = scalar_lea.vmem %s5, 176
        %v1352 = vld [vmem:[%s1351] sm:$0xff]
        %v1353 = vld [vmem:[%s1351 + $0x8] sm:$0xff]
        %v1354 = vld [vmem:[%s1351 + $0x10] sm:$0xff]
        %v1355 = vld [vmem:[%s1351 + $0x18] sm:$0xff]
        %v1356 = vld [vmem:[%s1351 + $0x20] sm:$0xff]
        %v1357 = vld [vmem:[%s1351 + $0x28] sm:$0xff]
        %v1358 = vld [vmem:[%s1351 + $0x30] sm:$0xff]
        %v1359 = vld [vmem:[%s1351 + $0x38] sm:$0xff]
        %v1360 = vld [vmem:[%s1351 + $0x40] sm:$0xff]
        %v1361 = vld [vmem:[%s1351 + $0x48] sm:$0xff]
        %v1362 = vld [vmem:[%s1351 + $0x50] sm:$0xff]
        %v1363 = vld [vmem:[%s1351 + $0x58] sm:$0xff]
        %v1364 = vld [vmem:[%s1351 + $0x60] sm:$0xff]
        %v1365 = vld [vmem:[%s1351 + $0x68] sm:$0xff]
        %v1366 = vld [vmem:[%s1351 + $0x70] sm:$0xff]
        %v1367 = vld [vmem:[%s1351 + $0x78] sm:$0xff]
        %v1368 = vld [vmem:[%s1351 + $0x80] sm:$0xff]
        %v1369 = vld [vmem:[%s1351 + $0x88] sm:$0xff]
        %v1370 = vld [vmem:[%s1351 + $0x90] sm:$0xff]
        %v1371 = vld [vmem:[%s1351 + $0x98] sm:$0xff]
        %v1372 = vld [vmem:[%s1351 + $0xa0] sm:$0xf]
        %v1373 = vld [vmem:[%s1351 + $0xa8] sm:$0xf]
        %v1375 = vsel %vm1321, %v1349, 0
        %v1378 = vsel %vm1321, %v1350, 0
        %v1381 = vsel %vm1242, %v1372, 0
        %v1384 = vsel %vm1242, %v1373, 0
        %1386 = vmatprep.subr.mxu0 0.0
        %1387 = vmatpush1.msra.mxu0 0.0
        %1388 = vmatprep.subr.mxu0 0.0
        %1389 = vmatpush1.msra.mxu0 0.0
        %1390 = vmatprep.subr.mxu0 0.0
        %1391 = vmatpush1.msra.mxu0 0.0
        %1392 = vmatprep.subr.mxu0 0.0
        %1393 = vmatpush1.msra.mxu0 0.0
        %1394 = vmatprep.subr.mxu0 0.0
        %1395 = vmatpush1.msra.mxu0 0.0
        %1396 = vmatprep.subr.mxu0 %v1384
        %1397 = vmatpush1.msra.mxu0 %v1381
        %1398 = vmatprep.subr.mxu0 %v1371
        %1399 = vmatpush1.msra.mxu0 %v1370
        %1400 = vmatprep.subr.mxu0 %v1369
        %1401 = vmatpush1.msra.mxu0 %v1368
        %1402 = vmatprep.subr.mxu0 %v1367
        %1403 = vmatpush1.msra.mxu0 %v1366
        %1404 = vmatprep.subr.mxu0 %v1365
        %1405 = vmatpush1.msra.mxu0 %v1364
        %1406 = vmatprep.subr.mxu0 %v1363
        %1407 = vmatpush1.msra.mxu0 %v1362
        %1408 = vmatprep.subr.mxu0 %v1361
        %1409 = vmatpush1.msra.mxu0 %v1360
        %1410 = vmatprep.subr.mxu0 %v1359
        %1411 = vmatpush1.msra.mxu0 %v1358
        %1412 = vmatprep.subr.mxu0 %v1357
        %1413 = vmatpush1.msra.mxu0 %v1356
        %1414 = vmatprep.subr.mxu0 %v1355
        %1415 = vmatpush1.msra.mxu0 %v1354
        %1416 = vmatprep.subr.mxu0 %v1353
        %1417 = vmatpush1.msra.mxu0 %v1352
        %1418 = vmatprep.subr.mxu0 0.0
        %1419 = vmatpush2.msra.mxu0 0.0
        %1420 = vmatprep.subr.mxu0 0.0
        %1421 = vmatpush2.msra.mxu0 0.0
        %1422 = vmatprep.subr.mxu0 0.0
        %1423 = vmatpush2.msra.mxu0 0.0
        %1424 = vmatprep.subr.mxu0 0.0
        %1425 = vmatpush2.msra.mxu0 0.0
        %1426 = vmatprep.subr.mxu0 0.0
        %1427 = vmatpush2.msra.mxu0 0.0
        %1428 = vmatprep.subr.mxu0 0.0
        %1429 = vmatpush2.msra.mxu0 0.0
        %1430 = vmatprep.subr.mxu0 0.0
        %1431 = vmatpush2.msra.mxu0 0.0
        %1432 = vmatprep.subr.mxu0 0.0
        %1433 = vmatpush2.msra.mxu0 0.0
        %1434 = vmatprep.subr.mxu0 0.0
        %1435 = vmatpush2.msra.mxu0 0.0
        %1436 = vmatprep.subr.mxu0 0.0
        %1437 = vmatpush2.msra.mxu0 0.0
        %1438 = vmatprep.subr.mxu0 0.0
        %1439 = vmatpush2.msra.mxu0 0.0
        %1440 = vmatprep.subr.mxu0 0.0
        %1441 = vmatpush2.msra.mxu0 0.0
        %1442 = vmatprep.subr.mxu0 0.0
        %1443 = vmatpush2.msra.mxu0 0.0
        %1444 = vmatprep.subr.mxu0 0.0
        %1445 = vmatpush2.msra.mxu0 0.0
        %1446 = vmatprep.subr.mxu0 0.0
        %1447 = vmatpush2.msra.mxu0 0.0
        %1448 = vmatprep.subr.mxu0 0.0
        %1449 = vmatpush2.msra.mxu0 0.0
        %1450 = vmatprep.mubr.f32.mxu0 0.0
        %1451 = vmatmul.mubr.f32.gmra.mxu0 %v1375
        %v1452 = vpop.f32.mrf.mxu0
        %v1453 = vadd.f32 0.0, %v1452
        %v1454 = vpop.f32.mrf.mxu0
        %v1455 = vadd.f32 0.0, %v1454
        %1456 = vmatprep.mubr.f32.mxu0 0.0
        %1457 = vmatmul.mubr.f32.gmra.mxu0 %v1378
        %v1458 = vpop.f32.mrf.mxu0
        %v1459 = vadd.f32 0.0, %v1458
        %v1460 = vpop.f32.mrf.mxu0
        %v1461 = vadd.f32 0.0, %v1460
        %1462 = vdwg.mxu0
        %v1464 = vsel %vm1321, %v1325, 0
        %v1467 = vsel %vm1321, %v1326, 0
        %v1470 = vsel %vm1242, %v1347, 0
        %v1473 = vsel %vm1242, %v1348, 0
        %1475 = vmatprep.subr.mxu0 0.0
        %1476 = vmatpush1.msra.mxu0 0.0
        %1477 = vmatprep.subr.mxu0 0.0
        %1478 = vmatpush1.msra.mxu0 0.0
        %1479 = vmatprep.subr.mxu0 0.0
        %1480 = vmatpush1.msra.mxu0 0.0
        %1481 = vmatprep.subr.mxu0 0.0
        %1482 = vmatpush1.msra.mxu0 0.0
        %1483 = vmatprep.subr.mxu0 0.0
        %1484 = vmatpush1.msra.mxu0 0.0
        %1485 = vmatprep.subr.mxu0 %v1473
        %1486 = vmatpush1.msra.mxu0 %v1470
        %1487 = vmatprep.subr.mxu0 %v1346
        %1488 = vmatpush1.msra.mxu0 %v1345
        %1489 = vmatprep.subr.mxu0 %v1344
        %1490 = vmatpush1.msra.mxu0 %v1343
        %1491 = vmatprep.subr.mxu0 %v1342
        %1492 = vmatpush1.msra.mxu0 %v1341
        %1493 = vmatprep.subr.mxu0 %v1340
        %1494 = vmatpush1.msra.mxu0 %v1339
        %1495 = vmatprep.subr.mxu0 %v1338
        %1496 = vmatpush1.msra.mxu0 %v1337
        %1497 = vmatprep.subr.mxu0 %v1336
        %1498 = vmatpush1.msra.mxu0 %v1335
        %1499 = vmatprep.subr.mxu0 %v1334
        %1500 = vmatpush1.msra.mxu0 %v1333
        %1501 = vmatprep.subr.mxu0 %v1332
        %1502 = vmatpush1.msra.mxu0 %v1331
        %1503 = vmatprep.subr.mxu0 %v1330
        %1504 = vmatpush1.msra.mxu0 %v1329
        %1505 = vmatprep.subr.mxu0 %v1328
        %1506 = vmatpush1.msra.mxu0 %v1327
        %1507 = vmatprep.subr.mxu0 0.0
        %1508 = vmatpush2.msra.mxu0 0.0
        %1509 = vmatprep.subr.mxu0 0.0
        %1510 = vmatpush2.msra.mxu0 0.0
        %1511 = vmatprep.subr.mxu0 0.0
        %1512 = vmatpush2.msra.mxu0 0.0
        %1513 = vmatprep.subr.mxu0 0.0
        %1514 = vmatpush2.msra.mxu0 0.0
        %1515 = vmatprep.subr.mxu0 0.0
        %1516 = vmatpush2.msra.mxu0 0.0
        %1517 = vmatprep.subr.mxu0 0.0
        %1518 = vmatpush2.msra.mxu0 0.0
        %1519 = vmatprep.subr.mxu0 0.0
        %1520 = vmatpush2.msra.mxu0 0.0
        %1521 = vmatprep.subr.mxu0 0.0
        %1522 = vmatpush2.msra.mxu0 0.0
        %1523 = vmatprep.subr.mxu0 0.0
        %1524 = vmatpush2.msra.mxu0 0.0
        %1525 = vmatprep.subr.mxu0 0.0
        %1526 = vmatpush2.msra.mxu0 0.0
        %1527 = vmatprep.subr.mxu0 0.0
        %1528 = vmatpush2.msra.mxu0 0.0
        %1529 = vmatprep.subr.mxu0 0.0
        %1530 = vmatpush2.msra.mxu0 0.0
        %1531 = vmatprep.subr.mxu0 0.0
        %1532 = vmatpush2.msra.mxu0 0.0
        %1533 = vmatprep.subr.mxu0 0.0
        %1534 = vmatpush2.msra.mxu0 0.0
        %1535 = vmatprep.subr.mxu0 0.0
        %1536 = vmatpush2.msra.mxu0 0.0
        %1537 = vmatprep.subr.mxu0 0.0
        %1538 = vmatpush2.msra.mxu0 0.0
        %1539 = vmatprep.mubr.f32.mxu0 0.0
        %1540 = vmatmul.mubr.f32.gmra.mxu0 %v1464
        %v1541 = vpop.f32.mrf.mxu0
        %v1542 = vadd.f32 %v1453, %v1541
        %v1543 = vpop.f32.mrf.mxu0
        %v1544 = vadd.f32 %v1455, %v1543
        %1545 = vmatprep.mubr.f32.mxu0 0.0
        %1546 = vmatmul.mubr.f32.gmra.mxu0 %v1467
        %v1547 = vpop.f32.mrf.mxu0
        %v1548 = vadd.f32 %v1459, %v1547
        %v1549 = vpop.f32.mrf.mxu0
        %v1550 = vadd.f32 %v1461, %v1549
        %1551 = vdwg.mxu0
        %v1552 = vld [vmem:[#allocation2 + $0x2] sm:$0xff]
        %v1553 = vld [vmem:[#allocation2 + $0xa] sm:$0x3]
        %s1554 = scalar_lea.vmem %s5, 352
        %v1555 = vld [vmem:[%s1554] sm:$0xff]
        %v1556 = vld [vmem:[%s1554 + $0x8] sm:$0xff]
        %v1557 = vld [vmem:[%s1554 + $0x10] sm:$0xff]
        %v1558 = vld [vmem:[%s1554 + $0x18] sm:$0xff]
        %v1559 = vld [vmem:[%s1554 + $0x20] sm:$0xff]
        %v1560 = vld [vmem:[%s1554 + $0x28] sm:$0xff]
        %v1561 = vld [vmem:[%s1554 + $0x30] sm:$0xff]
        %v1562 = vld [vmem:[%s1554 + $0x38] sm:$0xff]
        %v1563 = vld [vmem:[%s1554 + $0x40] sm:$0xff]
        %v1564 = vld [vmem:[%s1554 + $0x48] sm:$0xff]
        %v1565 = vld [vmem:[%s1554 + $0x50] sm:$0xff]
        %v1566 = vld [vmem:[%s1554 + $0x58] sm:$0xff]
        %v1567 = vld [vmem:[%s1554 + $0x60] sm:$0xff]
        %v1568 = vld [vmem:[%s1554 + $0x68] sm:$0xff]
        %v1569 = vld [vmem:[%s1554 + $0x70] sm:$0xff]
        %v1570 = vld [vmem:[%s1554 + $0x78] sm:$0xff]
        %v1571 = vld [vmem:[%s1554 + $0x80] sm:$0xff]
        %v1572 = vld [vmem:[%s1554 + $0x88] sm:$0xff]
        %v1573 = vld [vmem:[%s1554 + $0x90] sm:$0xff]
        %v1574 = vld [vmem:[%s1554 + $0x98] sm:$0xff]
        %v1575 = vld [vmem:[%s1554 + $0xa0] sm:$0xf]
        %v1576 = vld [vmem:[%s1554 + $0xa8] sm:$0xf]
        %v1578 = vsel %vm1321, %v1552, 0
        %v1581 = vsel %vm1321, %v1553, 0
        %v1584 = vsel %vm1242, %v1575, 0
        %v1587 = vsel %vm1242, %v1576, 0
        %1589 = vmatprep.subr.mxu0 0.0
        %1590 = vmatpush1.msra.mxu0 0.0
        %1591 = vmatprep.subr.mxu0 0.0
        %1592 = vmatpush1.msra.mxu0 0.0
        %1593 = vmatprep.subr.mxu0 0.0
        %1594 = vmatpush1.msra.mxu0 0.0
        %1595 = vmatprep.subr.mxu0 0.0
        %1596 = vmatpush1.msra.mxu0 0.0
        %1597 = vmatprep.subr.mxu0 0.0
        %1598 = vmatpush1.msra.mxu0 0.0
        %1599 = vmatprep.subr.mxu0 %v1587
        %1600 = vmatpush1.msra.mxu0 %v1584
        %1601 = vmatprep.subr.mxu0 %v1574
        %1602 = vmatpush1.msra.mxu0 %v1573
        %1603 = vmatprep.subr.mxu0 %v1572
        %1604 = vmatpush1.msra.mxu0 %v1571
        %1605 = vmatprep.subr.mxu0 %v1570
        %1606 = vmatpush1.msra.mxu0 %v1569
        %1607 = vmatprep.subr.mxu0 %v1568
        %1608 = vmatpush1.msra.mxu0 %v1567
        %1609 = vmatprep.subr.mxu0 %v1566
        %1610 = vmatpush1.msra.mxu0 %v1565
        %1611 = vmatprep.subr.mxu0 %v1564
        %1612 = vmatpush1.msra.mxu0 %v1563
        %1613 = vmatprep.subr.mxu0 %v1562
        %1614 = vmatpush1.msra.mxu0 %v1561
        %1615 = vmatprep.subr.mxu0 %v1560
        %1616 = vmatpush1.msra.mxu0 %v1559
        %1617 = vmatprep.subr.mxu0 %v1558
        %1618 = vmatpush1.msra.mxu0 %v1557
        %1619 = vmatprep.subr.mxu0 %v1556
        %1620 = vmatpush1.msra.mxu0 %v1555
        %1621 = vmatprep.subr.mxu0 0.0
        %1622 = vmatpush2.msra.mxu0 0.0
        %1623 = vmatprep.subr.mxu0 0.0
        %1624 = vmatpush2.msra.mxu0 0.0
        %1625 = vmatprep.subr.mxu0 0.0
        %1626 = vmatpush2.msra.mxu0 0.0
        %1627 = vmatprep.subr.mxu0 0.0
        %1628 = vmatpush2.msra.mxu0 0.0
        %1629 = vmatprep.subr.mxu0 0.0
        %1630 = vmatpush2.msra.mxu0 0.0
        %1631 = vmatprep.subr.mxu0 0.0
        %1632 = vmatpush2.msra.mxu0 0.0
        %1633 = vmatprep.subr.mxu0 0.0
        %1634 = vmatpush2.msra.mxu0 0.0
        %1635 = vmatprep.subr.mxu0 0.0
        %1636 = vmatpush2.msra.mxu0 0.0
        %1637 = vmatprep.subr.mxu0 0.0
        %1638 = vmatpush2.msra.mxu0 0.0
        %1639 = vmatprep.subr.mxu0 0.0
        %1640 = vmatpush2.msra.mxu0 0.0
        %1641 = vmatprep.subr.mxu0 0.0
        %1642 = vmatpush2.msra.mxu0 0.0
        %1643 = vmatprep.subr.mxu0 0.0
        %1644 = vmatpush2.msra.mxu0 0.0
        %1645 = vmatprep.subr.mxu0 0.0
        %1646 = vmatpush2.msra.mxu0 0.0
        %1647 = vmatprep.subr.mxu0 0.0
        %1648 = vmatpush2.msra.mxu0 0.0
        %1649 = vmatprep.subr.mxu0 0.0
        %1650 = vmatpush2.msra.mxu0 0.0
        %1651 = vmatprep.subr.mxu0 0.0
        %1652 = vmatpush2.msra.mxu0 0.0
        %1653 = vmatprep.mubr.f32.mxu0 0.0
        %1654 = vmatmul.mubr.f32.gmra.mxu0 %v1578
        %v1655 = vpop.f32.mrf.mxu0
        %v1656 = vadd.f32 0.0, %v1655
        %v1657 = vpop.f32.mrf.mxu0
        %v1658 = vadd.f32 0.0, %v1657
        %1659 = vmatprep.mubr.f32.mxu0 0.0
        %1660 = vmatmul.mubr.f32.gmra.mxu0 %v1581
        %v1661 = vpop.f32.mrf.mxu0
        %v1662 = vadd.f32 0.0, %v1661
        %v1663 = vpop.f32.mrf.mxu0
        %v1664 = vadd.f32 0.0, %v1663
        %1665 = vdwg.mxu0
        %v1666 = vadd.f32 %v1542, %v1656
        %v1667 = vadd.f32 %v1544, %v1658
        %v1668 = vadd.f32 %v1548, %v1662
        %v1669 = vadd.f32 %v1550, %v1664
        %v1670 = vld [vmem:[#allocation2 + $0x3] sm:$0xff]
        %v1671 = vld [vmem:[#allocation2 + $0xb] sm:$0x3]
        %s1672 = scalar_lea.vmem %s5, 528
        %v1673 = vld [vmem:[%s1672] sm:$0xff]
        %v1674 = vld [vmem:[%s1672 + $0x8] sm:$0xff]
        %v1675 = vld [vmem:[%s1672 + $0x10] sm:$0xff]
        %v1676 = vld [vmem:[%s1672 + $0x18] sm:$0xff]
        %v1677 = vld [vmem:[%s1672 + $0x20] sm:$0xff]
        %v1678 = vld [vmem:[%s1672 + $0x28] sm:$0xff]
        %v1679 = vld [vmem:[%s1672 + $0x30] sm:$0xff]
        %v1680 = vld [vmem:[%s1672 + $0x38] sm:$0xff]
        %v1681 = vld [vmem:[%s1672 + $0x40] sm:$0xff]
        %v1682 = vld [vmem:[%s1672 + $0x48] sm:$0xff]
        %v1683 = vld [vmem:[%s1672 + $0x50] sm:$0xff]
        %v1684 = vld [vmem:[%s1672 + $0x58] sm:$0xff]
        %v1685 = vld [vmem:[%s1672 + $0x60] sm:$0xff]
        %v1686 = vld [vmem:[%s1672 + $0x68] sm:$0xff]
        %v1687 = vld [vmem:[%s1672 + $0x70] sm:$0xff]
        %v1688 = vld [vmem:[%s1672 + $0x78] sm:$0xff]
        %v1689 = vld [vmem:[%s1672 + $0x80] sm:$0xff]
        %v1690 = vld [vmem:[%s1672 + $0x88] sm:$0xff]
        %v1691 = vld [vmem:[%s1672 + $0x90] sm:$0xff]
        %v1692 = vld [vmem:[%s1672 + $0x98] sm:$0xff]
        %v1693 = vld [vmem:[%s1672 + $0xa0] sm:$0xf]
        %v1694 = vld [vmem:[%s1672 + $0xa8] sm:$0xf]
        %v1696 = vsel %vm1321, %v1670, 0
        %v1699 = vsel %vm1321, %v1671, 0
        %v1702 = vsel %vm1242, %v1693, 0
        %v1705 = vsel %vm1242, %v1694, 0
        %1707 = vmatprep.subr.mxu0 0.0
        %1708 = vmatpush1.msra.mxu0 0.0
        %1709 = vmatprep.subr.mxu0 0.0
        %1710 = vmatpush1.msra.mxu0 0.0
        %1711 = vmatprep.subr.mxu0 0.0
        %1712 = vmatpush1.msra.mxu0 0.0
        %1713 = vmatprep.subr.mxu0 0.0
        %1714 = vmatpush1.msra.mxu0 0.0
        %1715 = vmatprep.subr.mxu0 0.0
        %1716 = vmatpush1.msra.mxu0 0.0
        %1717 = vmatprep.subr.mxu0 %v1705
        %1718 = vmatpush1.msra.mxu0 %v1702
        %1719 = vmatprep.subr.mxu0 %v1692
        %1720 = vmatpush1.msra.mxu0 %v1691
        %1721 = vmatprep.subr.mxu0 %v1690
        %1722 = vmatpush1.msra.mxu0 %v1689
        %1723 = vmatprep.subr.mxu0 %v1688
        %1724 = vmatpush1.msra.mxu0 %v1687
        %1725 = vmatprep.subr.mxu0 %v1686
        %1726 = vmatpush1.msra.mxu0 %v1685
        %1727 = vmatprep.subr.mxu0 %v1684
        %1728 = vmatpush1.msra.mxu0 %v1683
        %1729 = vmatprep.subr.mxu0 %v1682
        %1730 = vmatpush1.msra.mxu0 %v1681
        %1731 = vmatprep.subr.mxu0 %v1680
        %1732 = vmatpush1.msra.mxu0 %v1679
        %1733 = vmatprep.subr.mxu0 %v1678
        %1734 = vmatpush1.msra.mxu0 %v1677
        %1735 = vmatprep.subr.mxu0 %v1676
        %1736 = vmatpush1.msra.mxu0 %v1675
        %1737 = vmatprep.subr.mxu0 %v1674
        %1738 = vmatpush1.msra.mxu0 %v1673
        %1739 = vmatprep.subr.mxu0 0.0
        %1740 = vmatpush2.msra.mxu0 0.0
        %1741 = vmatprep.subr.mxu0 0.0
        %1742 = vmatpush2.msra.mxu0 0.0
        %1743 = vmatprep.subr.mxu0 0.0
        %1744 = vmatpush2.msra.mxu0 0.0
        %1745 = vmatprep.subr.mxu0 0.0
        %1746 = vmatpush2.msra.mxu0 0.0
        %1747 = vmatprep.subr.mxu0 0.0
        %1748 = vmatpush2.msra.mxu0 0.0
        %1749 = vmatprep.subr.mxu0 0.0
        %1750 = vmatpush2.msra.mxu0 0.0
        %1751 = vmatprep.subr.mxu0 0.0
        %1752 = vmatpush2.msra.mxu0 0.0
        %1753 = vmatprep.subr.mxu0 0.0
        %1754 = vmatpush2.msra.mxu0 0.0
        %1755 = vmatprep.subr.mxu0 0.0
        %1756 = vmatpush2.msra.mxu0 0.0
        %1757 = vmatprep.subr.mxu0 0.0
        %1758 = vmatpush2.msra.mxu0 0.0
        %1759 = vmatprep.subr.mxu0 0.0
        %1760 = vmatpush2.msra.mxu0 0.0
        %1761 = vmatprep.subr.mxu0 0.0
        %1762 = vmatpush2.msra.mxu0 0.0
        %1763 = vmatprep.subr.mxu0 0.0
        %1764 = vmatpush2.msra.mxu0 0.0
        %1765 = vmatprep.subr.mxu0 0.0
        %1766 = vmatpush2.msra.mxu0 0.0
        %1767 = vmatprep.subr.mxu0 0.0
        %1768 = vmatpush2.msra.mxu0 0.0
        %1769 = vmatprep.subr.mxu0 0.0
        %1770 = vmatpush2.msra.mxu0 0.0
        %1771 = vmatprep.mubr.f32.mxu0 0.0
        %1772 = vmatmul.mubr.f32.gmra.mxu0 %v1696
        %v1773 = vpop.f32.mrf.mxu0
        %v1774 = vadd.f32 0.0, %v1773
        %v1775 = vpop.f32.mrf.mxu0
        %v1776 = vadd.f32 0.0, %v1775
        %1777 = vmatprep.mubr.f32.mxu0 0.0
        %1778 = vmatmul.mubr.f32.gmra.mxu0 %v1699
        %v1779 = vpop.f32.mrf.mxu0
        %v1780 = vadd.f32 0.0, %v1779
        %v1781 = vpop.f32.mrf.mxu0
        %v1782 = vadd.f32 0.0, %v1781
        %1783 = vdwg.mxu0
        %v1784 = vadd.f32 %v1666, %v1774
        %v1785 = vadd.f32 %v1667, %v1776
        %v1786 = vadd.f32 %v1668, %v1780
        %v1787 = vadd.f32 %v1669, %v1782
        %v1788 = vld [vmem:[#allocation2 + $0x4] sm:$0xff]
        %v1789 = vld [vmem:[#allocation2 + $0xc] sm:$0x3]
        %s1790 = scalar_lea.vmem %s5, 704
        %v1791 = vld [vmem:[%s1790] sm:$0xff]
        %v1792 = vld [vmem:[%s1790 + $0x8] sm:$0xff]
        %v1793 = vld [vmem:[%s1790 + $0x10] sm:$0xff]
        %v1794 = vld [vmem:[%s1790 + $0x18] sm:$0xff]
        %v1795 = vld [vmem:[%s1790 + $0x20] sm:$0xff]
        %v1796 = vld [vmem:[%s1790 + $0x28] sm:$0xff]
        %v1797 = vld [vmem:[%s1790 + $0x30] sm:$0xff]
        %v1798 = vld [vmem:[%s1790 + $0x38] sm:$0xff]
        %v1799 = vld [vmem:[%s1790 + $0x40] sm:$0xff]
        %v1800 = vld [vmem:[%s1790 + $0x48] sm:$0xff]
        %v1801 = vld [vmem:[%s1790 + $0x50] sm:$0xff]
        %v1802 = vld [vmem:[%s1790 + $0x58] sm:$0xff]
        %v1803 = vld [vmem:[%s1790 + $0x60] sm:$0xff]
        %v1804 = vld [vmem:[%s1790 + $0x68] sm:$0xff]
        %v1805 = vld [vmem:[%s1790 + $0x70] sm:$0xff]
        %v1806 = vld [vmem:[%s1790 + $0x78] sm:$0xff]
        %v1807 = vld [vmem:[%s1790 + $0x80] sm:$0xff]
        %v1808 = vld [vmem:[%s1790 + $0x88] sm:$0xff]
        %v1809 = vld [vmem:[%s1790 + $0x90] sm:$0xff]
        %v1810 = vld [vmem:[%s1790 + $0x98] sm:$0xff]
        %v1811 = vld [vmem:[%s1790 + $0xa0] sm:$0xf]
        %v1812 = vld [vmem:[%s1790 + $0xa8] sm:$0xf]
        %v1814 = vsel %vm1321, %v1788, 0
        %v1817 = vsel %vm1321, %v1789, 0
        %v1820 = vsel %vm1242, %v1811, 0
        %v1823 = vsel %vm1242, %v1812, 0
        %1825 = vmatprep.subr.mxu0 0.0
        %1826 = vmatpush1.msra.mxu0 0.0
        %1827 = vmatprep.subr.mxu0 0.0
        %1828 = vmatpush1.msra.mxu0 0.0
        %1829 = vmatprep.subr.mxu0 0.0
        %1830 = vmatpush1.msra.mxu0 0.0
        %1831 = vmatprep.subr.mxu0 0.0
        %1832 = vmatpush1.msra.mxu0 0.0
        %1833 = vmatprep.subr.mxu0 0.0
        %1834 = vmatpush1.msra.mxu0 0.0
        %1835 = vmatprep.subr.mxu0 %v1823
        %1836 = vmatpush1.msra.mxu0 %v1820
        %1837 = vmatprep.subr.mxu0 %v1810
        %1838 = vmatpush1.msra.mxu0 %v1809
        %1839 = vmatprep.subr.mxu0 %v1808
        %1840 = vmatpush1.msra.mxu0 %v1807
        %1841 = vmatprep.subr.mxu0 %v1806
        %1842 = vmatpush1.msra.mxu0 %v1805
        %1843 = vmatprep.subr.mxu0 %v1804
        %1844 = vmatpush1.msra.mxu0 %v1803
        %1845 = vmatprep.subr.mxu0 %v1802
        %1846 = vmatpush1.msra.mxu0 %v1801
        %1847 = vmatprep.subr.mxu0 %v1800
        %1848 = vmatpush1.msra.mxu0 %v1799
        %1849 = vmatprep.subr.mxu0 %v1798
        %1850 = vmatpush1.msra.mxu0 %v1797
        %1851 = vmatprep.subr.mxu0 %v1796
        %1852 = vmatpush1.msra.mxu0 %v1795
        %1853 = vmatprep.subr.mxu0 %v1794
        %1854 = vmatpush1.msra.mxu0 %v1793
        %1855 = vmatprep.subr.mxu0 %v1792
        %1856 = vmatpush1.msra.mxu0 %v1791
        %1857 = vmatprep.subr.mxu0 0.0
        %1858 = vmatpush2.msra.mxu0 0.0
        %1859 = vmatprep.subr.mxu0 0.0
        %1860 = vmatpush2.msra.mxu0 0.0
        %1861 = vmatprep.subr.mxu0 0.0
        %1862 = vmatpush2.msra.mxu0 0.0
        %1863 = vmatprep.subr.mxu0 0.0
        %1864 = vmatpush2.msra.mxu0 0.0
        %1865 = vmatprep.subr.mxu0 0.0
        %1866 = vmatpush2.msra.mxu0 0.0
        %1867 = vmatprep.subr.mxu0 0.0
        %1868 = vmatpush2.msra.mxu0 0.0
        %1869 = vmatprep.subr.mxu0 0.0
        %1870 = vmatpush2.msra.mxu0 0.0
        %1871 = vmatprep.subr.mxu0 0.0
        %1872 = vmatpush2.msra.mxu0 0.0
        %1873 = vmatprep.subr.mxu0 0.0
        %1874 = vmatpush2.msra.mxu0 0.0
        %1875 = vmatprep.subr.mxu0 0.0
        %1876 = vmatpush2.msra.mxu0 0.0
        %1877 = vmatprep.subr.mxu0 0.0
        %1878 = vmatpush2.msra.mxu0 0.0
        %1879 = vmatprep.subr.mxu0 0.0
        %1880 = vmatpush2.msra.mxu0 0.0
        %1881 = vmatprep.subr.mxu0 0.0
        %1882 = vmatpush2.msra.mxu0 0.0
        %1883 = vmatprep.subr.mxu0 0.0
        %1884 = vmatpush2.msra.mxu0 0.0
        %1885 = vmatprep.subr.mxu0 0.0
        %1886 = vmatpush2.msra.mxu0 0.0
        %1887 = vmatprep.subr.mxu0 0.0
        %1888 = vmatpush2.msra.mxu0 0.0
        %1889 = vmatprep.mubr.f32.mxu0 0.0
        %1890 = vmatmul.mubr.f32.gmra.mxu0 %v1814
        %v1891 = vpop.f32.mrf.mxu0
        %v1892 = vadd.f32 0.0, %v1891
        %v1893 = vpop.f32.mrf.mxu0
        %v1894 = vadd.f32 0.0, %v1893
        %1895 = vmatprep.mubr.f32.mxu0 0.0
        %1896 = vmatmul.mubr.f32.gmra.mxu0 %v1817
        %v1897 = vpop.f32.mrf.mxu0
        %v1898 = vadd.f32 0.0, %v1897
        %v1899 = vpop.f32.mrf.mxu0
        %v1900 = vadd.f32 0.0, %v1899
        %1901 = vdwg.mxu0
        %v1902 = vadd.f32 %v1784, %v1892
        %v1903 = vadd.f32 %v1785, %v1894
        %v1904 = vadd.f32 %v1786, %v1898
        %v1905 = vadd.f32 %v1787, %v1900
        %v1906 = vld [vmem:[%s6] sm:$0x3]
        %v1908 = vlaneseq
        %v1909 = vshrl.u32 %v1908, 7
        %v1910 = vsub.s32 0, %v1909
        %v1911 = vrot.slane %v1906, %v1910
        %v1912 = vlaneseq
        %v1913 = vshrl.u32 %v1912, 7
        %v1914 = vsub.s32 1, %v1913
        %v1915 = vrot.slane %v1906, %v1914
        %v1918 = vadd.f32 %v1902, %v1911
        %v1919 = vadd.f32 %v1903, %v1915
        %v1920 = vadd.f32 %v1904, %v1911
        %v1921 = vadd.f32 %v1905, %v1915
        %v1922 = vmax.f32 %v1918, 0.0
        %v1923 = vmax.f32 %v1919, 0.0
        %v1924 = vmax.f32 %v1920, 0.0
        %v1925 = vmax.f32 %v1921, 0.0
        %v1926 = vld [vmem:[%s8] sm:$0x1f]
        %v1927 = vld [vmem:[%s7] sm:$0xff]
        %v1928 = vld [vmem:[%s7 + $0x8] sm:$0xff]
        %v1929 = vld [vmem:[%s7 + $0x10] sm:$0xff]
        %v1930 = vld [vmem:[%s7 + $0x18] sm:$0xff]
        %v1931 = vld [vmem:[%s7 + $0x20] sm:$0xff]
        %v1932 = vld [vmem:[%s7 + $0x28] sm:$0xff]
        %v1933 = vld [vmem:[%s7 + $0x30] sm:$0xff]
        %v1934 = vld [vmem:[%s7 + $0x38] sm:$0xff]
        %v1935 = vld [vmem:[%s7 + $0x40] sm:$0xff]
        %v1936 = vld [vmem:[%s7 + $0x48] sm:$0xff]
        %v1937 = vld [vmem:[%s7 + $0x50] sm:$0xff]
        %v1938 = vld [vmem:[%s7 + $0x58] sm:$0xff]
        %v1939 = vld [vmem:[%s7 + $0x60] sm:$0xff]
        %v1940 = vld [vmem:[%s7 + $0x68] sm:$0xff]
        %v1941 = vld [vmem:[%s7 + $0x70] sm:$0xff]
        %v1942 = vld [vmem:[%s7 + $0x78] sm:$0xff]
        %v1943 = vld [vmem:[%s7 + $0x80] sm:$0xff]
        %v1944 = vld [vmem:[%s7 + $0x88] sm:$0xff]
        %v1945 = vld [vmem:[%s7 + $0x90] sm:$0xff]
        %v1946 = vld [vmem:[%s7 + $0x98] sm:$0xff]
        %v1948 = vsel %vm517, %v1923, 0
        %v1951 = vsel %vm517, %v1925, 0
        %1953 = vmatprep.subr.mxu0 0.0
        %1954 = vmatpush1.msra.mxu0 %v1942
        %1955 = vmatprep.subr.mxu0 0.0
        %1956 = vmatpush1.msra.mxu0 %v1941
        %1957 = vmatprep.subr.mxu0 0.0
        %1958 = vmatpush1.msra.mxu0 %v1940
        %1959 = vmatprep.subr.mxu0 0.0
        %1960 = vmatpush1.msra.mxu0 %v1939
        %1961 = vmatprep.subr.mxu0 0.0
        %1962 = vmatpush1.msra.mxu0 %v1938
        %1963 = vmatprep.subr.mxu0 0.0
        %1964 = vmatpush1.msra.mxu0 %v1937
        %1965 = vmatprep.subr.mxu0 0.0
        %1966 = vmatpush1.msra.mxu0 %v1936
        %1967 = vmatprep.subr.mxu0 0.0
        %1968 = vmatpush1.msra.mxu0 %v1935
        %1969 = vmatprep.subr.mxu0 0.0
        %1970 = vmatpush1.msra.mxu0 %v1934
        %1971 = vmatprep.subr.mxu0 0.0
        %1972 = vmatpush1.msra.mxu0 %v1933
        %1973 = vmatprep.subr.mxu0 0.0
        %1974 = vmatpush1.msra.mxu0 %v1932
        %1975 = vmatprep.subr.mxu0 0.0
        %1976 = vmatpush1.msra.mxu0 %v1931
        %1977 = vmatprep.subr.mxu0 0.0
        %1978 = vmatpush1.msra.mxu0 %v1930
        %1979 = vmatprep.subr.mxu0 0.0
        %1980 = vmatpush1.msra.mxu0 %v1929
        %1981 = vmatprep.subr.mxu0 0.0
        %1982 = vmatpush1.msra.mxu0 %v1928
        %1983 = vmatprep.subr.mxu0 0.0
        %1984 = vmatpush1.msra.mxu0 %v1927
        %1985 = vmatprep.subr.mxu0 0.0
        %1986 = vmatpush2.msra.mxu0 0.0
        %1987 = vmatprep.subr.mxu0 0.0
        %1988 = vmatpush2.msra.mxu0 0.0
        %1989 = vmatprep.subr.mxu0 0.0
        %1990 = vmatpush2.msra.mxu0 0.0
        %1991 = vmatprep.subr.mxu0 0.0
        %1992 = vmatpush2.msra.mxu0 0.0
        %1993 = vmatprep.subr.mxu0 0.0
        %1994 = vmatpush2.msra.mxu0 0.0
        %1995 = vmatprep.subr.mxu0 0.0
        %1996 = vmatpush2.msra.mxu0 0.0
        %1997 = vmatprep.subr.mxu0 0.0
        %1998 = vmatpush2.msra.mxu0 0.0
        %1999 = vmatprep.subr.mxu0 0.0
        %2000 = vmatpush2.msra.mxu0 0.0
        %2001 = vmatprep.subr.mxu0 0.0
        %2002 = vmatpush2.msra.mxu0 0.0
        %2003 = vmatprep.subr.mxu0 0.0
        %2004 = vmatpush2.msra.mxu0 0.0
        %2005 = vmatprep.subr.mxu0 0.0
        %2006 = vmatpush2.msra.mxu0 0.0
        %2007 = vmatprep.subr.mxu0 0.0
        %2008 = vmatpush2.msra.mxu0 0.0
        %2009 = vmatprep.subr.mxu0 0.0
        %2010 = vmatpush2.msra.mxu0 %v1946
        %2011 = vmatprep.subr.mxu0 0.0
        %2012 = vmatpush2.msra.mxu0 %v1945
        %2013 = vmatprep.subr.mxu0 0.0
        %2014 = vmatpush2.msra.mxu0 %v1944
        %2015 = vmatprep.subr.mxu0 0.0
        %2016 = vmatpush2.msra.mxu0 %v1943
        %2017 = vmatprep.mubr.f32.mxu0 %v1948
        %2018 = vmatmul.mubr.f32.gmra.mxu0 %v1922
        %v2019 = vpop.f32.mrf.mxu0
        %v2020 = vadd.f32 0.0, %v2019
        %v2021 = vpop.f32.mrf.mxu0
        %2022 = vmatprep.mubr.f32.mxu0 %v1951
        %2023 = vmatmul.mubr.f32.gmra.mxu0 %v1924
        %v2024 = vpop.f32.mrf.mxu0
        %v2025 = vadd.f32 0.0, %v2024
        %v2026 = vpop.f32.mrf.mxu0
        %2027 = vdwg.mxu0
        %vm2028 = vcmask 80896
        %v2030 = vsel %vm2028, %v1926, 0
        %vm2032 = vcmask 1041408
        %v2034 = vsel %vm2032, %v2025, 0
        %2036 = vmatprep.subr.mxu0 0.0
        %2037 = vmatpush1.msra.mxu0 0.0
        %2038 = vmatprep.subr.mxu0 0.0
        %2039 = vmatpush1.msra.mxu0 0.0
        %2040 = vmatprep.subr.mxu0 0.0
        %2041 = vmatpush1.msra.mxu0 0.0
        %2042 = vmatprep.subr.mxu0 0.0
        %2043 = vmatpush1.msra.mxu0 0.0
        %2044 = vmatprep.subr.mxu0 0.0
        %2045 = vmatpush1.msra.mxu0 0.0
        %2046 = vmatprep.subr.mxu0 0.0
        %2047 = vmatpush1.msra.mxu0 0.0
        %2048 = vmatprep.subr.mxu0 0.0
        %2049 = vmatpush1.msra.mxu0 0.0
        %2050 = vmatprep.subr.mxu0 0.0
        %2051 = vmatpush1.msra.mxu0 0.0
        %2052 = vmatprep.subr.mxu0 0.0
        %2053 = vmatpush1.msra.mxu0 0.0
        %2054 = vmatprep.subr.mxu0 0.0
        %2055 = vmatpush1.msra.mxu0 0.0
        %2056 = vmatprep.subr.mxu0 0.0
        %2057 = vmatpush1.msra.mxu0 0.0
        %2058 = vmatprep.subr.mxu0 0.0
        %2059 = vmatpush1.msra.mxu0 0.0
        %2060 = vmatprep.subr.mxu0 0.0
        %2061 = vmatpush1.msra.mxu0 0.0
        %2062 = vmatprep.subr.mxu0 0.0
        %2063 = vmatpush1.msra.mxu0 0.0
        %2064 = vmatprep.subr.mxu0 0.0
        %2065 = vmatpush1.msra.mxu0 %v2034
        %2066 = vmatprep.subr.mxu0 0.0
        %2067 = vmatpush1.msra.mxu0 %v2020
        %2068 = vmatprep.subr.mxu0 0.0
        %2069 = vmatpush2.msra.mxu0 0.0
        %2070 = vmatprep.subr.mxu0 0.0
        %2071 = vmatpush2.msra.mxu0 0.0
        %2072 = vmatprep.subr.mxu0 0.0
        %2073 = vmatpush2.msra.mxu0 0.0
        %2074 = vmatprep.subr.mxu0 0.0
        %2075 = vmatpush2.msra.mxu0 0.0
        %2076 = vmatprep.subr.mxu0 0.0
        %2077 = vmatpush2.msra.mxu0 0.0
        %2078 = vmatprep.subr.mxu0 0.0
        %2079 = vmatpush2.msra.mxu0 0.0
        %2080 = vmatprep.subr.mxu0 0.0
        %2081 = vmatpush2.msra.mxu0 0.0
        %2082 = vmatprep.subr.mxu0 0.0
        %2083 = vmatpush2.msra.mxu0 0.0
        %2084 = vmatprep.subr.mxu0 0.0
        %2085 = vmatpush2.msra.mxu0 0.0
        %2086 = vmatprep.subr.mxu0 0.0
        %2087 = vmatpush2.msra.mxu0 0.0
        %2088 = vmatprep.subr.mxu0 0.0
        %2089 = vmatpush2.msra.mxu0 0.0
        %2090 = vmatprep.subr.mxu0 0.0
        %2091 = vmatpush2.msra.mxu0 0.0
        %2092 = vmatprep.subr.mxu0 0.0
        %2093 = vmatpush2.msra.mxu0 0.0
        %2094 = vmatprep.subr.mxu0 0.0
        %2095 = vmatpush2.msra.mxu0 0.0
        %2096 = vmatprep.subr.mxu0 0.0
        %2097 = vmatpush2.msra.mxu0 0.0
        %2098 = vmatprep.subr.mxu0 0.0
        %2099 = vmatpush2.msra.mxu0 0.0
        %2100 = vmatprep.mubr.f32.mxu0 0.0
        %2101 = vmatmul.mubr.f32.gmra.mxu0 %v2030
        %v2102 = vpop.f32.mrf.mxu0
        %v2103 = vadd.f32 0.0, %v2102
        %v2104 = vpop.f32.mrf.mxu0
        %2105 = vdwg.mxu0
        %vm2106 = vcmask 651264
        %2107 = vst.msk [vmem:[#allocation3] sm:$0x1f] %vm2106, %v2103
        %v2108 = vld [vmem:[#allocation3] sm:$0x1]
        %v2109 = vld [vmem:[%s9] sm:$0xff]
        %v2110 = vld [vmem:[%s9 + $0x8] sm:$0xff]
        %v2111 = vld [vmem:[%s9 + $0x10] sm:$0xff]
        %v2112 = vld [vmem:[%s9 + $0x18] sm:$0xff]
        %v2113 = vld [vmem:[%s9 + $0x20] sm:$0xff]
        %v2114 = vld [vmem:[%s9 + $0x28] sm:$0xff]
        %v2115 = vld [vmem:[%s9 + $0x30] sm:$0xff]
        %v2116 = vld [vmem:[%s9 + $0x38] sm:$0xff]
        %v2117 = vld [vmem:[%s9 + $0x40] sm:$0xff]
        %v2118 = vld [vmem:[%s9 + $0x48] sm:$0xff]
        %v2119 = vld [vmem:[#allocation3 + $0x1] sm:$0x1]
        %v2120 = vld [vmem:[%s9 + $0x50] sm:$0xff]
        %v2121 = vld [vmem:[%s9 + $0x58] sm:$0xff]
        %v2122 = vld [vmem:[%s9 + $0x60] sm:$0xff]
        %v2123 = vld [vmem:[%s9 + $0x68] sm:$0xff]
        %v2124 = vld [vmem:[%s9 + $0x70] sm:$0xff]
        %v2125 = vld [vmem:[%s9 + $0x78] sm:$0xff]
        %v2126 = vld [vmem:[%s9 + $0x80] sm:$0xff]
        %v2127 = vld [vmem:[%s9 + $0x88] sm:$0xff]
        %v2128 = vld [vmem:[%s9 + $0x90] sm:$0xff]
        %v2129 = vld [vmem:[%s9 + $0x98] sm:$0xff]
        %vm2130 = vcmask 654336
        %v2132 = vsel %vm2130, %v2119, 0
        %2134 = vmatprep.subr.mxu0 0.0
        %2135 = vmatpush1.msra.mxu0 0.0
        %2136 = vmatprep.subr.mxu0 0.0
        %2137 = vmatpush1.msra.mxu0 0.0
        %2138 = vmatprep.subr.mxu0 0.0
        %2139 = vmatpush1.msra.mxu0 0.0
        %2140 = vmatprep.subr.mxu0 0.0
        %2141 = vmatpush1.msra.mxu0 0.0
        %2142 = vmatprep.subr.mxu0 0.0
        %2143 = vmatpush1.msra.mxu0 0.0
        %2144 = vmatprep.subr.mxu0 0.0
        %2145 = vmatpush1.msra.mxu0 0.0
        %2146 = vmatprep.subr.mxu0 0.0
        %2147 = vmatpush1.msra.mxu0 %v2129
        %2148 = vmatprep.subr.mxu0 0.0
        %2149 = vmatpush1.msra.mxu0 %v2128
        %2150 = vmatprep.subr.mxu0 0.0
        %2151 = vmatpush1.msra.mxu0 %v2127
        %2152 = vmatprep.subr.mxu0 0.0
        %2153 = vmatpush1.msra.mxu0 %v2126
        %2154 = vmatprep.subr.mxu0 0.0
        %2155 = vmatpush1.msra.mxu0 %v2125
        %2156 = vmatprep.subr.mxu0 0.0
        %2157 = vmatpush1.msra.mxu0 %v2124
        %2158 = vmatprep.subr.mxu0 0.0
        %2159 = vmatpush1.msra.mxu0 %v2123
        %2160 = vmatprep.subr.mxu0 0.0
        %2161 = vmatpush1.msra.mxu0 %v2122
        %2162 = vmatprep.subr.mxu0 0.0
        %2163 = vmatpush1.msra.mxu0 %v2121
        %2164 = vmatprep.subr.mxu0 0.0
        %2165 = vmatpush1.msra.mxu0 %v2120
        %2166 = vmatprep.subr.mxu0 0.0
        %2167 = vmatpush2.msra.mxu0 0.0
        %2168 = vmatprep.subr.mxu0 0.0
        %2169 = vmatpush2.msra.mxu0 0.0
        %2170 = vmatprep.subr.mxu0 0.0
        %2171 = vmatpush2.msra.mxu0 0.0
        %2172 = vmatprep.subr.mxu0 0.0
        %2173 = vmatpush2.msra.mxu0 0.0
        %2174 = vmatprep.subr.mxu0 0.0
        %2175 = vmatpush2.msra.mxu0 0.0
        %2176 = vmatprep.subr.mxu0 0.0
        %2177 = vmatpush2.msra.mxu0 0.0
        %2178 = vmatprep.subr.mxu0 0.0
        %2179 = vmatpush2.msra.mxu0 0.0
        %2180 = vmatprep.subr.mxu0 0.0
        %2181 = vmatpush2.msra.mxu0 0.0
        %2182 = vmatprep.subr.mxu0 0.0
        %2183 = vmatpush2.msra.mxu0 0.0
        %2184 = vmatprep.subr.mxu0 0.0
        %2185 = vmatpush2.msra.mxu0 0.0
        %2186 = vmatprep.subr.mxu0 0.0
        %2187 = vmatpush2.msra.mxu0 0.0
        %2188 = vmatprep.subr.mxu0 0.0
        %2189 = vmatpush2.msra.mxu0 0.0
        %2190 = vmatprep.subr.mxu0 0.0
        %2191 = vmatpush2.msra.mxu0 0.0
        %2192 = vmatprep.subr.mxu0 0.0
        %2193 = vmatpush2.msra.mxu0 0.0
        %2194 = vmatprep.subr.mxu0 0.0
        %2195 = vmatpush2.msra.mxu0 0.0
        %2196 = vmatprep.subr.mxu0 0.0
        %2197 = vmatpush2.msra.mxu0 0.0
        %2198 = vmatprep.mubr.f32.mxu0 0.0
        %2199 = vmatmul.mubr.f32.gmra.mxu0 %v2132
        %v2200 = vpop.f32.mrf.mxu0
        %v2201 = vadd.f32 0.0, %v2200
        %v2202 = vpop.f32.mrf.mxu0
        %2203 = vdwg.mxu0
        %v2205 = vsel %vm2130, %v2108, 0
        %2207 = vmatprep.subr.mxu0 0.0
        %2208 = vmatpush1.msra.mxu0 0.0
        %2209 = vmatprep.subr.mxu0 0.0
        %2210 = vmatpush1.msra.mxu0 0.0
        %2211 = vmatprep.subr.mxu0 0.0
        %2212 = vmatpush1.msra.mxu0 0.0
        %2213 = vmatprep.subr.mxu0 0.0
        %2214 = vmatpush1.msra.mxu0 0.0
        %2215 = vmatprep.subr.mxu0 0.0
        %2216 = vmatpush1.msra.mxu0 0.0
        %2217 = vmatprep.subr.mxu0 0.0
        %2218 = vmatpush1.msra.mxu0 0.0
        %2219 = vmatprep.subr.mxu0 0.0
        %2220 = vmatpush1.msra.mxu0 %v2118
        %2221 = vmatprep.subr.mxu0 0.0
        %2222 = vmatpush1.msra.mxu0 %v2117
        %2223 = vmatprep.subr.mxu0 0.0
        %2224 = vmatpush1.msra.mxu0 %v2116
        %2225 = vmatprep.subr.mxu0 0.0
        %2226 = vmatpush1.msra.mxu0 %v2115
        %2227 = vmatprep.subr.mxu0 0.0
        %2228 = vmatpush1.msra.mxu0 %v2114
        %2229 = vmatprep.subr.mxu0 0.0
        %2230 = vmatpush1.msra.mxu0 %v2113
        %2231 = vmatprep.subr.mxu0 0.0
        %2232 = vmatpush1.msra.mxu0 %v2112
        %2233 = vmatprep.subr.mxu0 0.0
        %2234 = vmatpush1.msra.mxu0 %v2111
        %2235 = vmatprep.subr.mxu0 0.0
        %2236 = vmatpush1.msra.mxu0 %v2110
        %2237 = vmatprep.subr.mxu0 0.0
        %2238 = vmatpush1.msra.mxu0 %v2109
        %2239 = vmatprep.subr.mxu0 0.0
        %2240 = vmatpush2.msra.mxu0 0.0
        %2241 = vmatprep.subr.mxu0 0.0
        %2242 = vmatpush2.msra.mxu0 0.0
        %2243 = vmatprep.subr.mxu0 0.0
        %2244 = vmatpush2.msra.mxu0 0.0
        %2245 = vmatprep.subr.mxu0 0.0
        %2246 = vmatpush2.msra.mxu0 0.0
        %2247 = vmatprep.subr.mxu0 0.0
        %2248 = vmatpush2.msra.mxu0 0.0
        %2249 = vmatprep.subr.mxu0 0.0
        %2250 = vmatpush2.msra.mxu0 0.0
        %2251 = vmatprep.subr.mxu0 0.0
        %2252 = vmatpush2.msra.mxu0 0.0
        %2253 = vmatprep.subr.mxu0 0.0
        %2254 = vmatpush2.msra.mxu0 0.0
        %2255 = vmatprep.subr.mxu0 0.0
        %2256 = vmatpush2.msra.mxu0 0.0
        %2257 = vmatprep.subr.mxu0 0.0
        %2258 = vmatpush2.msra.mxu0 0.0
        %2259 = vmatprep.subr.mxu0 0.0
        %2260 = vmatpush2.msra.mxu0 0.0
        %2261 = vmatprep.subr.mxu0 0.0
        %2262 = vmatpush2.msra.mxu0 0.0
        %2263 = vmatprep.subr.mxu0 0.0
        %2264 = vmatpush2.msra.mxu0 0.0
        %2265 = vmatprep.subr.mxu0 0.0
        %2266 = vmatpush2.msra.mxu0 0.0
        %2267 = vmatprep.subr.mxu0 0.0
        %2268 = vmatpush2.msra.mxu0 0.0
        %2269 = vmatprep.subr.mxu0 0.0
        %2270 = vmatpush2.msra.mxu0 0.0
        %2271 = vmatprep.mubr.f32.mxu0 0.0
        %2272 = vmatmul.mubr.f32.gmra.mxu0 %v2205
        %v2273 = vpop.f32.mrf.mxu0
        %v2274 = vadd.f32 %v2201, %v2273
        %v2275 = vpop.f32.mrf.mxu0
        %2276 = vdwg.mxu0
        %v2277 = vld [vmem:[#allocation3 + $0x2] sm:$0x1]
        %v2278 = vld [vmem:[%s9 + $0xa0] sm:$0xff]
        %v2279 = vld [vmem:[%s9 + $0xa8] sm:$0xff]
        %v2280 = vld [vmem:[%s9 + $0xb0] sm:$0xff]
        %v2281 = vld [vmem:[%s9 + $0xb8] sm:$0xff]
        %v2282 = vld [vmem:[%s9 + $0xc0] sm:$0xff]
        %v2283 = vld [vmem:[%s9 + $0xc8] sm:$0xff]
        %v2284 = vld [vmem:[%s9 + $0xd0] sm:$0xff]
        %v2285 = vld [vmem:[%s9 + $0xd8] sm:$0xff]
        %v2286 = vld [vmem:[%s9 + $0xe0] sm:$0xff]
        %v2287 = vld [vmem:[%s9 + $0xe8] sm:$0xff]
        %v2289 = vsel %vm2130, %v2277, 0
        %2291 = vmatprep.subr.mxu0 0.0
        %2292 = vmatpush1.msra.mxu0 0.0
        %2293 = vmatprep.subr.mxu0 0.0
        %2294 = vmatpush1.msra.mxu0 0.0
        %2295 = vmatprep.subr.mxu0 0.0
        %2296 = vmatpush1.msra.mxu0 0.0
        %2297 = vmatprep.subr.mxu0 0.0
        %2298 = vmatpush1.msra.mxu0 0.0
        %2299 = vmatprep.subr.mxu0 0.0
        %2300 = vmatpush1.msra.mxu0 0.0
        %2301 = vmatprep.subr.mxu0 0.0
        %2302 = vmatpush1.msra.mxu0 0.0
        %2303 = vmatprep.subr.mxu0 0.0
        %2304 = vmatpush1.msra.mxu0 %v2287
        %2305 = vmatprep.subr.mxu0 0.0
        %2306 = vmatpush1.msra.mxu0 %v2286
        %2307 = vmatprep.subr.mxu0 0.0
        %2308 = vmatpush1.msra.mxu0 %v2285
        %2309 = vmatprep.subr.mxu0 0.0
        %2310 = vmatpush1.msra.mxu0 %v2284
        %2311 = vmatprep.subr.mxu0 0.0
        %2312 = vmatpush1.msra.mxu0 %v2283
        %2313 = vmatprep.subr.mxu0 0.0
        %2314 = vmatpush1.msra.mxu0 %v2282
        %2315 = vmatprep.subr.mxu0 0.0
        %2316 = vmatpush1.msra.mxu0 %v2281
        %2317 = vmatprep.subr.mxu0 0.0
        %2318 = vmatpush1.msra.mxu0 %v2280
        %2319 = vmatprep.subr.mxu0 0.0
        %2320 = vmatpush1.msra.mxu0 %v2279
        %2321 = vmatprep.subr.mxu0 0.0
        %2322 = vmatpush1.msra.mxu0 %v2278
        %2323 = vmatprep.subr.mxu0 0.0
        %2324 = vmatpush2.msra.mxu0 0.0
        %2325 = vmatprep.subr.mxu0 0.0
        %2326 = vmatpush2.msra.mxu0 0.0
        %2327 = vmatprep.subr.mxu0 0.0
        %2328 = vmatpush2.msra.mxu0 0.0
        %2329 = vmatprep.subr.mxu0 0.0
        %2330 = vmatpush2.msra.mxu0 0.0
        %2331 = vmatprep.subr.mxu0 0.0
        %2332 = vmatpush2.msra.mxu0 0.0
        %2333 = vmatprep.subr.mxu0 0.0
        %2334 = vmatpush2.msra.mxu0 0.0
        %2335 = vmatprep.subr.mxu0 0.0
        %2336 = vmatpush2.msra.mxu0 0.0
        %2337 = vmatprep.subr.mxu0 0.0
        %2338 = vmatpush2.msra.mxu0 0.0
        %2339 = vmatprep.subr.mxu0 0.0
        %2340 = vmatpush2.msra.mxu0 0.0
        %2341 = vmatprep.subr.mxu0 0.0
        %2342 = vmatpush2.msra.mxu0 0.0
        %2343 = vmatprep.subr.mxu0 0.0
        %2344 = vmatpush2.msra.mxu0 0.0
        %2345 = vmatprep.subr.mxu0 0.0
        %2346 = vmatpush2.msra.mxu0 0.0
        %2347 = vmatprep.subr.mxu0 0.0
        %2348 = vmatpush2.msra.mxu0 0.0
        %2349 = vmatprep.subr.mxu0 0.0
        %2350 = vmatpush2.msra.mxu0 0.0
        %2351 = vmatprep.subr.mxu0 0.0
        %2352 = vmatpush2.msra.mxu0 0.0
        %2353 = vmatprep.subr.mxu0 0.0
        %2354 = vmatpush2.msra.mxu0 0.0
        %2355 = vmatprep.mubr.f32.mxu0 0.0
        %2356 = vmatmul.mubr.f32.gmra.mxu0 %v2289
        %v2357 = vpop.f32.mrf.mxu0
        %v2358 = vadd.f32 0.0, %v2357
        %v2359 = vpop.f32.mrf.mxu0
        %2360 = vdwg.mxu0
        %v2361 = vadd.f32 %v2274, %v2358
        %v2362 = vld [vmem:[#allocation3 + $0x3] sm:$0x1]
        %v2363 = vld [vmem:[%s9 + $0xf0] sm:$0xff]
        %v2364 = vld [vmem:[%s9 + $0xf8] sm:$0xff]
        %v2365 = vld [vmem:[%s9 + $0x100] sm:$0xff]
        %v2366 = vld [vmem:[%s9 + $0x108] sm:$0xff]
        %v2367 = vld [vmem:[%s9 + $0x110] sm:$0xff]
        %v2368 = vld [vmem:[%s9 + $0x118] sm:$0xff]
        %v2369 = vld [vmem:[%s9 + $0x120] sm:$0xff]
        %v2370 = vld [vmem:[%s9 + $0x128] sm:$0xff]
        %v2371 = vld [vmem:[%s9 + $0x130] sm:$0xff]
        %v2372 = vld [vmem:[%s9 + $0x138] sm:$0xff]
        %v2374 = vsel %vm2130, %v2362, 0
        %2376 = vmatprep.subr.mxu0 0.0
        %2377 = vmatpush1.msra.mxu0 0.0
        %2378 = vmatprep.subr.mxu0 0.0
        %2379 = vmatpush1.msra.mxu0 0.0
        %2380 = vmatprep.subr.mxu0 0.0
        %2381 = vmatpush1.msra.mxu0 0.0
        %2382 = vmatprep.subr.mxu0 0.0
        %2383 = vmatpush1.msra.mxu0 0.0
        %2384 = vmatprep.subr.mxu0 0.0
        %2385 = vmatpush1.msra.mxu0 0.0
        %2386 = vmatprep.subr.mxu0 0.0
        %2387 = vmatpush1.msra.mxu0 0.0
        %2388 = vmatprep.subr.mxu0 0.0
        %2389 = vmatpush1.msra.mxu0 %v2372
        %2390 = vmatprep.subr.mxu0 0.0
        %2391 = vmatpush1.msra.mxu0 %v2371
        %2392 = vmatprep.subr.mxu0 0.0
        %2393 = vmatpush1.msra.mxu0 %v2370
        %2394 = vmatprep.subr.mxu0 0.0
        %2395 = vmatpush1.msra.mxu0 %v2369
        %2396 = vmatprep.subr.mxu0 0.0
        %2397 = vmatpush1.msra.mxu0 %v2368
        %2398 = vmatprep.subr.mxu0 0.0
        %2399 = vmatpush1.msra.mxu0 %v2367
        %2400 = vmatprep.subr.mxu0 0.0
        %2401 = vmatpush1.msra.mxu0 %v2366
        %2402 = vmatprep.subr.mxu0 0.0
        %2403 = vmatpush1.msra.mxu0 %v2365
        %2404 = vmatprep.subr.mxu0 0.0
        %2405 = vmatpush1.msra.mxu0 %v2364
        %2406 = vmatprep.subr.mxu0 0.0
        %2407 = vmatpush1.msra.mxu0 %v2363
        %2408 = vmatprep.subr.mxu0 0.0
        %2409 = vmatpush2.msra.mxu0 0.0
        %2410 = vmatprep.subr.mxu0 0.0
        %2411 = vmatpush2.msra.mxu0 0.0
        %2412 = vmatprep.subr.mxu0 0.0
        %2413 = vmatpush2.msra.mxu0 0.0
        %2414 = vmatprep.subr.mxu0 0.0
        %2415 = vmatpush2.msra.mxu0 0.0
        %2416 = vmatprep.subr.mxu0 0.0
        %2417 = vmatpush2.msra.mxu0 0.0
        %2418 = vmatprep.subr.mxu0 0.0
        %2419 = vmatpush2.msra.mxu0 0.0
        %2420 = vmatprep.subr.mxu0 0.0
        %2421 = vmatpush2.msra.mxu0 0.0
        %2422 = vmatprep.subr.mxu0 0.0
        %2423 = vmatpush2.msra.mxu0 0.0
        %2424 = vmatprep.subr.mxu0 0.0
        %2425 = vmatpush2.msra.mxu0 0.0
        %2426 = vmatprep.subr.mxu0 0.0
        %2427 = vmatpush2.msra.mxu0 0.0
        %2428 = vmatprep.subr.mxu0 0.0
        %2429 = vmatpush2.msra.mxu0 0.0
        %2430 = vmatprep.subr.mxu0 0.0
        %2431 = vmatpush2.msra.mxu0 0.0
        %2432 = vmatprep.subr.mxu0 0.0
        %2433 = vmatpush2.msra.mxu0 0.0
        %2434 = vmatprep.subr.mxu0 0.0
        %2435 = vmatpush2.msra.mxu0 0.0
        %2436 = vmatprep.subr.mxu0 0.0
        %2437 = vmatpush2.msra.mxu0 0.0
        %2438 = vmatprep.subr.mxu0 0.0
        %2439 = vmatpush2.msra.mxu0 0.0
        %2440 = vmatprep.mubr.f32.mxu0 0.0
        %2441 = vmatmul.mubr.f32.gmra.mxu0 %v2374
        %v2442 = vpop.f32.mrf.mxu0
        %v2443 = vadd.f32 0.0, %v2442
        %v2444 = vpop.f32.mrf.mxu0
        %2445 = vdwg.mxu0
        %v2446 = vadd.f32 %v2361, %v2443
        %v2447 = vld [vmem:[#allocation3 + $0x4] sm:$0x1]
        %v2448 = vld [vmem:[%s9 + $0x140] sm:$0xff]
        %v2449 = vld [vmem:[%s9 + $0x148] sm:$0xff]
        %v2450 = vld [vmem:[%s9 + $0x150] sm:$0xff]
        %v2451 = vld [vmem:[%s9 + $0x158] sm:$0xff]
        %v2452 = vld [vmem:[%s9 + $0x160] sm:$0xff]
        %v2453 = vld [vmem:[%s9 + $0x168] sm:$0xff]
        %v2454 = vld [vmem:[%s9 + $0x170] sm:$0xff]
        %v2455 = vld [vmem:[%s9 + $0x178] sm:$0xff]
        %v2456 = vld [vmem:[%s9 + $0x180] sm:$0xff]
        %v2457 = vld [vmem:[%s9 + $0x188] sm:$0xff]
        %v2459 = vsel %vm2130, %v2447, 0
        %2461 = vmatprep.subr.mxu0 0.0
        %2462 = vmatpush1.msra.mxu0 0.0
        %2463 = vmatprep.subr.mxu0 0.0
        %2464 = vmatpush1.msra.mxu0 0.0
        %2465 = vmatprep.subr.mxu0 0.0
        %2466 = vmatpush1.msra.mxu0 0.0
        %2467 = vmatprep.subr.mxu0 0.0
        %2468 = vmatpush1.msra.mxu0 0.0
        %2469 = vmatprep.subr.mxu0 0.0
        %2470 = vmatpush1.msra.mxu0 0.0
        %2471 = vmatprep.subr.mxu0 0.0
        %2472 = vmatpush1.msra.mxu0 0.0
        %2473 = vmatprep.subr.mxu0 0.0
        %2474 = vmatpush1.msra.mxu0 %v2457
        %2475 = vmatprep.subr.mxu0 0.0
        %2476 = vmatpush1.msra.mxu0 %v2456
        %2477 = vmatprep.subr.mxu0 0.0
        %2478 = vmatpush1.msra.mxu0 %v2455
        %2479 = vmatprep.subr.mxu0 0.0
        %2480 = vmatpush1.msra.mxu0 %v2454
        %2481 = vmatprep.subr.mxu0 0.0
        %2482 = vmatpush1.msra.mxu0 %v2453
        %2483 = vmatprep.subr.mxu0 0.0
        %2484 = vmatpush1.msra.mxu0 %v2452
        %2485 = vmatprep.subr.mxu0 0.0
        %2486 = vmatpush1.msra.mxu0 %v2451
        %2487 = vmatprep.subr.mxu0 0.0
        %2488 = vmatpush1.msra.mxu0 %v2450
        %2489 = vmatprep.subr.mxu0 0.0
        %2490 = vmatpush1.msra.mxu0 %v2449
        %2491 = vmatprep.subr.mxu0 0.0
        %2492 = vmatpush1.msra.mxu0 %v2448
        %2493 = vmatprep.subr.mxu0 0.0
        %2494 = vmatpush2.msra.mxu0 0.0
        %2495 = vmatprep.subr.mxu0 0.0
        %2496 = vmatpush2.msra.mxu0 0.0
        %2497 = vmatprep.subr.mxu0 0.0
        %2498 = vmatpush2.msra.mxu0 0.0
        %2499 = vmatprep.subr.mxu0 0.0
        %2500 = vmatpush2.msra.mxu0 0.0
        %2501 = vmatprep.subr.mxu0 0.0
        %2502 = vmatpush2.msra.mxu0 0.0
        %2503 = vmatprep.subr.mxu0 0.0
        %2504 = vmatpush2.msra.mxu0 0.0
        %2505 = vmatprep.subr.mxu0 0.0
        %2506 = vmatpush2.msra.mxu0 0.0
        %2507 = vmatprep.subr.mxu0 0.0
        %2508 = vmatpush2.msra.mxu0 0.0
        %2509 = vmatprep.subr.mxu0 0.0
        %2510 = vmatpush2.msra.mxu0 0.0
        %2511 = vmatprep.subr.mxu0 0.0
        %2512 = vmatpush2.msra.mxu0 0.0
        %2513 = vmatprep.subr.mxu0 0.0
        %2514 = vmatpush2.msra.mxu0 0.0
        %2515 = vmatprep.subr.mxu0 0.0
        %2516 = vmatpush2.msra.mxu0 0.0
        %2517 = vmatprep.subr.mxu0 0.0
        %2518 = vmatpush2.msra.mxu0 0.0
        %2519 = vmatprep.subr.mxu0 0.0
        %2520 = vmatpush2.msra.mxu0 0.0
        %2521 = vmatprep.subr.mxu0 0.0
        %2522 = vmatpush2.msra.mxu0 0.0
        %2523 = vmatprep.subr.mxu0 0.0
        %2524 = vmatpush2.msra.mxu0 0.0
        %2525 = vmatprep.mubr.f32.mxu0 0.0
        %2526 = vmatmul.mubr.f32.gmra.mxu0 %v2459
        %v2527 = vpop.f32.mrf.mxu0
        %v2528 = vadd.f32 0.0, %v2527
        %v2529 = vpop.f32.mrf.mxu0
        %2530 = vdwg.mxu0
        %v2531 = vadd.f32 %v2446, %v2528
        %v2532 = vld [vmem:[%s10] sm:$0x1]
        %v2533 = vadd.f32 %v2531, %v2532
        %v2534 = vmax.f32 %v2533, 0.0
        %v2535 = vld [vmem:[%s11] sm:$0xff]
        %v2536 = vld [vmem:[%s11 + $0x8] sm:$0xff]
        %v2537 = vld [vmem:[%s11 + $0x10] sm:$0xff]
        %v2538 = vld [vmem:[%s11 + $0x18] sm:$0xff]
        %v2539 = vld [vmem:[%s11 + $0x20] sm:$0xff]
        %v2540 = vld [vmem:[%s11 + $0x28] sm:$0xff]
        %v2541 = vld [vmem:[%s11 + $0x30] sm:$0xff]
        %v2542 = vld [vmem:[%s11 + $0x38] sm:$0xff]
        %v2543 = vld [vmem:[%s11 + $0x40] sm:$0xff]
        %v2544 = vld [vmem:[%s11 + $0x48] sm:$0xff]
        %v2545 = vld [vmem:[%s11 + $0x50] sm:$0xff]
        %v2546 = vld [vmem:[%s11 + $0x58] sm:$0xff]
        %v2547 = vld [vmem:[%s11 + $0x60] sm:$0xff]
        %v2548 = vld [vmem:[%s11 + $0x68] sm:$0xff]
        %v2549 = vld [vmem:[%s11 + $0x70] sm:$0xff]
        %v2550 = vld [vmem:[%s12] sm:$0x1]
        %vm2551 = vcmask 982016
        %v2553 = vsel %vm2551, %v2534, 0
        %2555 = vmatprep.subr.mxu0 0.0
        %2556 = vmatpush1.msra.mxu0 0.0
        %2557 = vmatprep.subr.mxu0 0.0
        %2558 = vmatpush1.msra.mxu0 %v2549
        %2559 = vmatprep.subr.mxu0 0.0
        %2560 = vmatpush1.msra.mxu0 %v2548
        %2561 = vmatprep.subr.mxu0 0.0
        %2562 = vmatpush1.msra.mxu0 %v2547
        %2563 = vmatprep.subr.mxu0 0.0
        %2564 = vmatpush1.msra.mxu0 %v2546
        %2565 = vmatprep.subr.mxu0 0.0
        %2566 = vmatpush1.msra.mxu0 %v2545
        %2567 = vmatprep.subr.mxu0 0.0
        %2568 = vmatpush1.msra.mxu0 %v2544
        %2569 = vmatprep.subr.mxu0 0.0
        %2570 = vmatpush1.msra.mxu0 %v2543
        %2571 = vmatprep.subr.mxu0 0.0
        %2572 = vmatpush1.msra.mxu0 %v2542
        %2573 = vmatprep.subr.mxu0 0.0
        %2574 = vmatpush1.msra.mxu0 %v2541
        %2575 = vmatprep.subr.mxu0 0.0
        %2576 = vmatpush1.msra.mxu0 %v2540
        %2577 = vmatprep.subr.mxu0 0.0
        %2578 = vmatpush1.msra.mxu0 %v2539
        %2579 = vmatprep.subr.mxu0 0.0
        %2580 = vmatpush1.msra.mxu0 %v2538
        %2581 = vmatprep.subr.mxu0 0.0
        %2582 = vmatpush1.msra.mxu0 %v2537
        %2583 = vmatprep.subr.mxu0 0.0
        %2584 = vmatpush1.msra.mxu0 %v2536
        %2585 = vmatprep.subr.mxu0 0.0
        %2586 = vmatpush1.msra.mxu0 %v2535
        %2587 = vmatprep.subr.mxu0 0.0
        %2588 = vmatpush2.msra.mxu0 0.0
        %2589 = vmatprep.subr.mxu0 0.0
        %2590 = vmatpush2.msra.mxu0 0.0
        %2591 = vmatprep.subr.mxu0 0.0
        %2592 = vmatpush2.msra.mxu0 0.0
        %2593 = vmatprep.subr.mxu0 0.0
        %2594 = vmatpush2.msra.mxu0 0.0
        %2595 = vmatprep.subr.mxu0 0.0
        %2596 = vmatpush2.msra.mxu0 0.0
        %2597 = vmatprep.subr.mxu0 0.0
        %2598 = vmatpush2.msra.mxu0 0.0
        %2599 = vmatprep.subr.mxu0 0.0
        %2600 = vmatpush2.msra.mxu0 0.0
        %2601 = vmatprep.subr.mxu0 0.0
        %2602 = vmatpush2.msra.mxu0 0.0
        %2603 = vmatprep.subr.mxu0 0.0
        %2604 = vmatpush2.msra.mxu0 0.0
        %2605 = vmatprep.subr.mxu0 0.0
        %2606 = vmatpush2.msra.mxu0 0.0
        %2607 = vmatprep.subr.mxu0 0.0
        %2608 = vmatpush2.msra.mxu0 0.0
        %2609 = vmatprep.subr.mxu0 0.0
        %2610 = vmatpush2.msra.mxu0 0.0
        %2611 = vmatprep.subr.mxu0 0.0
        %2612 = vmatpush2.msra.mxu0 0.0
        %2613 = vmatprep.subr.mxu0 0.0
        %2614 = vmatpush2.msra.mxu0 0.0
        %2615 = vmatprep.subr.mxu0 0.0
        %2616 = vmatpush2.msra.mxu0 0.0
        %2617 = vmatprep.subr.mxu0 0.0
        %2618 = vmatpush2.msra.mxu0 0.0
        %2619 = vmatprep.mubr.f32.mxu0 0.0
        %2620 = vmatmul.mubr.f32.gmra.mxu0 %v2553
        %v2621 = vpop.f32.mrf.mxu0
        %v2622 = vadd.f32 %v2550, %v2621
        %v2623 = vpop.f32.mrf.mxu0
        %2624 = vdwg.mxu0
        %v2625 = vmax.f32 %v2622, 0.0
        %v2626 = vld [vmem:[%s13] sm:$0xff]
        %v2627 = vld [vmem:[%s13 + $0x8] sm:$0xff]
        %v2628 = vld [vmem:[%s13 + $0x10] sm:$0xff]
        %v2629 = vld [vmem:[%s13 + $0x18] sm:$0xff]
        %v2630 = vld [vmem:[%s13 + $0x20] sm:$0xff]
        %v2631 = vld [vmem:[%s13 + $0x28] sm:$0xff]
        %v2632 = vld [vmem:[%s13 + $0x30] sm:$0xff]
        %v2633 = vld [vmem:[%s13 + $0x38] sm:$0xff]
        %v2634 = vld [vmem:[%s13 + $0x40] sm:$0xff]
        %v2635 = vld [vmem:[%s13 + $0x48] sm:$0xff]
        %v2636 = vld [vmem:[%s13 + $0x50] sm:$0xf]
        %v2637 = vld [vmem:[%s14] sm:$0x1]
        %v2639 = vsel %vm1321, %v2625, 0
        %v2642 = vsel %vm1242, %v2636, 0
        %2644 = vmatprep.subr.mxu0 0.0
        %2645 = vmatpush1.msra.mxu0 0.0
        %2646 = vmatprep.subr.mxu0 0.0
        %2647 = vmatpush1.msra.mxu0 0.0
        %2648 = vmatprep.subr.mxu0 0.0
        %2649 = vmatpush1.msra.mxu0 0.0
        %2650 = vmatprep.subr.mxu0 0.0
        %2651 = vmatpush1.msra.mxu0 0.0
        %2652 = vmatprep.subr.mxu0 0.0
        %2653 = vmatpush1.msra.mxu0 0.0
        %2654 = vmatprep.subr.mxu0 0.0
        %2655 = vmatpush1.msra.mxu0 %v2642
        %2656 = vmatprep.subr.mxu0 0.0
        %2657 = vmatpush1.msra.mxu0 %v2635
        %2658 = vmatprep.subr.mxu0 0.0
        %2659 = vmatpush1.msra.mxu0 %v2634
        %2660 = vmatprep.subr.mxu0 0.0
        %2661 = vmatpush1.msra.mxu0 %v2633
        %2662 = vmatprep.subr.mxu0 0.0
        %2663 = vmatpush1.msra.mxu0 %v2632
        %2664 = vmatprep.subr.mxu0 0.0
        %2665 = vmatpush1.msra.mxu0 %v2631
        %2666 = vmatprep.subr.mxu0 0.0
        %2667 = vmatpush1.msra.mxu0 %v2630
        %2668 = vmatprep.subr.mxu0 0.0
        %2669 = vmatpush1.msra.mxu0 %v2629
        %2670 = vmatprep.subr.mxu0 0.0
        %2671 = vmatpush1.msra.mxu0 %v2628
        %2672 = vmatprep.subr.mxu0 0.0
        %2673 = vmatpush1.msra.mxu0 %v2627
        %2674 = vmatprep.subr.mxu0 0.0
        %2675 = vmatpush1.msra.mxu0 %v2626
        %2676 = vmatprep.subr.mxu0 0.0
        %2677 = vmatpush2.msra.mxu0 0.0
        %2678 = vmatprep.subr.mxu0 0.0
        %2679 = vmatpush2.msra.mxu0 0.0
        %2680 = vmatprep.subr.mxu0 0.0
        %2681 = vmatpush2.msra.mxu0 0.0
        %2682 = vmatprep.subr.mxu0 0.0
        %2683 = vmatpush2.msra.mxu0 0.0
        %2684 = vmatprep.subr.mxu0 0.0
        %2685 = vmatpush2.msra.mxu0 0.0
        %2686 = vmatprep.subr.mxu0 0.0
        %2687 = vmatpush2.msra.mxu0 0.0
        %2688 = vmatprep.subr.mxu0 0.0
        %2689 = vmatpush2.msra.mxu0 0.0
        %2690 = vmatprep.subr.mxu0 0.0
        %2691 = vmatpush2.msra.mxu0 0.0
        %2692 = vmatprep.subr.mxu0 0.0
        %2693 = vmatpush2.msra.mxu0 0.0
        %2694 = vmatprep.subr.mxu0 0.0
        %2695 = vmatpush2.msra.mxu0 0.0
        %2696 = vmatprep.subr.mxu0 0.0
        %2697 = vmatpush2.msra.mxu0 0.0
        %2698 = vmatprep.subr.mxu0 0.0
        %2699 = vmatpush2.msra.mxu0 0.0
        %2700 = vmatprep.subr.mxu0 0.0
        %2701 = vmatpush2.msra.mxu0 0.0
        %2702 = vmatprep.subr.mxu0 0.0
        %2703 = vmatpush2.msra.mxu0 0.0
        %2704 = vmatprep.subr.mxu0 0.0
        %2705 = vmatpush2.msra.mxu0 0.0
        %2706 = vmatprep.subr.mxu0 0.0
        %2707 = vmatpush2.msra.mxu0 0.0
        %2708 = vmatprep.mubr.f32.mxu0 0.0
        %2709 = vmatmul.mubr.f32.gmra.mxu0 %v2639
        %v2710 = vpop.f32.mrf.mxu0
        %v2711 = vadd.f32 %v2637, %v2710
        %v2712 = vpop.f32.mrf.mxu0
        %2713 = vdwg.mxu0
        %2714 = vst [vmem:[%s486] sm:$0x1] 0.0
        %vm2715 = vcmask 73728
        %2716 = vst.msk [vmem:[%s486] sm:$0x1] %vm2715, %v2711
        %s2717 = sand.u32 %s357, 1
        %s2718 = scalar_lea.sflag [#allocation5], %s2717
        %s2719 = sand.u32 %s357, 1
        %s2720 = scalar_lea.vmem [#allocation4], %s2719
        // Predicated region
        $region81: #{lenet_forward.1} parent=79 // pred_check
          %p2721 = pneg %p367
        $region82: #{lenet_forward.1} parent=79 // pred_check_branch
          %2723 = sbr.rel (%p2721) target = $region84
        $region83: #{lenet_forward.1} parent=79 // pred_region
          %s2725 = ssub.s32 16, 16
          %2726 = vsyncadd %s2718, %s2725
          %s2727 = smul.addr %s29, 16
          %s2728 = scalar_lea.hbm %s15, %s2727
          %s2730 = sshll.u32 %s2720, 4
          %s2731 = int_to_ptr.vmem [resolvable:$true] %s2730
          %2733 = dma.vmem_to_hbm [thread:$0]  %s2731, 16, %s2728, %s2718
        $region84: #{lenet_forward.1} parent=79 // pred_fallthru
          _
      $region80: #{lenet_forward.1} parent=5 // pred_fallthru
        _
      %p2734 = scmp.le.s32.totalorder 2, %s24
      // Predicated region
      $region85: #{lenet_forward.1} parent=5 // pred_check
        %p2735 = pneg %p2734
      $region86: #{lenet_forward.1} parent=5 // pred_check_branch
        %2737 = sbr.rel (%p2735) target = $region88
      $region87: #{lenet_forward.1} parent=5 // pred_region
        %s2738 = ssub.s32 %s24, 2
        // Predicated region
        $region89: #{lenet_forward.1} parent=87 // pred_check
          %p2739 = pneg %p373
        $region90: #{lenet_forward.1} parent=87 // pred_check_branch
          %2741 = sbr.rel (%p2739) target = $region92
        $region91: #{lenet_forward.1} parent=87 // pred_region
          %s2742 = sand.u32 %s358, 1
          %s2743 = scalar_lea.sflag [#allocation5], %s2742
          %s2744 = sand.u32 %s358, 1
          %s2745 = scalar_lea.vmem [#allocation4], %s2744
          %2746 = dma.done %s2743, 16
        $region92: #{lenet_forward.1} parent=87 // pred_fallthru
          _
      $region88: #{lenet_forward.1} parent=5 // pred_fallthru
        _
    $region6: #{lenet_forward.1} parent=1 // loop_footer
      %s28 = sadd.s32 1, %s24
    $region7: #{lenet_forward.1} parent=1 // loop_footer_branch
      %23 = sbr.rel target = $region3
    $region8: #{lenet_forward.1} parent=1 // loop_exit
      _
    %2747 = vsyncpa [#allocation5], 1
    %s2748 = scalar_lea.sflag [#allocation5], 1
    %2749 = vsyncpa %s2748, 1

</llo_original>
